<compile_context>
chip_gen: v5e
topology: v5e:2x2
jax: 0.10.0
libtpu: 0.0.40
codegen_flags: <defaults>
</compile_context>

<pallas_src>
import math
import functools

import jax
import jax.numpy as jnp
from jax import lax
from jax.experimental import pallas as pl
from jax.experimental.pallas import tpu as pltpu

F32 = jnp.float32
BF16 = jnp.bfloat16


# ----------------------------- kernel helpers -----------------------------

def _layernorm(x, w, b, eps=1e-5):
    mu = jnp.mean(x, axis=-1, keepdims=True)
    var = jnp.mean((x - mu) ** 2, axis=-1, keepdims=True)
    return (x - mu) * lax.rsqrt(var + eps) * w + b


# ------------------------------- the kernel -------------------------------

def mla_kernel(x_ref,
               wdq_ref, wuq_nope_ref, wuq_re_ref, wuq_ro_ref, qlnw_ref, qlnb_ref,
               wdkv_full_ref, wdkv_lora_ref, wdkv_re_ref, wdkv_ro_ref,
               kvlnw_ref, kvlnb_ref,
               wukv_k_ref, wukv_v_ref, woT_ref,
               cosq_ref, sinq_ref, cosk_ref, sink_ref,
               out_ref, ckv_ref,
               k_s, v_s, ctx_s,
               *, n_heads, dh, nope, half, q_tile, past_length):
    qt = pl.program_id(1)
    s_full = k_s.shape[1]

    # ---------------- KV path: once per batch element (qt == 0) ----------------
    @pl.when(qt == 0)
    def _kv_path():
        xk = x_ref[0]                                                     # (S, D) bf16
        # compressed_kv output: lane-dense padded slab, bf16.
        ckv_ref[0] = jnp.dot(xk, wdkv_full_ref[...],
                             preferred_element_type=F32).astype(BF16)
        # LoRA branch from its own weight -> no partial-lane slice of ckv.
        kv_lora = _layernorm(
            jnp.dot(xk, wdkv_lora_ref[...], preferred_element_type=F32),
            kvlnw_ref[...], kvlnb_ref[...]).astype(BF16)                  # (S, kv_proj)
        # Shared (single-head) RoPE'd key part, zero-extended to dh columns.
        kx1 = jnp.dot(xk, wdkv_re_ref[...], preferred_element_type=F32)   # (S, half)
        kx2 = jnp.dot(xk, wdkv_ro_ref[...], preferred_element_type=F32)
        ck = cosk_ref[...]
        sk = sink_ref[...]
        ky1 = kx1 * ck - kx2 * sk
        ky2 = kx1 * sk + kx2 * ck
        k_rope_ext = jnp.concatenate(
            [jnp.zeros((s_full, nope), F32), ky1, ky2], axis=-1)          # (S, dh)
        # Head-major K/V slabs (leading-axis indexing in the hot loop).
        # wukv_k_ref[h] has its rope columns zeroed host-side, so adding
        # k_rope_ext directly yields [K_nope_h | ky1 | ky2] with no per-head concat.
        for h in range(n_heads):
            k_s[h] = (jnp.dot(kv_lora, wukv_k_ref[h], preferred_element_type=F32)
                      + k_rope_ext).astype(BF16)
            v_s[h] = jnp.dot(kv_lora, wukv_v_ref[h],
                             preferred_element_type=F32).astype(BF16)

    # ---------------- Q path: per query tile ----------------
    start = pl.multiple_of(qt * q_tile, q_tile)
    xq = x_ref[0, pl.ds(start, q_tile), :]                                # (tq, D) bf16
    c_q = jnp.dot(xq, wdq_ref[...], preferred_element_type=F32)           # (tq, q_proj)
    c_q = _layernorm(c_q, qlnw_ref[...], qlnb_ref[...]).astype(BF16)
    # 1/sqrt(dh) is folded into all W_uq_* weights host-side.
    q_nope = jnp.dot(c_q, wuq_nope_ref[...], preferred_element_type=F32)  # (tq, H*nope)
    qx1 = jnp.dot(c_q, wuq_re_ref[...], preferred_element_type=F32)       # (tq, H*half)
    qx2 = jnp.dot(c_q, wuq_ro_ref[...], preferred_element_type=F32)
    cq = cosq_ref[...]                                                    # pre-tiled per head
    sq = sinq_ref[...]
    qy1 = qx1 * cq - qx2 * sq
    qy2 = qx1 * sq + qx2 * cq

    # causal bias for this q-tile (large finite negative, not -inf)
    row = lax.broadcasted_iota(jnp.int32, (q_tile, s_full), 0) + qt * q_tile + past_length
    col = lax.broadcasted_iota(jnp.int32, (q_tile, s_full), 1)
    bias = jnp.where(row >= col, 0.0, -1e30).astype(F32)

    for h in range(n_heads):                  # small static unroll (see TODO above)
        q_h = jnp.concatenate(
            [q_nope[:, h * nope:(h + 1) * nope],
             qy1[:, h * half:(h + 1) * half],
             qy2[:, h * half:(h + 1) * half]], axis=-1).astype(BF16)      # (tq, dh)
        # single fused K=dh score contraction (nope + rope)
        s = lax.dot_general(q_h, k_s[h], (((1,), (1,)), ((), ())),
                            preferred_element_type=F32) + bias            # (tq, S)
        s = s - jnp.max(s, axis=-1, keepdims=True)
        p = jnp.exp(s)
        denom = jnp.sum(p, axis=-1, keepdims=True)
        ctx = jnp.dot(p.astype(BF16), v_s[h], preferred_element_type=F32) # (tq, dh)
        ctx = ctx * pl.reciprocal(denom, approx=True)
        # stage into the bf16 ctx slab; output projection happens once below
        ctx_s[:, h * dh:(h + 1) * dh] = ctx.astype(BF16)

    # single K=d_model output projection
    out_ref[0] = jnp.dot(ctx_s[...], woT_ref[...], preferred_element_type=F32)


# ------------------------------ host wrapper -------------------------------

def _vmem_limit_bytes():
    """Generation-aware VMEM cap with headroom (v7x: 64 MiB total; v5e/v6e: 128 MiB)."""
    try:
        info = pltpu.get_tpu_info()
        cap = int(getattr(info, "vmem_capacity_bytes", 0) or 0)
        if cap > 0:
            return int(min(cap - 8 * 1024 * 1024, (cap * 7) // 8))
    except Exception:
        pass
    return 56 * 1024 * 1024   # safe everywhere, incl. v7x


def mla_forward_pallas(x, params, *, n_heads, max_len, rope_theta=10000.0,
                       past_length=0, q_tile=None):
    B, S, D = x.shape
    dh = D // n_heads
    q_proj = D // 2
    kv_proj = 2 * D // 3
    nope = dh // 2
    dr = dh // 2
    half = dr // 2
    ckv_dim = kv_proj + dr
    ckv_pad = ((ckv_dim + 127) // 128) * 128      # lane-dense compressed_kv slab

    if q_tile is None:
        # good defaults: 256-512 on v6e, 128-256 on v5e (must divide S)
        q_tile = S
    assert S % q_tile == 0 and (q_tile % 8 == 0 or q_tile == S), "bad q_tile"
    n_qt = S // q_tile

    # ---- host-side weight packing: bf16, per-head regrouping, scale fold ----
    scale = 1.0 / math.sqrt(dh)
    W_uq = (params["W_uq"] * scale).reshape(q_proj, n_heads, dh)
    W_uq_nope = W_uq[:, :, :nope].reshape(q_proj, n_heads * nope)
    W_uq_rope = W_uq[:, :, nope:]
    W_uq_re = W_uq_rope[:, :, 0::2].reshape(q_proj, n_heads * half)
    W_uq_ro = W_uq_rope[:, :, 1::2].reshape(q_proj, n_heads * half)

    W_dkv = params["W_dkv"]
    W_dkv_full_pad = jnp.zeros((D, ckv_pad), F32).at[:, :ckv_dim].set(W_dkv)
    W_dkv_lora = W_dkv[:, :kv_proj]
    W_dkv_re = W_dkv[:, kv_proj:ckv_dim:2]        # even rope columns
    W_dkv_ro = W_dkv[:, kv_proj + 1:ckv_dim:2]    # odd rope columns

    W_ukv = params["W_ukv"].reshape(kv_proj, n_heads, dh + nope)
    # head-major, K part zero-extended over the rope columns
    wukv_k_ext = jnp.zeros((n_heads, kv_proj, dh), F32).at[:, :, :nope].set(
        jnp.transpose(W_ukv[:, :, :nope], (1, 0, 2)))
    wukv_v = jnp.transpose(W_ukv[:, :, nope:], (1, 0, 2))   # (H, kv_proj, dh)

    W_o_T = params["W_o"].T                       # output = attn @ W_o.T

    # RoPE tables (same buffers the torch module registers)
    freqs = 1.0 / rope_theta ** (jnp.arange(0, dh, 2, dtype=F32) / dh)
    emb = jnp.outer(jnp.arange(max_len, dtype=F32), freqs)
    cos_all, sin_all = jnp.cos(emb), jnp.sin(emb)
    cos_q_t = jnp.tile(cos_all[past_length:past_length + S, :half], (1, n_heads))
    sin_q_t = jnp.tile(sin_all[past_length:past_length + S, :half], (1, n_heads))
    cos_k = cos_all[:S, :half]
    sin_k = sin_all[:S, :half]

    qlnw = params["q_ln_w"].reshape(1, q_proj)
    qlnb = params["q_ln_b"].reshape(1, q_proj)
    kvlnw = params["kv_ln_w"].reshape(1, kv_proj)
    kvlnb = params["kv_ln_b"].reshape(1, kv_proj)

    bf = lambda a: a.astype(BF16)
    in_arrays = [
        bf(x),
        bf(params["W_dq"]), bf(W_uq_nope), bf(W_uq_re), bf(W_uq_ro), qlnw, qlnb,
        bf(W_dkv_full_pad), bf(W_dkv_lora), bf(W_dkv_re), bf(W_dkv_ro), kvlnw, kvlnb,
        bf(wukv_k_ext), bf(wukv_v), bf(W_o_T),
        cos_q_t, sin_q_t, cos_k, sin_k,
    ]

    out_shape = (jax.ShapeDtypeStruct((B, S, D), F32),
                 jax.ShapeDtypeStruct((B, S, ckv_pad), BF16))
    out_specs = (pl.BlockSpec((1, q_tile, D), lambda b, t: (b, t, 0)),
                 pl.BlockSpec((1, S, ckv_pad), lambda b, t: (b, 0, 0)))

    scratch_shapes = [
        pltpu.VMEM((n_heads, S, dh), BF16),          # K  (head-major, [nope|rope])
        pltpu.VMEM((n_heads, S, dh), BF16),          # V  (head-major)
        pltpu.VMEM((q_tile, n_heads * dh), BF16),    # ctx staging slab
    ]

    kern = functools.partial(
        mla_kernel, n_heads=n_heads, dh=dh, nope=nope, half=half,
        q_tile=q_tile, past_length=past_length)

    flops = (2 * B * S * (D * q_proj + q_proj * n_heads * (nope + dr)
                          + D * (ckv_pad + kv_proj + dr)
                          + 2 * kv_proj * n_heads * dh + D * D)
             + 4 * B * n_heads * S * S * dh)
    bytes_accessed = (sum(int(a.size) * a.dtype.itemsize for a in in_arrays)
                      + B * S * D * 4 + B * S * ckv_pad * 2)
    cost = pl.CostEstimate(flops=int(flops),
                           transcendentals=int(B * n_heads * S * S),
                           bytes_accessed=int(bytes_accessed))
    cparams = pltpu.CompilerParams(
        dimension_semantics=("parallel", "arbitrary"),
        vmem_limit_bytes=_vmem_limit_bytes())

    x_spec = pl.BlockSpec((1, S, D), lambda b, t: (b, 0, 0))
    cosq_spec = pl.BlockSpec((q_tile, n_heads * half), lambda b, t: (t, 0))

    def build(single_buffer_weights):
        def whole(a):
            nd = a.ndim
            idx = lambda b, t, _n=nd: (0,) * _n
            if single_buffer_weights:
                return pl.BlockSpec(a.shape, idx, pipeline_mode=pl.Buffered(1))
            return pl.BlockSpec(a.shape, idx)
        in_specs = ([x_spec] + [whole(a) for a in in_arrays[1:16]]
                    + [cosq_spec, cosq_spec, whole(cos_k), whole(sin_k)])
        grid_spec = pltpu.PrefetchScalarGridSpec(
            num_scalar_prefetch=0,
            grid=(B, n_qt),
            in_specs=in_specs,
            out_specs=out_specs,
            scratch_shapes=scratch_shapes)
        return pl.pallas_call(kern, grid_spec=grid_spec, out_shape=out_shape,
                              compiler_params=cparams, cost_estimate=cost)

    try:
        # constant-index weights single-buffered (halves their VMEM footprint)
        out, ckv_padded = build(True)(*in_arrays)
    except Exception:
        # fall back to default double-buffering if Buffered(1) is unsupported
        out, ckv_padded = build(False)(*in_arrays)

    return out, ckv_padded[:, :, :ckv_dim].astype(F32)


# --------------------------- plain-JAX reference ---------------------------

def _apply_rope_x_ref(x, cos, sin):
    x1 = x[..., ::2]
    x2 = x[..., 1::2]
    return jnp.concatenate([x1 * cos - x2 * sin, x1 * sin + x2 * cos], axis=-1)


def _layernorm_ref(x, w, b, eps=1e-5):
    mu = jnp.mean(x, axis=-1, keepdims=True)
    var = jnp.mean((x - mu) ** 2, axis=-1, keepdims=True)
    return (x - mu) / jnp.sqrt(var + eps) * w + b


def mla_forward_ref(x, params, *, n_heads, max_len, rope_theta=10000.0, past_length=0):
    B, S, D = x.shape
    dh = D // n_heads
    kv_proj = 2 * D // 3
    nope = dh // 2
    dr = dh // 2
    f32 = jnp.float32

    freqs = 1.0 / rope_theta ** (jnp.arange(0, dh, 2, dtype=f32) / dh)
    emb = jnp.outer(jnp.arange(max_len, dtype=f32), freqs)
    cos_cached = jnp.cos(emb)[None, None]
    sin_cached = jnp.sin(emb)[None, None]

    cq = x @ params["W_dq"]
    cq = _layernorm_ref(cq, params["q_ln_w"], params["q_ln_b"])
    Q = cq @ params["W_uq"]
    Q = Q.reshape(B, S, n_heads, dh).transpose(0, 2, 1, 3)
    Q_nope, Q_rope = Q[..., :nope], Q[..., nope:]
    cos_q = cos_cached[:, :, past_length:past_length + S, :dr // 2]
    sin_q = sin_cached[:, :, past_length:past_length + S, :dr // 2]
    Q_rope = _apply_rope_x_ref(Q_rope, cos_q, sin_q)

    compressed_kv = x @ params["W_dkv"]
    KV_for_lora, K_for_rope = compressed_kv[..., :kv_proj], compressed_kv[..., kv_proj:]
    KV_for_lora = _layernorm_ref(KV_for_lora, params["kv_ln_w"], params["kv_ln_b"])
    KV = KV_for_lora @ params["W_ukv"]
    KV = KV.reshape(B, S, n_heads, dh + nope).transpose(0, 2, 1, 3)
    K, V = KV[..., :nope], KV[..., nope:]
    S_full = K.shape[2]
    K_for_rope = K_for_rope.reshape(B, S_full, 1, dr).transpose(0, 2, 1, 3)
    cos_k = cos_cached[:, :, :S_full, :dr // 2]
    sin_k = sin_cached[:, :, :S_full, :dr // 2]
    K_for_rope = _apply_rope_x_ref(K_for_rope, cos_k, sin_k)
    K_for_rope = jnp.tile(K_for_rope, (1, n_heads, 1, 1))

    q_heads = jnp.concatenate([Q_nope, Q_rope], axis=-1)
    k_heads = jnp.concatenate([K, K_for_rope], axis=-1)
    v_heads = V

    mask = jnp.tril(jnp.ones((S, S_full)), k=past_length) == 1
    bias = jnp.where(mask, 0.0, -jnp.inf)[None, None].astype(f32)
    scores = jnp.einsum("bhqd,bhkd->bhqk", q_heads, k_heads) / math.sqrt(dh) + bias
    p = jax.nn.softmax(scores, axis=-1)
    attn = jnp.einsum("bhqk,bhkd->bhqd", p, v_heads)
    attn = attn.transpose(0, 2, 1, 3).reshape(B, S, D)
    out = attn @ params["W_o"].T
    return out, compressed_kv


# ---------------------------------- main -----------------------------------

def init_params(key, d_model, n_heads):
    dh = d_model // n_heads
    q_proj = d_model // 2
    kv_proj = 2 * d_model // 3
    nope = dh // 2
    dr = dh // 2
    ks = jax.random.split(key, 5)

    def xavier(k, shape):
        bound = math.sqrt(6.0 / (shape[0] + shape[1]))
        return jax.random.uniform(k, shape, jnp.float32, -bound, bound)

    return {
        "W_dq": xavier(ks[0], (d_model, q_proj)),
        "W_uq": xavier(ks[1], (q_proj, d_model)),
        "W_dkv": xavier(ks[2], (d_model, kv_proj + dr)),
        "W_ukv": xavier(ks[3], (kv_proj, d_model + n_heads * nope)),
        "W_o": xavier(ks[4], (d_model, d_model)),
        "q_ln_w": jnp.ones((q_proj,), jnp.float32),
        "q_ln_b": jnp.zeros((q_proj,), jnp.float32),
        "kv_ln_w": jnp.ones((kv_proj,), jnp.float32),
        "kv_ln_b": jnp.zeros((kv_proj,), jnp.float32),
    }


if __name__ == "__main__":
    B, S, d_model, n_heads, max_len = 2, 32, 48, 3, 64
    key = jax.random.PRNGKey(0)
    kx, kp = jax.random.split(key)
    x = jax.random.normal(kx, (B, S, d_model), jnp.float32)
    params = init_params(kp, d_model, n_heads)

    out, ckv = mla_forward_pallas(x, params, n_heads=n_heads, max_len=max_len, q_tile=16)
    out = jax.block_until_ready(out)
    ckv = jax.block_until_ready(ckv)

    out_ref, ckv_ref = mla_forward_ref(x, params, n_heads=n_heads, max_len=max_len)
    # bf16 MXU operands with f32 accumulation -> looser tolerance than pure f32.
    assert out.shape == out_ref.shape and ckv.shape == ckv_ref.shape, "shape mismatch"
    assert jnp.allclose(out, out_ref, rtol=3e-2, atol=3e-2), "output mismatch"
    assert jnp.allclose(ckv, ckv_ref, rtol=3e-2, atol=3e-2), "compressed_kv mismatch"
    print("KERNEL_OK")
</pallas_src>

<mosaic_0001>
module attributes {stable_mosaic.version = 11 : i64} {
  func.func @mla_kernel(%arg0: i32, %arg1: i32, %arg2: memref<1x32x48xbf16, #tpu.memory_space<vmem>>, %arg3: memref<48x24xbf16, #tpu.memory_space<vmem>>, %arg4: memref<24x24xbf16, #tpu.memory_space<vmem>>, %arg5: memref<24x12xbf16, #tpu.memory_space<vmem>>, %arg6: memref<24x12xbf16, #tpu.memory_space<vmem>>, %arg7: memref<1x24xf32, #tpu.memory_space<vmem>>, %arg8: memref<1x24xf32, #tpu.memory_space<vmem>>, %arg9: memref<48x128xbf16, #tpu.memory_space<vmem>>, %arg10: memref<48x32xbf16, #tpu.memory_space<vmem>>, %arg11: memref<48x4xbf16, #tpu.memory_space<vmem>>, %arg12: memref<48x4xbf16, #tpu.memory_space<vmem>>, %arg13: memref<1x32xf32, #tpu.memory_space<vmem>>, %arg14: memref<1x32xf32, #tpu.memory_space<vmem>>, %arg15: memref<3x32x16xbf16, #tpu.memory_space<vmem>>, %arg16: memref<3x32x16xbf16, #tpu.memory_space<vmem>>, %arg17: memref<48x48xbf16, #tpu.memory_space<vmem>>, %arg18: memref<16x12xf32, #tpu.memory_space<vmem>>, %arg19: memref<16x12xf32, #tpu.memory_space<vmem>>, %arg20: memref<32x4xf32, #tpu.memory_space<vmem>>, %arg21: memref<32x4xf32, #tpu.memory_space<vmem>>, %arg22: memref<1x16x48xf32, #tpu.memory_space<vmem>>, %arg23: memref<1x32x128xbf16, #tpu.memory_space<vmem>>, %arg24: memref<3x32x16xbf16, #tpu.memory_space<vmem>>, %arg25: memref<3x32x16xbf16, #tpu.memory_space<vmem>>, %arg26: memref<16x48xbf16, #tpu.memory_space<vmem>>) attributes {dimension_semantics = [#tpu.dimension_semantics<parallel>, #tpu.dimension_semantics<arbitrary>], iteration_bounds = array<i64: 2, 2>, scalar_prefetch = 0 : i64, scratch_operands = 3 : i64, tpu.core_type = #tpu.core_type<tc>, window_params = [{transform_indices = @transform_0, window_bounds = array<i64: 1, 32, 48>}, {pipeline_mode = #tpu.pipeline_mode<synchronous>, transform_indices = @transform_1, window_bounds = array<i64: 48, 24>}, {pipeline_mode = #tpu.pipeline_mode<synchronous>, transform_indices = @transform_2, window_bounds = array<i64: 24, 24>}, {pipeline_mode = #tpu.pipeline_mode<synchronous>, transform_indices = @transform_3, window_bounds = array<i64: 24, 12>}, {pipeline_mode = #tpu.pipeline_mode<synchronous>, transform_indices = @transform_4, window_bounds = array<i64: 24, 12>}, {pipeline_mode = #tpu.pipeline_mode<synchronous>, transform_indices = @transform_5, window_bounds = array<i64: 1, 24>}, {pipeline_mode = #tpu.pipeline_mode<synchronous>, transform_indices = @transform_6, window_bounds = array<i64: 1, 24>}, {pipeline_mode = #tpu.pipeline_mode<synchronous>, transform_indices = @transform_7, window_bounds = array<i64: 48, 128>}, {pipeline_mode = #tpu.pipeline_mode<synchronous>, transform_indices = @transform_8, window_bounds = array<i64: 48, 32>}, {pipeline_mode = #tpu.pipeline_mode<synchronous>, transform_indices = @transform_9, window_bounds = array<i64: 48, 4>}, {pipeline_mode = #tpu.pipeline_mode<synchronous>, transform_indices = @transform_10, window_bounds = array<i64: 48, 4>}, {pipeline_mode = #tpu.pipeline_mode<synchronous>, transform_indices = @transform_11, window_bounds = array<i64: 1, 32>}, {pipeline_mode = #tpu.pipeline_mode<synchronous>, transform_indices = @transform_12, window_bounds = array<i64: 1, 32>}, {pipeline_mode = #tpu.pipeline_mode<synchronous>, transform_indices = @transform_13, window_bounds = array<i64: 3, 32, 16>}, {pipeline_mode = #tpu.pipeline_mode<synchronous>, transform_indices = @transform_14, window_bounds = array<i64: 3, 32, 16>}, {pipeline_mode = #tpu.pipeline_mode<synchronous>, transform_indices = @transform_15, window_bounds = array<i64: 48, 48>}, {transform_indices = @transform_16, window_bounds = array<i64: 16, 12>}, {transform_indices = @transform_17, window_bounds = array<i64: 16, 12>}, {pipeline_mode = #tpu.pipeline_mode<synchronous>, transform_indices = @transform_18, window_bounds = array<i64: 32, 4>}, {pipeline_mode = #tpu.pipeline_mode<synchronous>, transform_indices = @transform_19, window_bounds = array<i64: 32, 4>}, {transform_indices = @transform_20, window_bounds = array<i64: 1, 16, 48>}, {transform_indices = @transform_21, window_bounds = array<i64: 1, 32, 128>}]} {
    %c0_i32 = arith.constant 0 : i32
    %0 = arith.cmpi eq, %arg1, %c0_i32 : i32
    %1 = arith.extui %0 : i1 to i32
    %c0_i32_0 = arith.constant 0 : i32
    %2 = arith.cmpi ne, %1, %c0_i32_0 : i32
    scf.if %2 {
      %c0_70 = arith.constant 0 : index
      %c0_71 = arith.constant 0 : index
      %c0_72 = arith.constant 0 : index
      %141 = vector.load %arg2[%c0_70, %c0_71, %c0_72] : memref<1x32x48xbf16, #tpu.memory_space<vmem>>, vector<1x32x48xbf16>
      %142 = vector.shape_cast %141 : vector<1x32x48xbf16> to vector<32x48xbf16>
      %c0_73 = arith.constant 0 : index
      %c0_74 = arith.constant 0 : index
      %143 = vector.load %arg9[%c0_73, %c0_74] : memref<48x128xbf16, #tpu.memory_space<vmem>>, vector<48x128xbf16>
      %cst_75 = arith.constant dense<0.000000e+00> : vector<32x128xf32>
      %144 = tpu.matmul %142, %143, %cst_75 {dimension_numbers = #tpu.dot_dimension_numbers<[1], [0], [0], [1], [0, 0, 1, 1], [], []>} : vector<32x48xbf16>, vector<48x128xbf16>, vector<32x128xf32> -> vector<32x128xf32>
      %145 = arith.truncf %144 : vector<32x128xf32> to vector<32x128xbf16>
      %c0_76 = arith.constant 0 : index
      %c0_77 = arith.constant 0 : index
      %c0_78 = arith.constant 0 : index
      %146 = vector.load %arg23[%c0_76, %c0_77, %c0_78] : memref<1x32x128xbf16, #tpu.memory_space<vmem>>, vector<1x32x128xbf16>
      %147 = vector.shape_cast %146 : vector<1x32x128xbf16> to vector<32x128xbf16>
      %148 = vector.shape_cast %145 : vector<32x128xbf16> to vector<1x32x128xbf16>
      tpu.vector_store %arg23[%c0_76, %c0_77, %c0_78], %148 {strides = array<i32>} : memref<1x32x128xbf16, #tpu.memory_space<vmem>>, vector<1x32x128xbf16>,
      %c0_79 = arith.constant 0 : index
      %c0_80 = arith.constant 0 : index
      %149 = vector.load %arg10[%c0_79, %c0_80] : memref<48x32xbf16, #tpu.memory_space<vmem>>, vector<48x32xbf16>
      %cst_81 = arith.constant dense<0.000000e+00> : vector<32x32xf32>
      %150 = tpu.matmul %142, %149, %cst_81 {dimension_numbers = #tpu.dot_dimension_numbers<[1], [0], [0], [1], [0, 0, 1, 1], [], []>} : vector<32x48xbf16>, vector<48x32xbf16>, vector<32x32xf32> -> vector<32x32xf32>
      %c0_82 = arith.constant 0 : index
      %c0_83 = arith.constant 0 : index
      %151 = vector.load %arg13[%c0_82, %c0_83] : memref<1x32xf32, #tpu.memory_space<vmem>>, vector<1x32xf32>
      %c0_84 = arith.constant 0 : index
      %c0_85 = arith.constant 0 : index
      %152 = vector.load %arg14[%c0_84, %c0_85] : memref<1x32xf32, #tpu.memory_space<vmem>>, vector<1x32xf32>
      %cst_86 = arith.constant dense<0.000000e+00> : vector<32xf32>
      %153 = vector.multi_reduction <add>, %150, %cst_86 [1] : vector<32x32xf32> to vector<32xf32>
      %154 = vector.shape_cast %153 : vector<32xf32> to vector<32x1xf32>
      %cst_87 = arith.constant 3.200000e+01 : f32
      %155 = vector.broadcast %cst_87 : f32 to vector<32x1xf32>
      %156 = arith.divf %154, %155 : vector<32x1xf32>
      %157 = vector.broadcast %156 : vector<32x1xf32> to vector<32x32xf32>
      %158 = arith.subf %150, %157 : vector<32x32xf32>
      %159 = arith.mulf %158, %158 : vector<32x32xf32>
      %cst_88 = arith.constant dense<0.000000e+00> : vector<32xf32>
      %160 = vector.multi_reduction <add>, %159, %cst_88 [1] : vector<32x32xf32> to vector<32xf32>
      %161 = vector.shape_cast %160 : vector<32xf32> to vector<32x1xf32>
      %cst_89 = arith.constant 3.200000e+01 : f32
      %162 = vector.broadcast %cst_89 : f32 to vector<32x1xf32>
      %163 = arith.divf %161, %162 : vector<32x1xf32>
      %164 = vector.broadcast %156 : vector<32x1xf32> to vector<32x32xf32>
      %165 = arith.subf %150, %164 : vector<32x32xf32>
      %cst_90 = arith.constant 9.99999974E-6 : f32
      %166 = vector.broadcast %cst_90 : f32 to vector<32x1xf32>
      %167 = arith.addf %163, %166 : vector<32x1xf32>
      %168 = math.rsqrt %167 : vector<32x1xf32>
      %169 = vector.broadcast %168 : vector<32x1xf32> to vector<32x32xf32>
      %170 = arith.mulf %165, %169 : vector<32x32xf32>
      %171 = vector.broadcast %151 : vector<1x32xf32> to vector<32x32xf32>
      %172 = arith.mulf %170, %171 : vector<32x32xf32>
      %173 = vector.broadcast %152 : vector<1x32xf32> to vector<32x32xf32>
      %174 = arith.addf %172, %173 : vector<32x32xf32>
      %175 = arith.truncf %174 : vector<32x32xf32> to vector<32x32xbf16>
      %c0_91 = arith.constant 0 : index
      %c0_92 = arith.constant 0 : index
      %176 = vector.load %arg11[%c0_91, %c0_92] : memref<48x4xbf16, #tpu.memory_space<vmem>>, vector<48x4xbf16>
      %cst_93 = arith.constant dense<0.000000e+00> : vector<32x4xf32>
      %177 = tpu.matmul %142, %176, %cst_93 {dimension_numbers = #tpu.dot_dimension_numbers<[1], [0], [0], [1], [0, 0, 1, 1], [], []>} : vector<32x48xbf16>, vector<48x4xbf16>, vector<32x4xf32> -> vector<32x4xf32>
      %c0_94 = arith.constant 0 : index
      %c0_95 = arith.constant 0 : index
      %178 = vector.load %arg12[%c0_94, %c0_95] : memref<48x4xbf16, #tpu.memory_space<vmem>>, vector<48x4xbf16>
      %cst_96 = arith.constant dense<0.000000e+00> : vector<32x4xf32>
      %179 = tpu.matmul %142, %178, %cst_96 {dimension_numbers = #tpu.dot_dimension_numbers<[1], [0], [0], [1], [0, 0, 1, 1], [], []>} : vector<32x48xbf16>, vector<48x4xbf16>, vector<32x4xf32> -> vector<32x4xf32>
      %c0_97 = arith.constant 0 : index
      %c0_98 = arith.constant 0 : index
      %180 = vector.load %arg20[%c0_97, %c0_98] : memref<32x4xf32, #tpu.memory_space<vmem>>, vector<32x4xf32>
      %c0_99 = arith.constant 0 : index
      %c0_100 = arith.constant 0 : index
      %181 = vector.load %arg21[%c0_99, %c0_100] : memref<32x4xf32, #tpu.memory_space<vmem>>, vector<32x4xf32>
      %182 = arith.mulf %177, %180 : vector<32x4xf32>
      %183 = arith.mulf %179, %181 : vector<32x4xf32>
      %184 = arith.subf %182, %183 : vector<32x4xf32>
      %185 = arith.mulf %177, %181 : vector<32x4xf32>
      %186 = arith.mulf %179, %180 : vector<32x4xf32>
      %187 = arith.addf %185, %186 : vector<32x4xf32>
      %cst_101 = arith.constant 0.000000e+00 : f32
      %188 = vector.broadcast %cst_101 : f32 to vector<32x8xf32>
      %189 = tpu.concatenate %188, %184, %187 in 1 : vector<32x8xf32>, vector<32x4xf32>, vector<32x4xf32> -> vector<32x16xf32>
      %c0_102 = arith.constant 0 : index
      %c0_103 = arith.constant 0 : index
      %c0_104 = arith.constant 0 : index
      %190 = vector.load %arg15[%c0_102, %c0_103, %c0_104] : memref<3x32x16xbf16, #tpu.memory_space<vmem>>, vector<1x32x16xbf16>
      %191 = vector.shape_cast %190 : vector<1x32x16xbf16> to vector<32x16xbf16>
      %cst_105 = arith.constant dense<0.000000e+00> : vector<32x16xf32>
      %192 = tpu.matmul %175, %191, %cst_105 {dimension_numbers = #tpu.dot_dimension_numbers<[1], [0], [0], [1], [0, 0, 1, 1], [], []>} : vector<32x32xbf16>, vector<32x16xbf16>, vector<32x16xf32> -> vector<32x16xf32>
      %193 = arith.addf %192, %189 : vector<32x16xf32>
      %194 = arith.truncf %193 : vector<32x16xf32> to vector<32x16xbf16>
      %c0_106 = arith.constant 0 : index
      %c0_107 = arith.constant 0 : index
      %c0_108 = arith.constant 0 : index
      %195 = vector.load %arg24[%c0_106, %c0_107, %c0_108] : memref<3x32x16xbf16, #tpu.memory_space<vmem>>, vector<1x32x16xbf16>
      %196 = vector.shape_cast %195 : vector<1x32x16xbf16> to vector<32x16xbf16>
      %197 = vector.shape_cast %194 : vector<32x16xbf16> to vector<1x32x16xbf16>
      tpu.vector_store %arg24[%c0_106, %c0_107, %c0_108], %197 {strides = array<i32>} : memref<3x32x16xbf16, #tpu.memory_space<vmem>>, vector<1x32x16xbf16>,
      %c0_109 = arith.constant 0 : index
      %c0_110 = arith.constant 0 : index
      %c0_111 = arith.constant 0 : index
      %198 = vector.load %arg16[%c0_109, %c0_110, %c0_111] : memref<3x32x16xbf16, #tpu.memory_space<vmem>>, vector<1x32x16xbf16>
      %199 = vector.shape_cast %198 : vector<1x32x16xbf16> to vector<32x16xbf16>
      %cst_112 = arith.constant dense<0.000000e+00> : vector<32x16xf32>
      %200 = tpu.matmul %175, %199, %cst_112 {dimension_numbers = #tpu.dot_dimension_numbers<[1], [0], [0], [1], [0, 0, 1, 1], [], []>} : vector<32x32xbf16>, vector<32x16xbf16>, vector<32x16xf32> -> vector<32x16xf32>
      %201 = arith.truncf %200 : vector<32x16xf32> to vector<32x16xbf16>
      %c0_113 = arith.constant 0 : index
      %c0_114 = arith.constant 0 : index
      %c0_115 = arith.constant 0 : index
      %202 = vector.load %arg25[%c0_113, %c0_114, %c0_115] : memref<3x32x16xbf16, #tpu.memory_space<vmem>>, vector<1x32x16xbf16>
      %203 = vector.shape_cast %202 : vector<1x32x16xbf16> to vector<32x16xbf16>
      %204 = vector.shape_cast %201 : vector<32x16xbf16> to vector<1x32x16xbf16>
      tpu.vector_store %arg25[%c0_113, %c0_114, %c0_115], %204 {strides = array<i32>} : memref<3x32x16xbf16, #tpu.memory_space<vmem>>, vector<1x32x16xbf16>,
      %c1_116 = arith.constant 1 : index
      %c0_117 = arith.constant 0 : index
      %c0_118 = arith.constant 0 : index
      %205 = vector.load %arg15[%c1_116, %c0_117, %c0_118] : memref<3x32x16xbf16, #tpu.memory_space<vmem>>, vector<1x32x16xbf16>
      %206 = vector.shape_cast %205 : vector<1x32x16xbf16> to vector<32x16xbf16>
      %cst_119 = arith.constant dense<0.000000e+00> : vector<32x16xf32>
      %207 = tpu.matmul %175, %206, %cst_119 {dimension_numbers = #tpu.dot_dimension_numbers<[1], [0], [0], [1], [0, 0, 1, 1], [], []>} : vector<32x32xbf16>, vector<32x16xbf16>, vector<32x16xf32> -> vector<32x16xf32>
      %208 = arith.addf %207, %189 : vector<32x16xf32>
      %209 = arith.truncf %208 : vector<32x16xf32> to vector<32x16xbf16>
      %c1_120 = arith.constant 1 : index
      %c0_121 = arith.constant 0 : index
      %c0_122 = arith.constant 0 : index
      %210 = vector.load %arg24[%c1_120, %c0_121, %c0_122] : memref<3x32x16xbf16, #tpu.memory_space<vmem>>, vector<1x32x16xbf16>
      %211 = vector.shape_cast %210 : vector<1x32x16xbf16> to vector<32x16xbf16>
      %212 = vector.shape_cast %209 : vector<32x16xbf16> to vector<1x32x16xbf16>
      tpu.vector_store %arg24[%c1_120, %c0_121, %c0_122], %212 {strides = array<i32>} : memref<3x32x16xbf16, #tpu.memory_space<vmem>>, vector<1x32x16xbf16>,
      %c1_123 = arith.constant 1 : index
      %c0_124 = arith.constant 0 : index
      %c0_125 = arith.constant 0 : index
      %213 = vector.load %arg16[%c1_123, %c0_124, %c0_125] : memref<3x32x16xbf16, #tpu.memory_space<vmem>>, vector<1x32x16xbf16>
      %214 = vector.shape_cast %213 : vector<1x32x16xbf16> to vector<32x16xbf16>
      %cst_126 = arith.constant dense<0.000000e+00> : vector<32x16xf32>
      %215 = tpu.matmul %175, %214, %cst_126 {dimension_numbers = #tpu.dot_dimension_numbers<[1], [0], [0], [1], [0, 0, 1, 1], [], []>} : vector<32x32xbf16>, vector<32x16xbf16>, vector<32x16xf32> -> vector<32x16xf32>
      %216 = arith.truncf %215 : vector<32x16xf32> to vector<32x16xbf16>
      %c1_127 = arith.constant 1 : index
      %c0_128 = arith.constant 0 : index
      %c0_129 = arith.constant 0 : index
      %217 = vector.load %arg25[%c1_127, %c0_128, %c0_129] : memref<3x32x16xbf16, #tpu.memory_space<vmem>>, vector<1x32x16xbf16>
      %218 = vector.shape_cast %217 : vector<1x32x16xbf16> to vector<32x16xbf16>
      %219 = vector.shape_cast %216 : vector<32x16xbf16> to vector<1x32x16xbf16>
      tpu.vector_store %arg25[%c1_127, %c0_128, %c0_129], %219 {strides = array<i32>} : memref<3x32x16xbf16, #tpu.memory_space<vmem>>, vector<1x32x16xbf16>,
      %c2_130 = arith.constant 2 : index
      %c0_131 = arith.constant 0 : index
      %c0_132 = arith.constant 0 : index
      %220 = vector.load %arg15[%c2_130, %c0_131, %c0_132] : memref<3x32x16xbf16, #tpu.memory_space<vmem>>, vector<1x32x16xbf16>
      %221 = vector.shape_cast %220 : vector<1x32x16xbf16> to vector<32x16xbf16>
      %cst_133 = arith.constant dense<0.000000e+00> : vector<32x16xf32>
      %222 = tpu.matmul %175, %221, %cst_133 {dimension_numbers = #tpu.dot_dimension_numbers<[1], [0], [0], [1], [0, 0, 1, 1], [], []>} : vector<32x32xbf16>, vector<32x16xbf16>, vector<32x16xf32> -> vector<32x16xf32>
      %223 = arith.addf %222, %189 : vector<32x16xf32>
      %224 = arith.truncf %223 : vector<32x16xf32> to vector<32x16xbf16>
      %c2_134 = arith.constant 2 : index
      %c0_135 = arith.constant 0 : index
      %c0_136 = arith.constant 0 : index
      %225 = vector.load %arg24[%c2_134, %c0_135, %c0_136] : memref<3x32x16xbf16, #tpu.memory_space<vmem>>, vector<1x32x16xbf16>
      %226 = vector.shape_cast %225 : vector<1x32x16xbf16> to vector<32x16xbf16>
      %227 = vector.shape_cast %224 : vector<32x16xbf16> to vector<1x32x16xbf16>
      tpu.vector_store %arg24[%c2_134, %c0_135, %c0_136], %227 {strides = array<i32>} : memref<3x32x16xbf16, #tpu.memory_space<vmem>>, vector<1x32x16xbf16>,
      %c2_137 = arith.constant 2 : index
      %c0_138 = arith.constant 0 : index
      %c0_139 = arith.constant 0 : index
      %228 = vector.load %arg16[%c2_137, %c0_138, %c0_139] : memref<3x32x16xbf16, #tpu.memory_space<vmem>>, vector<1x32x16xbf16>
      %229 = vector.shape_cast %228 : vector<1x32x16xbf16> to vector<32x16xbf16>
      %cst_140 = arith.constant dense<0.000000e+00> : vector<32x16xf32>
      %230 = tpu.matmul %175, %229, %cst_140 {dimension_numbers = #tpu.dot_dimension_numbers<[1], [0], [0], [1], [0, 0, 1, 1], [], []>} : vector<32x32xbf16>, vector<32x16xbf16>, vector<32x16xf32> -> vector<32x16xf32>
      %231 = arith.truncf %230 : vector<32x16xf32> to vector<32x16xbf16>
      %c2_141 = arith.constant 2 : index
      %c0_142 = arith.constant 0 : index
      %c0_143 = arith.constant 0 : index
      %232 = vector.load %arg25[%c2_141, %c0_142, %c0_143] : memref<3x32x16xbf16, #tpu.memory_space<vmem>>, vector<1x32x16xbf16>
      %233 = vector.shape_cast %232 : vector<1x32x16xbf16> to vector<32x16xbf16>
      %234 = vector.shape_cast %231 : vector<32x16xbf16> to vector<1x32x16xbf16>
      tpu.vector_store %arg25[%c2_141, %c0_142, %c0_143], %234 {strides = array<i32>} : memref<3x32x16xbf16, #tpu.memory_space<vmem>>, vector<1x32x16xbf16>,
    } else {
    }
    %c16_i32 = arith.constant 16 : i32
    %3 = arith.muli %arg1, %c16_i32 : i32
    %4 = tpu.assume_multiple %3, 16 : i32
    %c0 = arith.constant 0 : index
    %5 = arith.index_cast %4 : i32 to index
    %c0_1 = arith.constant 0 : index
    %6 = vector.load %arg2[%c0, %5, %c0_1] : memref<1x32x48xbf16, #tpu.memory_space<vmem>>, vector<1x16x48xbf16>
    %7 = vector.shape_cast %6 : vector<1x16x48xbf16> to vector<16x48xbf16>
    %c0_2 = arith.constant 0 : index
    %c0_3 = arith.constant 0 : index
    %8 = vector.load %arg3[%c0_2, %c0_3] : memref<48x24xbf16, #tpu.memory_space<vmem>>, vector<48x24xbf16>
    %cst = arith.constant dense<0.000000e+00> : vector<16x24xf32>
    %9 = tpu.matmul %7, %8, %cst {dimension_numbers = #tpu.dot_dimension_numbers<[1], [0], [0], [1], [0, 0, 1, 1], [], []>} : vector<16x48xbf16>, vector<48x24xbf16>, vector<16x24xf32> -> vector<16x24xf32>
    %c0_4 = arith.constant 0 : index
    %c0_5 = arith.constant 0 : index
    %10 = vector.load %arg7[%c0_4, %c0_5] : memref<1x24xf32, #tpu.memory_space<vmem>>, vector<1x24xf32>
    %c0_6 = arith.constant 0 : index
    %c0_7 = arith.constant 0 : index
    %11 = vector.load %arg8[%c0_6, %c0_7] : memref<1x24xf32, #tpu.memory_space<vmem>>, vector<1x24xf32>
    %cst_8 = arith.constant dense<0.000000e+00> : vector<16xf32>
    %12 = vector.multi_reduction <add>, %9, %cst_8 [1] : vector<16x24xf32> to vector<16xf32>
    %13 = vector.shape_cast %12 : vector<16xf32> to vector<16x1xf32>
    %cst_9 = arith.constant 2.400000e+01 : f32
    %14 = vector.broadcast %cst_9 : f32 to vector<16x1xf32>
    %15 = arith.divf %13, %14 : vector<16x1xf32>
    %16 = vector.broadcast %15 : vector<16x1xf32> to vector<16x24xf32>
    %17 = arith.subf %9, %16 : vector<16x24xf32>
    %18 = arith.mulf %17, %17 : vector<16x24xf32>
    %cst_10 = arith.constant dense<0.000000e+00> : vector<16xf32>
    %19 = vector.multi_reduction <add>, %18, %cst_10 [1] : vector<16x24xf32> to vector<16xf32>
    %20 = vector.shape_cast %19 : vector<16xf32> to vector<16x1xf32>
    %cst_11 = arith.constant 2.400000e+01 : f32
    %21 = vector.broadcast %cst_11 : f32 to vector<16x1xf32>
    %22 = arith.divf %20, %21 : vector<16x1xf32>
    %23 = vector.broadcast %15 : vector<16x1xf32> to vector<16x24xf32>
    %24 = arith.subf %9, %23 : vector<16x24xf32>
    %cst_12 = arith.constant 9.99999974E-6 : f32
    %25 = vector.broadcast %cst_12 : f32 to vector<16x1xf32>
    %26 = arith.addf %22, %25 : vector<16x1xf32>
    %27 = math.rsqrt %26 : vector<16x1xf32>
    %28 = vector.broadcast %27 : vector<16x1xf32> to vector<16x24xf32>
    %29 = arith.mulf %24, %28 : vector<16x24xf32>
    %30 = vector.broadcast %10 : vector<1x24xf32> to vector<16x24xf32>
    %31 = arith.mulf %29, %30 : vector<16x24xf32>
    %32 = vector.broadcast %11 : vector<1x24xf32> to vector<16x24xf32>
    %33 = arith.addf %31, %32 : vector<16x24xf32>
    %34 = arith.truncf %33 : vector<16x24xf32> to vector<16x24xbf16>
    %c0_13 = arith.constant 0 : index
    %c0_14 = arith.constant 0 : index
    %35 = vector.load %arg4[%c0_13, %c0_14] : memref<24x24xbf16, #tpu.memory_space<vmem>>, vector<24x24xbf16>
    %cst_15 = arith.constant dense<0.000000e+00> : vector<16x24xf32>
    %36 = tpu.matmul %34, %35, %cst_15 {dimension_numbers = #tpu.dot_dimension_numbers<[1], [0], [0], [1], [0, 0, 1, 1], [], []>} : vector<16x24xbf16>, vector<24x24xbf16>, vector<16x24xf32> -> vector<16x24xf32>
    %c0_16 = arith.constant 0 : index
    %c0_17 = arith.constant 0 : index
    %37 = vector.load %arg5[%c0_16, %c0_17] : memref<24x12xbf16, #tpu.memory_space<vmem>>, vector<24x12xbf16>
    %cst_18 = arith.constant dense<0.000000e+00> : vector<16x12xf32>
    %38 = tpu.matmul %34, %37, %cst_18 {dimension_numbers = #tpu.dot_dimension_numbers<[1], [0], [0], [1], [0, 0, 1, 1], [], []>} : vector<16x24xbf16>, vector<24x12xbf16>, vector<16x12xf32> -> vector<16x12xf32>
    %c0_19 = arith.constant 0 : index
    %c0_20 = arith.constant 0 : index
    %39 = vector.load %arg6[%c0_19, %c0_20] : memref<24x12xbf16, #tpu.memory_space<vmem>>, vector<24x12xbf16>
    %cst_21 = arith.constant dense<0.000000e+00> : vector<16x12xf32>
    %40 = tpu.matmul %34, %39, %cst_21 {dimension_numbers = #tpu.dot_dimension_numbers<[1], [0], [0], [1], [0, 0, 1, 1], [], []>} : vector<16x24xbf16>, vector<24x12xbf16>, vector<16x12xf32> -> vector<16x12xf32>
    %c0_22 = arith.constant 0 : index
    %c0_23 = arith.constant 0 : index
    %41 = vector.load %arg18[%c0_22, %c0_23] : memref<16x12xf32, #tpu.memory_space<vmem>>, vector<16x12xf32>
    %c0_24 = arith.constant 0 : index
    %c0_25 = arith.constant 0 : index
    %42 = vector.load %arg19[%c0_24, %c0_25] : memref<16x12xf32, #tpu.memory_space<vmem>>, vector<16x12xf32>
    %43 = arith.mulf %38, %41 : vector<16x12xf32>
    %44 = arith.mulf %40, %42 : vector<16x12xf32>
    %45 = arith.subf %43, %44 : vector<16x12xf32>
    %46 = arith.mulf %38, %42 : vector<16x12xf32>
    %47 = arith.mulf %40, %41 : vector<16x12xf32>
    %48 = arith.addf %46, %47 : vector<16x12xf32>
    %49 = tpu.iota {dimensions = array<i32: 0>} : vector<16x32xi32>
    %c16_i32_26 = arith.constant 16 : i32
    %50 = arith.muli %arg1, %c16_i32_26 : i32
    %51 = vector.broadcast %50 : i32 to vector<16x32xi32>
    %52 = arith.addi %49, %51 : vector<16x32xi32>
    %c0_i32_27 = arith.constant 0 : i32
    %53 = vector.broadcast %c0_i32_27 : i32 to vector<16x32xi32>
    %54 = arith.addi %52, %53 : vector<16x32xi32>
    %55 = tpu.iota {dimensions = array<i32: 1>} : vector<16x32xi32>
    %56 = arith.cmpi sge, %54, %55 : vector<16x32xi32>
    %cst_28 = arith.constant 0.000000e+00 : f32
    %cst_29 = arith.constant -1.000000e+30 : f32
    %57 = vector.broadcast %cst_28 : f32 to vector<16x32xf32>
    %58 = vector.broadcast %cst_29 : f32 to vector<16x32xf32>
    %59 = arith.select %56, %57, %58 : vector<16x32xi1>, vector<16x32xf32>
    %60 = vector.extract_strided_slice %36 {offsets = [0, 0], sizes = [16, 8], strides = [1, 1]} : vector<16x24xf32> to vector<16x8xf32>
    %61 = vector.extract_strided_slice %45 {offsets = [0, 0], sizes = [16, 4], strides = [1, 1]} : vector<16x12xf32> to vector<16x4xf32>
    %62 = vector.extract_strided_slice %48 {offsets = [0, 0], sizes = [16, 4], strides = [1, 1]} : vector<16x12xf32> to vector<16x4xf32>
    %63 = tpu.concatenate %60, %61, %62 in 1 : vector<16x8xf32>, vector<16x4xf32>, vector<16x4xf32> -> vector<16x16xf32>
    %64 = arith.truncf %63 : vector<16x16xf32> to vector<16x16xbf16>
    %c0_30 = arith.constant 0 : index
    %c0_31 = arith.constant 0 : index
    %c0_32 = arith.constant 0 : index
    %65 = vector.load %arg24[%c0_30, %c0_31, %c0_32] : memref<3x32x16xbf16, #tpu.memory_space<vmem>>, vector<1x32x16xbf16>
    %66 = vector.shape_cast %65 : vector<1x32x16xbf16> to vector<32x16xbf16>
    %cst_33 = arith.constant dense<0.000000e+00> : vector<16x32xf32>
    %67 = tpu.matmul %64, %66, %cst_33 {dimension_numbers = #tpu.dot_dimension_numbers<[1], [1], [0], [0], [0, 0, 1, 0], [], []>} : vector<16x16xbf16>, vector<32x16xbf16>, vector<16x32xf32> -> vector<16x32xf32>
    %68 = arith.addf %67, %59 : vector<16x32xf32>
    %cst_34 = arith.constant dense<0xFF800000> : vector<16xf32>
    %69 = vector.multi_reduction <maximumf>, %68, %cst_34 [1] : vector<16x32xf32> to vector<16xf32>
    %70 = vector.shape_cast %69 : vector<16xf32> to vector<16x1xf32>
    %71 = vector.broadcast %70 : vector<16x1xf32> to vector<16x32xf32>
    %72 = arith.subf %68, %71 : vector<16x32xf32>
    %73 = math.exp %72 : vector<16x32xf32>
    %cst_35 = arith.constant dense<0.000000e+00> : vector<16xf32>
    %74 = vector.multi_reduction <add>, %73, %cst_35 [1] : vector<16x32xf32> to vector<16xf32>
    %75 = vector.shape_cast %74 : vector<16xf32> to vector<16x1xf32>
    %76 = arith.truncf %73 : vector<16x32xf32> to vector<16x32xbf16>
    %c0_36 = arith.constant 0 : index
    %c0_37 = arith.constant 0 : index
    %c0_38 = arith.constant 0 : index
    %77 = vector.load %arg25[%c0_36, %c0_37, %c0_38] : memref<3x32x16xbf16, #tpu.memory_space<vmem>>, vector<1x32x16xbf16>
    %78 = vector.shape_cast %77 : vector<1x32x16xbf16> to vector<32x16xbf16>
    %cst_39 = arith.constant dense<0.000000e+00> : vector<16x16xf32>
    %79 = tpu.matmul %76, %78, %cst_39 {dimension_numbers = #tpu.dot_dimension_numbers<[1], [0], [0], [1], [0, 0, 1, 1], [], []>} : vector<16x32xbf16>, vector<32x16xbf16>, vector<16x16xf32> -> vector<16x16xf32>
    %80 = tpu.reciprocal %75 {approx = true} : vector<16x1xf32> -> vector<16x1xf32>
    %81 = vector.broadcast %80 : vector<16x1xf32> to vector<16x16xf32>
    %82 = arith.mulf %79, %81 : vector<16x16xf32>
    %83 = arith.truncf %82 : vector<16x16xf32> to vector<16x16xbf16>
    %c0_40 = arith.constant 0 : index
    %c0_41 = arith.constant 0 : index
    %84 = vector.load %arg26[%c0_40, %c0_41] : memref<16x48xbf16, #tpu.memory_space<vmem>>, vector<16x16xbf16>
    tpu.vector_store %arg26[%c0_40, %c0_41], %83 {strides = array<i32>} : memref<16x48xbf16, #tpu.memory_space<vmem>>, vector<16x16xbf16>,
    %85 = vector.extract_strided_slice %36 {offsets = [0, 8], sizes = [16, 8], strides = [1, 1]} : vector<16x24xf32> to vector<16x8xf32>
    %86 = vector.extract_strided_slice %45 {offsets = [0, 4], sizes = [16, 4], strides = [1, 1]} : vector<16x12xf32> to vector<16x4xf32>
    %87 = vector.extract_strided_slice %48 {offsets = [0, 4], sizes = [16, 4], strides = [1, 1]} : vector<16x12xf32> to vector<16x4xf32>
    %88 = tpu.concatenate %85, %86, %87 in 1 : vector<16x8xf32>, vector<16x4xf32>, vector<16x4xf32> -> vector<16x16xf32>
    %89 = arith.truncf %88 : vector<16x16xf32> to vector<16x16xbf16>
    %c1 = arith.constant 1 : index
    %c0_42 = arith.constant 0 : index
    %c0_43 = arith.constant 0 : index
    %90 = vector.load %arg24[%c1, %c0_42, %c0_43] : memref<3x32x16xbf16, #tpu.memory_space<vmem>>, vector<1x32x16xbf16>
    %91 = vector.shape_cast %90 : vector<1x32x16xbf16> to vector<32x16xbf16>
    %cst_44 = arith.constant dense<0.000000e+00> : vector<16x32xf32>
    %92 = tpu.matmul %89, %91, %cst_44 {dimension_numbers = #tpu.dot_dimension_numbers<[1], [1], [0], [0], [0, 0, 1, 0], [], []>} : vector<16x16xbf16>, vector<32x16xbf16>, vector<16x32xf32> -> vector<16x32xf32>
    %93 = arith.addf %92, %59 : vector<16x32xf32>
    %cst_45 = arith.constant dense<0xFF800000> : vector<16xf32>
    %94 = vector.multi_reduction <maximumf>, %93, %cst_45 [1] : vector<16x32xf32> to vector<16xf32>
    %95 = vector.shape_cast %94 : vector<16xf32> to vector<16x1xf32>
    %96 = vector.broadcast %95 : vector<16x1xf32> to vector<16x32xf32>
    %97 = arith.subf %93, %96 : vector<16x32xf32>
    %98 = math.exp %97 : vector<16x32xf32>
    %cst_46 = arith.constant dense<0.000000e+00> : vector<16xf32>
    %99 = vector.multi_reduction <add>, %98, %cst_46 [1] : vector<16x32xf32> to vector<16xf32>
    %100 = vector.shape_cast %99 : vector<16xf32> to vector<16x1xf32>
    %101 = arith.truncf %98 : vector<16x32xf32> to vector<16x32xbf16>
    %c1_47 = arith.constant 1 : index
    %c0_48 = arith.constant 0 : index
    %c0_49 = arith.constant 0 : index
    %102 = vector.load %arg25[%c1_47, %c0_48, %c0_49] : memref<3x32x16xbf16, #tpu.memory_space<vmem>>, vector<1x32x16xbf16>
    %103 = vector.shape_cast %102 : vector<1x32x16xbf16> to vector<32x16xbf16>
    %cst_50 = arith.constant dense<0.000000e+00> : vector<16x16xf32>
    %104 = tpu.matmul %101, %103, %cst_50 {dimension_numbers = #tpu.dot_dimension_numbers<[1], [0], [0], [1], [0, 0, 1, 1], [], []>} : vector<16x32xbf16>, vector<32x16xbf16>, vector<16x16xf32> -> vector<16x16xf32>
    %105 = tpu.reciprocal %100 {approx = true} : vector<16x1xf32> -> vector<16x1xf32>
    %106 = vector.broadcast %105 : vector<16x1xf32> to vector<16x16xf32>
    %107 = arith.mulf %104, %106 : vector<16x16xf32>
    %108 = arith.truncf %107 : vector<16x16xf32> to vector<16x16xbf16>
    %c0_51 = arith.constant 0 : index
    %c16 = arith.constant 16 : index
    %109 = vector.load %arg26[%c0_51, %c16] : memref<16x48xbf16, #tpu.memory_space<vmem>>, vector<16x16xbf16>
    tpu.vector_store %arg26[%c0_51, %c16], %108 {strides = array<i32>} : memref<16x48xbf16, #tpu.memory_space<vmem>>, vector<16x16xbf16>,
    %110 = vector.extract_strided_slice %36 {offsets = [0, 16], sizes = [16, 8], strides = [1, 1]} : vector<16x24xf32> to vector<16x8xf32>
    %111 = vector.extract_strided_slice %45 {offsets = [0, 8], sizes = [16, 4], strides = [1, 1]} : vector<16x12xf32> to vector<16x4xf32>
    %112 = vector.extract_strided_slice %48 {offsets = [0, 8], sizes = [16, 4], strides = [1, 1]} : vector<16x12xf32> to vector<16x4xf32>
    %113 = tpu.concatenate %110, %111, %112 in 1 : vector<16x8xf32>, vector<16x4xf32>, vector<16x4xf32> -> vector<16x16xf32>
    %114 = arith.truncf %113 : vector<16x16xf32> to vector<16x16xbf16>
    %c2 = arith.constant 2 : index
    %c0_52 = arith.constant 0 : index
    %c0_53 = arith.constant 0 : index
    %115 = vector.load %arg24[%c2, %c0_52, %c0_53] : memref<3x32x16xbf16, #tpu.memory_space<vmem>>, vector<1x32x16xbf16>
    %116 = vector.shape_cast %115 : vector<1x32x16xbf16> to vector<32x16xbf16>
    %cst_54 = arith.constant dense<0.000000e+00> : vector<16x32xf32>
    %117 = tpu.matmul %114, %116, %cst_54 {dimension_numbers = #tpu.dot_dimension_numbers<[1], [1], [0], [0], [0, 0, 1, 0], [], []>} : vector<16x16xbf16>, vector<32x16xbf16>, vector<16x32xf32> -> vector<16x32xf32>
    %118 = arith.addf %117, %59 : vector<16x32xf32>
    %cst_55 = arith.constant dense<0xFF800000> : vector<16xf32>
    %119 = vector.multi_reduction <maximumf>, %118, %cst_55 [1] : vector<16x32xf32> to vector<16xf32>
    %120 = vector.shape_cast %119 : vector<16xf32> to vector<16x1xf32>
    %121 = vector.broadcast %120 : vector<16x1xf32> to vector<16x32xf32>
    %122 = arith.subf %118, %121 : vector<16x32xf32>
    %123 = math.exp %122 : vector<16x32xf32>
    %cst_56 = arith.constant dense<0.000000e+00> : vector<16xf32>
    %124 = vector.multi_reduction <add>, %123, %cst_56 [1] : vector<16x32xf32> to vector<16xf32>
    %125 = vector.shape_cast %124 : vector<16xf32> to vector<16x1xf32>
    %126 = arith.truncf %123 : vector<16x32xf32> to vector<16x32xbf16>
    %c2_57 = arith.constant 2 : index
    %c0_58 = arith.constant 0 : index
    %c0_59 = arith.constant 0 : index
    %127 = vector.load %arg25[%c2_57, %c0_58, %c0_59] : memref<3x32x16xbf16, #tpu.memory_space<vmem>>, vector<1x32x16xbf16>
    %128 = vector.shape_cast %127 : vector<1x32x16xbf16> to vector<32x16xbf16>
    %cst_60 = arith.constant dense<0.000000e+00> : vector<16x16xf32>
    %129 = tpu.matmul %126, %128, %cst_60 {dimension_numbers = #tpu.dot_dimension_numbers<[1], [0], [0], [1], [0, 0, 1, 1], [], []>} : vector<16x32xbf16>, vector<32x16xbf16>, vector<16x16xf32> -> vector<16x16xf32>
    %130 = tpu.reciprocal %125 {approx = true} : vector<16x1xf32> -> vector<16x1xf32>
    %131 = vector.broadcast %130 : vector<16x1xf32> to vector<16x16xf32>
    %132 = arith.mulf %129, %131 : vector<16x16xf32>
    %133 = arith.truncf %132 : vector<16x16xf32> to vector<16x16xbf16>
    %c0_61 = arith.constant 0 : index
    %c32 = arith.constant 32 : index
    %134 = vector.load %arg26[%c0_61, %c32] : memref<16x48xbf16, #tpu.memory_space<vmem>>, vector<16x16xbf16>
    tpu.vector_store %arg26[%c0_61, %c32], %133 {strides = array<i32>} : memref<16x48xbf16, #tpu.memory_space<vmem>>, vector<16x16xbf16>,
    %c0_62 = arith.constant 0 : index
    %c0_63 = arith.constant 0 : index
    %135 = vector.load %arg26[%c0_62, %c0_63] : memref<16x48xbf16, #tpu.memory_space<vmem>>, vector<16x48xbf16>
    %c0_64 = arith.constant 0 : index
    %c0_65 = arith.constant 0 : index
    %136 = vector.load %arg17[%c0_64, %c0_65] : memref<48x48xbf16, #tpu.memory_space<vmem>>, vector<48x48xbf16>
    %cst_66 = arith.constant dense<0.000000e+00> : vector<16x48xf32>
    %137 = tpu.matmul %135, %136, %cst_66 {dimension_numbers = #tpu.dot_dimension_numbers<[1], [0], [0], [1], [0, 0, 1, 1], [], []>} : vector<16x48xbf16>, vector<48x48xbf16>, vector<16x48xf32> -> vector<16x48xf32>
    %c0_67 = arith.constant 0 : index
    %c0_68 = arith.constant 0 : index
    %c0_69 = arith.constant 0 : index
    %138 = vector.load %arg22[%c0_67, %c0_68, %c0_69] : memref<1x16x48xf32, #tpu.memory_space<vmem>>, vector<1x16x48xf32>
    %139 = vector.shape_cast %138 : vector<1x16x48xf32> to vector<16x48xf32>
    %140 = vector.shape_cast %137 : vector<16x48xf32> to vector<1x16x48xf32>
    tpu.vector_store %arg22[%c0_67, %c0_68, %c0_69], %140 {strides = array<i32>} : memref<1x16x48xf32, #tpu.memory_space<vmem>>, vector<1x16x48xf32>,
    return
  }
  func.func @transform_0(%arg0: i32, %arg1: i32) -> (i32, i32, i32) {
    %c0_i32 = arith.constant 0 : i32
    %c0_i32_0 = arith.constant 0 : i32
    %c0_i32_1 = arith.constant 0 : i32
    return %arg0, %c0_i32, %c0_i32_0 : i32, i32, i32
  }
  func.func @transform_1(%arg0: i32, %arg1: i32) -> (i32, i32) {
    %c0_i32 = arith.constant 0 : i32
    %c0_i32_0 = arith.constant 0 : i32
    %c0_i32_1 = arith.constant 0 : i32
    return %c0_i32, %c0_i32_0 : i32, i32
  }
  func.func @transform_2(%arg0: i32, %arg1: i32) -> (i32, i32) {
    %c0_i32 = arith.constant 0 : i32
    %c0_i32_0 = arith.constant 0 : i32
    %c0_i32_1 = arith.constant 0 : i32
    return %c0_i32, %c0_i32_0 : i32, i32
  }
  func.func @transform_3(%arg0: i32, %arg1: i32) -> (i32, i32) {
    %c0_i32 = arith.constant 0 : i32
    %c0_i32_0 = arith.constant 0 : i32
    %c0_i32_1 = arith.constant 0 : i32
    return %c0_i32, %c0_i32_0 : i32, i32
  }
  func.func @transform_4(%arg0: i32, %arg1: i32) -> (i32, i32) {
    %c0_i32 = arith.constant 0 : i32
    %c0_i32_0 = arith.constant 0 : i32
    %c0_i32_1 = arith.constant 0 : i32
    return %c0_i32, %c0_i32_0 : i32, i32
  }
  func.func @transform_5(%arg0: i32, %arg1: i32) -> (i32, i32) {
    %c0_i32 = arith.constant 0 : i32
    %c0_i32_0 = arith.constant 0 : i32
    %c0_i32_1 = arith.constant 0 : i32
    return %c0_i32, %c0_i32_0 : i32, i32
  }
  func.func @transform_6(%arg0: i32, %arg1: i32) -> (i32, i32) {
    %c0_i32 = arith.constant 0 : i32
    %c0_i32_0 = arith.constant 0 : i32
    %c0_i32_1 = arith.constant 0 : i32
    return %c0_i32, %c0_i32_0 : i32, i32
  }
  func.func @transform_7(%arg0: i32, %arg1: i32) -> (i32, i32) {
    %c0_i32 = arith.constant 0 : i32
    %c0_i32_0 = arith.constant 0 : i32
    %c0_i32_1 = arith.constant 0 : i32
    return %c0_i32, %c0_i32_0 : i32, i32
  }
  func.func @transform_8(%arg0: i32, %arg1: i32) -> (i32, i32) {
    %c0_i32 = arith.constant 0 : i32
    %c0_i32_0 = arith.constant 0 : i32
    %c0_i32_1 = arith.constant 0 : i32
    return %c0_i32, %c0_i32_0 : i32, i32
  }
  func.func @transform_9(%arg0: i32, %arg1: i32) -> (i32, i32) {
    %c0_i32 = arith.constant 0 : i32
    %c0_i32_0 = arith.constant 0 : i32
    %c0_i32_1 = arith.constant 0 : i32
    return %c0_i32, %c0_i32_0 : i32, i32
  }
  func.func @transform_10(%arg0: i32, %arg1: i32) -> (i32, i32) {
    %c0_i32 = arith.constant 0 : i32
    %c0_i32_0 = arith.constant 0 : i32
    %c0_i32_1 = arith.constant 0 : i32
    return %c0_i32, %c0_i32_0 : i32, i32
  }
  func.func @transform_11(%arg0: i32, %arg1: i32) -> (i32, i32) {
    %c0_i32 = arith.constant 0 : i32
    %c0_i32_0 = arith.constant 0 : i32
    %c0_i32_1 = arith.constant 0 : i32
    return %c0_i32, %c0_i32_0 : i32, i32
  }
  func.func @transform_12(%arg0: i32, %arg1: i32) -> (i32, i32) {
    %c0_i32 = arith.constant 0 : i32
    %c0_i32_0 = arith.constant 0 : i32
    %c0_i32_1 = arith.constant 0 : i32
    return %c0_i32, %c0_i32_0 : i32, i32
  }
  func.func @transform_13(%arg0: i32, %arg1: i32) -> (i32, i32, i32) {
    %c0_i32 = arith.constant 0 : i32
    %c0_i32_0 = arith.constant 0 : i32
    %c0_i32_1 = arith.constant 0 : i32
    %c0_i32_2 = arith.constant 0 : i32
    return %c0_i32, %c0_i32_0, %c0_i32_1 : i32, i32, i32
  }
  func.func @transform_14(%arg0: i32, %arg1: i32) -> (i32, i32, i32) {
    %c0_i32 = arith.constant 0 : i32
    %c0_i32_0 = arith.constant 0 : i32
    %c0_i32_1 = arith.constant 0 : i32
    %c0_i32_2 = arith.constant 0 : i32
    return %c0_i32, %c0_i32_0, %c0_i32_1 : i32, i32, i32
  }
  func.func @transform_15(%arg0: i32, %arg1: i32) -> (i32, i32) {
    %c0_i32 = arith.constant 0 : i32
    %c0_i32_0 = arith.constant 0 : i32
    %c0_i32_1 = arith.constant 0 : i32
    return %c0_i32, %c0_i32_0 : i32, i32
  }
  func.func @transform_16(%arg0: i32, %arg1: i32) -> (i32, i32) {
    %c0_i32 = arith.constant 0 : i32
    %c0_i32_0 = arith.constant 0 : i32
    return %arg1, %c0_i32 : i32, i32
  }
  func.func @transform_17(%arg0: i32, %arg1: i32) -> (i32, i32) {
    %c0_i32 = arith.constant 0 : i32
    %c0_i32_0 = arith.constant 0 : i32
    return %arg1, %c0_i32 : i32, i32
  }
  func.func @transform_18(%arg0: i32, %arg1: i32) -> (i32, i32) {
    %c0_i32 = arith.constant 0 : i32
    %c0_i32_0 = arith.constant 0 : i32
    %c0_i32_1 = arith.constant 0 : i32
    return %c0_i32, %c0_i32_0 : i32, i32
  }
  func.func @transform_19(%arg0: i32, %arg1: i32) -> (i32, i32) {
    %c0_i32 = arith.constant 0 : i32
    %c0_i32_0 = arith.constant 0 : i32
    %c0_i32_1 = arith.constant 0 : i32
    return %c0_i32, %c0_i32_0 : i32, i32
  }
  func.func @transform_20(%arg0: i32, %arg1: i32) -> (i32, i32, i32) {
    %c0_i32 = arith.constant 0 : i32
    %c0_i32_0 = arith.constant 0 : i32
    return %arg0, %arg1, %c0_i32 : i32, i32, i32
  }
  func.func @transform_21(%arg0: i32, %arg1: i32) -> (i32, i32, i32) {
    %c0_i32 = arith.constant 0 : i32
    %c0_i32_0 = arith.constant 0 : i32
    %c0_i32_1 = arith.constant 0 : i32
    return %arg0, %c0_i32, %c0_i32_0 : i32, i32, i32
  }
}

module attributes {stable_mosaic.version = 11 : i64} {
  func.func @mla_kernel(%arg0: i32, %arg1: i32, %arg2: memref<1x32x48xbf16, #tpu.memory_space<vmem>>, %arg3: memref<48x24xbf16, #tpu.memory_space<vmem>>, %arg4: memref<24x24xbf16, #tpu.memory_space<vmem>>, %arg5: memref<24x12xbf16, #tpu.memory_space<vmem>>, %arg6: memref<24x12xbf16, #tpu.memory_space<vmem>>, %arg7: memref<1x24xf32, #tpu.memory_space<vmem>>, %arg8: memref<1x24xf32, #tpu.memory_space<vmem>>, %arg9: memref<48x128xbf16, #tpu.memory_space<vmem>>, %arg10: memref<48x32xbf16, #tpu.memory_space<vmem>>, %arg11: memref<48x4xbf16, #tpu.memory_space<vmem>>, %arg12: memref<48x4xbf16, #tpu.memory_space<vmem>>, %arg13: memref<1x32xf32, #tpu.memory_space<vmem>>, %arg14: memref<1x32xf32, #tpu.memory_space<vmem>>, %arg15: memref<3x32x16xbf16, #tpu.memory_space<vmem>>, %arg16: memref<3x32x16xbf16, #tpu.memory_space<vmem>>, %arg17: memref<48x48xbf16, #tpu.memory_space<vmem>>, %arg18: memref<16x12xf32, #tpu.memory_space<vmem>>, %arg19: memref<16x12xf32, #tpu.memory_space<vmem>>, %arg20: memref<32x4xf32, #tpu.memory_space<vmem>>, %arg21: memref<32x4xf32, #tpu.memory_space<vmem>>, %arg22: memref<1x16x48xf32, #tpu.memory_space<vmem>>, %arg23: memref<1x32x128xbf16, #tpu.memory_space<vmem>>, %arg24: memref<3x32x16xbf16, #tpu.memory_space<vmem>>, %arg25: memref<3x32x16xbf16, #tpu.memory_space<vmem>>, %arg26: memref<16x48xbf16, #tpu.memory_space<vmem>>) attributes {dimension_semantics = [#tpu.dimension_semantics<parallel>, #tpu.dimension_semantics<arbitrary>], iteration_bounds = array<i64: 2, 2>, scalar_prefetch = 0 : i64, scratch_operands = 3 : i64, tpu.core_type = #tpu.core_type<tc>, window_params = [{transform_indices = @transform_0, window_bounds = array<i64: 1, 32, 48>}, {pipeline_mode = #tpu.pipeline_mode<synchronous>, transform_indices = @transform_1, window_bounds = array<i64: 48, 24>}, {pipeline_mode = #tpu.pipeline_mode<synchronous>, transform_indices = @transform_2, window_bounds = array<i64: 24, 24>}, {pipeline_mode = #tpu.pipeline_mode<synchronous>, transform_indices = @transform_3, window_bounds = array<i64: 24, 12>}, {pipeline_mode = #tpu.pipeline_mode<synchronous>, transform_indices = @transform_4, window_bounds = array<i64: 24, 12>}, {pipeline_mode = #tpu.pipeline_mode<synchronous>, transform_indices = @transform_5, window_bounds = array<i64: 1, 24>}, {pipeline_mode = #tpu.pipeline_mode<synchronous>, transform_indices = @transform_6, window_bounds = array<i64: 1, 24>}, {pipeline_mode = #tpu.pipeline_mode<synchronous>, transform_indices = @transform_7, window_bounds = array<i64: 48, 128>}, {pipeline_mode = #tpu.pipeline_mode<synchronous>, transform_indices = @transform_8, window_bounds = array<i64: 48, 32>}, {pipeline_mode = #tpu.pipeline_mode<synchronous>, transform_indices = @transform_9, window_bounds = array<i64: 48, 4>}, {pipeline_mode = #tpu.pipeline_mode<synchronous>, transform_indices = @transform_10, window_bounds = array<i64: 48, 4>}, {pipeline_mode = #tpu.pipeline_mode<synchronous>, transform_indices = @transform_11, window_bounds = array<i64: 1, 32>}, {pipeline_mode = #tpu.pipeline_mode<synchronous>, transform_indices = @transform_12, window_bounds = array<i64: 1, 32>}, {pipeline_mode = #tpu.pipeline_mode<synchronous>, transform_indices = @transform_13, window_bounds = array<i64: 3, 32, 16>}, {pipeline_mode = #tpu.pipeline_mode<synchronous>, transform_indices = @transform_14, window_bounds = array<i64: 3, 32, 16>}, {pipeline_mode = #tpu.pipeline_mode<synchronous>, transform_indices = @transform_15, window_bounds = array<i64: 48, 48>}, {transform_indices = @transform_16, window_bounds = array<i64: 16, 12>}, {transform_indices = @transform_17, window_bounds = array<i64: 16, 12>}, {pipeline_mode = #tpu.pipeline_mode<synchronous>, transform_indices = @transform_18, window_bounds = array<i64: 32, 4>}, {pipeline_mode = #tpu.pipeline_mode<synchronous>, transform_indices = @transform_19, window_bounds = array<i64: 32, 4>}, {transform_indices = @transform_20, window_bounds = array<i64: 1, 16, 48>}, {transform_indices = @transform_21, window_bounds = array<i64: 1, 32, 128>}]} {
    %c0_i32 = arith.constant 0 : i32
    %0 = arith.cmpi eq, %arg1, %c0_i32 : i32
    %1 = arith.extui %0 : i1 to i32
    %c0_i32_0 = arith.constant 0 : i32
    %2 = arith.cmpi ne, %1, %c0_i32_0 : i32
    scf.if %2 {
      %c0_70 = arith.constant 0 : index
      %c0_71 = arith.constant 0 : index
      %c0_72 = arith.constant 0 : index
      %141 = vector.load %arg2[%c0_70, %c0_71, %c0_72] : memref<1x32x48xbf16, #tpu.memory_space<vmem>>, vector<1x32x48xbf16>
      %142 = vector.shape_cast %141 : vector<1x32x48xbf16> to vector<32x48xbf16>
      %c0_73 = arith.constant 0 : index
      %c0_74 = arith.constant 0 : index
      %143 = vector.load %arg9[%c0_73, %c0_74] : memref<48x128xbf16, #tpu.memory_space<vmem>>, vector<48x128xbf16>
      %cst_75 = arith.constant dense<0.000000e+00> : vector<32x128xf32>
      %144 = tpu.matmul %142, %143, %cst_75 {dimension_numbers = #tpu.dot_dimension_numbers<[1], [0], [0], [1], [0, 0, 1, 1], [], []>} : vector<32x48xbf16>, vector<48x128xbf16>, vector<32x128xf32> -> vector<32x128xf32>
      %145 = arith.truncf %144 : vector<32x128xf32> to vector<32x128xbf16>
      %c0_76 = arith.constant 0 : index
      %c0_77 = arith.constant 0 : index
      %c0_78 = arith.constant 0 : index
      %146 = vector.load %arg23[%c0_76, %c0_77, %c0_78] : memref<1x32x128xbf16, #tpu.memory_space<vmem>>, vector<1x32x128xbf16>
      %147 = vector.shape_cast %146 : vector<1x32x128xbf16> to vector<32x128xbf16>
      %148 = vector.shape_cast %145 : vector<32x128xbf16> to vector<1x32x128xbf16>
      tpu.vector_store %arg23[%c0_76, %c0_77, %c0_78], %148 {strides = array<i32>} : memref<1x32x128xbf16, #tpu.memory_space<vmem>>, vector<1x32x128xbf16>,
      %c0_79 = arith.constant 0 : index
      %c0_80 = arith.constant 0 : index
      %149 = vector.load %arg10[%c0_79, %c0_80] : memref<48x32xbf16, #tpu.memory_space<vmem>>, vector<48x32xbf16>
      %cst_81 = arith.constant dense<0.000000e+00> : vector<32x32xf32>
      %150 = tpu.matmul %142, %149, %cst_81 {dimension_numbers = #tpu.dot_dimension_numbers<[1], [0], [0], [1], [0, 0, 1, 1], [], []>} : vector<32x48xbf16>, vector<48x32xbf16>, vector<32x32xf32> -> vector<32x32xf32>
      %c0_82 = arith.constant 0 : index
      %c0_83 = arith.constant 0 : index
      %151 = vector.load %arg13[%c0_82, %c0_83] : memref<1x32xf32, #tpu.memory_space<vmem>>, vector<1x32xf32>
      %c0_84 = arith.constant 0 : index
      %c0_85 = arith.constant 0 : index
      %152 = vector.load %arg14[%c0_84, %c0_85] : memref<1x32xf32, #tpu.memory_space<vmem>>, vector<1x32xf32>
      %cst_86 = arith.constant dense<0.000000e+00> : vector<32xf32>
      %153 = vector.multi_reduction <add>, %150, %cst_86 [1] : vector<32x32xf32> to vector<32xf32>
      %154 = vector.shape_cast %153 : vector<32xf32> to vector<32x1xf32>
      %cst_87 = arith.constant 3.200000e+01 : f32
      %155 = vector.broadcast %cst_87 : f32 to vector<32x1xf32>
      %156 = arith.divf %154, %155 : vector<32x1xf32>
      %157 = vector.broadcast %156 : vector<32x1xf32> to vector<32x32xf32>
      %158 = arith.subf %150, %157 : vector<32x32xf32>
      %159 = arith.mulf %158, %158 : vector<32x32xf32>
      %cst_88 = arith.constant dense<0.000000e+00> : vector<32xf32>
      %160 = vector.multi_reduction <add>, %159, %cst_88 [1] : vector<32x32xf32> to vector<32xf32>
      %161 = vector.shape_cast %160 : vector<32xf32> to vector<32x1xf32>
      %cst_89 = arith.constant 3.200000e+01 : f32
      %162 = vector.broadcast %cst_89 : f32 to vector<32x1xf32>
      %163 = arith.divf %161, %162 : vector<32x1xf32>
      %164 = vector.broadcast %156 : vector<32x1xf32> to vector<32x32xf32>
      %165 = arith.subf %150, %164 : vector<32x32xf32>
      %cst_90 = arith.constant 9.99999974E-6 : f32
      %166 = vector.broadcast %cst_90 : f32 to vector<32x1xf32>
      %167 = arith.addf %163, %166 : vector<32x1xf32>
      %168 = math.rsqrt %167 : vector<32x1xf32>
      %169 = vector.broadcast %168 : vector<32x1xf32> to vector<32x32xf32>
      %170 = arith.mulf %165, %169 : vector<32x32xf32>
      %171 = vector.broadcast %151 : vector<1x32xf32> to vector<32x32xf32>
      %172 = arith.mulf %170, %171 : vector<32x32xf32>
      %173 = vector.broadcast %152 : vector<1x32xf32> to vector<32x32xf32>
      %174 = arith.addf %172, %173 : vector<32x32xf32>
      %175 = arith.truncf %174 : vector<32x32xf32> to vector<32x32xbf16>
      %c0_91 = arith.constant 0 : index
      %c0_92 = arith.constant 0 : index
      %176 = vector.load %arg11[%c0_91, %c0_92] : memref<48x4xbf16, #tpu.memory_space<vmem>>, vector<48x4xbf16>
      %cst_93 = arith.constant dense<0.000000e+00> : vector<32x4xf32>
      %177 = tpu.matmul %142, %176, %cst_93 {dimension_numbers = #tpu.dot_dimension_numbers<[1], [0], [0], [1], [0, 0, 1, 1], [], []>} : vector<32x48xbf16>, vector<48x4xbf16>, vector<32x4xf32> -> vector<32x4xf32>
      %c0_94 = arith.constant 0 : index
      %c0_95 = arith.constant 0 : index
      %178 = vector.load %arg12[%c0_94, %c0_95] : memref<48x4xbf16, #tpu.memory_space<vmem>>, vector<48x4xbf16>
      %cst_96 = arith.constant dense<0.000000e+00> : vector<32x4xf32>
      %179 = tpu.matmul %142, %178, %cst_96 {dimension_numbers = #tpu.dot_dimension_numbers<[1], [0], [0], [1], [0, 0, 1, 1], [], []>} : vector<32x48xbf16>, vector<48x4xbf16>, vector<32x4xf32> -> vector<32x4xf32>
      %c0_97 = arith.constant 0 : index
      %c0_98 = arith.constant 0 : index
      %180 = vector.load %arg20[%c0_97, %c0_98] : memref<32x4xf32, #tpu.memory_space<vmem>>, vector<32x4xf32>
      %c0_99 = arith.constant 0 : index
      %c0_100 = arith.constant 0 : index
      %181 = vector.load %arg21[%c0_99, %c0_100] : memref<32x4xf32, #tpu.memory_space<vmem>>, vector<32x4xf32>
      %182 = arith.mulf %177, %180 : vector<32x4xf32>
      %183 = arith.mulf %179, %181 : vector<32x4xf32>
      %184 = arith.subf %182, %183 : vector<32x4xf32>
      %185 = arith.mulf %177, %181 : vector<32x4xf32>
      %186 = arith.mulf %179, %180 : vector<32x4xf32>
      %187 = arith.addf %185, %186 : vector<32x4xf32>
      %cst_101 = arith.constant 0.000000e+00 : f32
      %188 = vector.broadcast %cst_101 : f32 to vector<32x8xf32>
      %189 = tpu.concatenate %188, %184, %187 in 1 : vector<32x8xf32>, vector<32x4xf32>, vector<32x4xf32> -> vector<32x16xf32>
      %c0_102 = arith.constant 0 : index
      %c0_103 = arith.constant 0 : index
      %c0_104 = arith.constant 0 : index
      %190 = vector.load %arg15[%c0_102, %c0_103, %c0_104] : memref<3x32x16xbf16, #tpu.memory_space<vmem>>, vector<1x32x16xbf16>
      %191 = vector.shape_cast %190 : vector<1x32x16xbf16> to vector<32x16xbf16>
      %cst_105 = arith.constant dense<0.000000e+00> : vector<32x16xf32>
      %192 = tpu.matmul %175, %191, %cst_105 {dimension_numbers = #tpu.dot_dimension_numbers<[1], [0], [0], [1], [0, 0, 1, 1], [], []>} : vector<32x32xbf16>, vector<32x16xbf16>, vector<32x16xf32> -> vector<32x16xf32>
      %193 = arith.addf %192, %189 : vector<32x16xf32>
      %194 = arith.truncf %193 : vector<32x16xf32> to vector<32x16xbf16>
      %c0_106 = arith.constant 0 : index
      %c0_107 = arith.constant 0 : index
      %c0_108 = arith.constant 0 : index
      %195 = vector.load %arg24[%c0_106, %c0_107, %c0_108] : memref<3x32x16xbf16, #tpu.memory_space<vmem>>, vector<1x32x16xbf16>
      %196 = vector.shape_cast %195 : vector<1x32x16xbf16> to vector<32x16xbf16>
      %197 = vector.shape_cast %194 : vector<32x16xbf16> to vector<1x32x16xbf16>
      tpu.vector_store %arg24[%c0_106, %c0_107, %c0_108], %197 {strides = array<i32>} : memref<3x32x16xbf16, #tpu.memory_space<vmem>>, vector<1x32x16xbf16>,
      %c0_109 = arith.constant 0 : index
      %c0_110 = arith.constant 0 : index
      %c0_111 = arith.constant 0 : index
      %198 = vector.load %arg16[%c0_109, %c0_110, %c0_111] : memref<3x32x16xbf16, #tpu.memory_space<vmem>>, vector<1x32x16xbf16>
      %199 = vector.shape_cast %198 : vector<1x32x16xbf16> to vector<32x16xbf16>
      %cst_112 = arith.constant dense<0.000000e+00> : vector<32x16xf32>
      %200 = tpu.matmul %175, %199, %cst_112 {dimension_numbers = #tpu.dot_dimension_numbers<[1], [0], [0], [1], [0, 0, 1, 1], [], []>} : vector<32x32xbf16>, vector<32x16xbf16>, vector<32x16xf32> -> vector<32x16xf32>
      %201 = arith.truncf %200 : vector<32x16xf32> to vector<32x16xbf16>
      %c0_113 = arith.constant 0 : index
      %c0_114 = arith.constant 0 : index
      %c0_115 = arith.constant 0 : index
      %202 = vector.load %arg25[%c0_113, %c0_114, %c0_115] : memref<3x32x16xbf16, #tpu.memory_space<vmem>>, vector<1x32x16xbf16>
      %203 = vector.shape_cast %202 : vector<1x32x16xbf16> to vector<32x16xbf16>
      %204 = vector.shape_cast %201 : vector<32x16xbf16> to vector<1x32x16xbf16>
      tpu.vector_store %arg25[%c0_113, %c0_114, %c0_115], %204 {strides = array<i32>} : memref<3x32x16xbf16, #tpu.memory_space<vmem>>, vector<1x32x16xbf16>,
      %c1_116 = arith.constant 1 : index
      %c0_117 = arith.constant 0 : index
      %c0_118 = arith.constant 0 : index
      %205 = vector.load %arg15[%c1_116, %c0_117, %c0_118] : memref<3x32x16xbf16, #tpu.memory_space<vmem>>, vector<1x32x16xbf16>
      %206 = vector.shape_cast %205 : vector<1x32x16xbf16> to vector<32x16xbf16>
      %cst_119 = arith.constant dense<0.000000e+00> : vector<32x16xf32>
      %207 = tpu.matmul %175, %206, %cst_119 {dimension_numbers = #tpu.dot_dimension_numbers<[1], [0], [0], [1], [0, 0, 1, 1], [], []>} : vector<32x32xbf16>, vector<32x16xbf16>, vector<32x16xf32> -> vector<32x16xf32>
      %208 = arith.addf %207, %189 : vector<32x16xf32>
      %209 = arith.truncf %208 : vector<32x16xf32> to vector<32x16xbf16>
      %c1_120 = arith.constant 1 : index
      %c0_121 = arith.constant 0 : index
      %c0_122 = arith.constant 0 : index
      %210 = vector.load %arg24[%c1_120, %c0_121, %c0_122] : memref<3x32x16xbf16, #tpu.memory_space<vmem>>, vector<1x32x16xbf16>
      %211 = vector.shape_cast %210 : vector<1x32x16xbf16> to vector<32x16xbf16>
      %212 = vector.shape_cast %209 : vector<32x16xbf16> to vector<1x32x16xbf16>
      tpu.vector_store %arg24[%c1_120, %c0_121, %c0_122], %212 {strides = array<i32>} : memref<3x32x16xbf16, #tpu.memory_space<vmem>>, vector<1x32x16xbf16>,
      %c1_123 = arith.constant 1 : index
      %c0_124 = arith.constant 0 : index
      %c0_125 = arith.constant 0 : index
      %213 = vector.load %arg16[%c1_123, %c0_124, %c0_125] : memref<3x32x16xbf16, #tpu.memory_space<vmem>>, vector<1x32x16xbf16>
      %214 = vector.shape_cast %213 : vector<1x32x16xbf16> to vector<32x16xbf16>
      %cst_126 = arith.constant dense<0.000000e+00> : vector<32x16xf32>
      %215 = tpu.matmul %175, %214, %cst_126 {dimension_numbers = #tpu.dot_dimension_numbers<[1], [0], [0], [1], [0, 0, 1, 1], [], []>} : vector<32x32xbf16>, vector<32x16xbf16>, vector<32x16xf32> -> vector<32x16xf32>
      %216 = arith.truncf %215 : vector<32x16xf32> to vector<32x16xbf16>
      %c1_127 = arith.constant 1 : index
      %c0_128 = arith.constant 0 : index
      %c0_129 = arith.constant 0 : index
      %217 = vector.load %arg25[%c1_127, %c0_128, %c0_129] : memref<3x32x16xbf16, #tpu.memory_space<vmem>>, vector<1x32x16xbf16>
      %218 = vector.shape_cast %217 : vector<1x32x16xbf16> to vector<32x16xbf16>
      %219 = vector.shape_cast %216 : vector<32x16xbf16> to vector<1x32x16xbf16>
      tpu.vector_store %arg25[%c1_127, %c0_128, %c0_129], %219 {strides = array<i32>} : memref<3x32x16xbf16, #tpu.memory_space<vmem>>, vector<1x32x16xbf16>,
      %c2_130 = arith.constant 2 : index
      %c0_131 = arith.constant 0 : index
      %c0_132 = arith.constant 0 : index
      %220 = vector.load %arg15[%c2_130, %c0_131, %c0_132] : memref<3x32x16xbf16, #tpu.memory_space<vmem>>, vector<1x32x16xbf16>
      %221 = vector.shape_cast %220 : vector<1x32x16xbf16> to vector<32x16xbf16>
      %cst_133 = arith.constant dense<0.000000e+00> : vector<32x16xf32>
      %222 = tpu.matmul %175, %221, %cst_133 {dimension_numbers = #tpu.dot_dimension_numbers<[1], [0], [0], [1], [0, 0, 1, 1], [], []>} : vector<32x32xbf16>, vector<32x16xbf16>, vector<32x16xf32> -> vector<32x16xf32>
      %223 = arith.addf %222, %189 : vector<32x16xf32>
      %224 = arith.truncf %223 : vector<32x16xf32> to vector<32x16xbf16>
      %c2_134 = arith.constant 2 : index
      %c0_135 = arith.constant 0 : index
      %c0_136 = arith.constant 0 : index
      %225 = vector.load %arg24[%c2_134, %c0_135, %c0_136] : memref<3x32x16xbf16, #tpu.memory_space<vmem>>, vector<1x32x16xbf16>
      %226 = vector.shape_cast %225 : vector<1x32x16xbf16> to vector<32x16xbf16>
      %227 = vector.shape_cast %224 : vector<32x16xbf16> to vector<1x32x16xbf16>
      tpu.vector_store %arg24[%c2_134, %c0_135, %c0_136], %227 {strides = array<i32>} : memref<3x32x16xbf16, #tpu.memory_space<vmem>>, vector<1x32x16xbf16>,
      %c2_137 = arith.constant 2 : index
      %c0_138 = arith.constant 0 : index
      %c0_139 = arith.constant 0 : index
      %228 = vector.load %arg16[%c2_137, %c0_138, %c0_139] : memref<3x32x16xbf16, #tpu.memory_space<vmem>>, vector<1x32x16xbf16>
      %229 = vector.shape_cast %228 : vector<1x32x16xbf16> to vector<32x16xbf16>
      %cst_140 = arith.constant dense<0.000000e+00> : vector<32x16xf32>
      %230 = tpu.matmul %175, %229, %cst_140 {dimension_numbers = #tpu.dot_dimension_numbers<[1], [0], [0], [1], [0, 0, 1, 1], [], []>} : vector<32x32xbf16>, vector<32x16xbf16>, vector<32x16xf32> -> vector<32x16xf32>
      %231 = arith.truncf %230 : vector<32x16xf32> to vector<32x16xbf16>
      %c2_141 = arith.constant 2 : index
      %c0_142 = arith.constant 0 : index
      %c0_143 = arith.constant 0 : index
      %232 = vector.load %arg25[%c2_141, %c0_142, %c0_143] : memref<3x32x16xbf16, #tpu.memory_space<vmem>>, vector<1x32x16xbf16>
      %233 = vector.shape_cast %232 : vector<1x32x16xbf16> to vector<32x16xbf16>
      %234 = vector.shape_cast %231 : vector<32x16xbf16> to vector<1x32x16xbf16>
      tpu.vector_store %arg25[%c2_141, %c0_142, %c0_143], %234 {strides = array<i32>} : memref<3x32x16xbf16, #tpu.memory_space<vmem>>, vector<1x32x16xbf16>,
    } else {
    }
    %c16_i32 = arith.constant 16 : i32
    %3 = arith.muli %arg1, %c16_i32 : i32
    %4 = tpu.assume_multiple %3, 16 : i32
    %c0 = arith.constant 0 : index
    %5 = arith.index_cast %4 : i32 to index
    %c0_1 = arith.constant 0 : index
    %6 = vector.load %arg2[%c0, %5, %c0_1] : memref<1x32x48xbf16, #tpu.memory_space<vmem>>, vector<1x16x48xbf16>
    %7 = vector.shape_cast %6 : vector<1x16x48xbf16> to vector<16x48xbf16>
    %c0_2 = arith.constant 0 : index
    %c0_3 = arith.constant 0 : index
    %8 = vector.load %arg3[%c0_2, %c0_3] : memref<48x24xbf16, #tpu.memory_space<vmem>>, vector<48x24xbf16>
    %cst = arith.constant dense<0.000000e+00> : vector<16x24xf32>
    %9 = tpu.matmul %7, %8, %cst {dimension_numbers = #tpu.dot_dimension_numbers<[1], [0], [0], [1], [0, 0, 1, 1], [], []>} : vector<16x48xbf16>, vector<48x24xbf16>, vector<16x24xf32> -> vector<16x24xf32>
    %c0_4 = arith.constant 0 : index
    %c0_5 = arith.constant 0 : index
    %10 = vector.load %arg7[%c0_4, %c0_5] : memref<1x24xf32, #tpu.memory_space<vmem>>, vector<1x24xf32>
    %c0_6 = arith.constant 0 : index
    %c0_7 = arith.constant 0 : index
    %11 = vector.load %arg8[%c0_6, %c0_7] : memref<1x24xf32, #tpu.memory_space<vmem>>, vector<1x24xf32>
    %cst_8 = arith.constant dense<0.000000e+00> : vector<16xf32>
    %12 = vector.multi_reduction <add>, %9, %cst_8 [1] : vector<16x24xf32> to vector<16xf32>
    %13 = vector.shape_cast %12 : vector<16xf32> to vector<16x1xf32>
    %cst_9 = arith.constant 2.400000e+01 : f32
    %14 = vector.broadcast %cst_9 : f32 to vector<16x1xf32>
    %15 = arith.divf %13, %14 : vector<16x1xf32>
    %16 = vector.broadcast %15 : vector<16x1xf32> to vector<16x24xf32>
    %17 = arith.subf %9, %16 : vector<16x24xf32>
    %18 = arith.mulf %17, %17 : vector<16x24xf32>
    %cst_10 = arith.constant dense<0.000000e+00> : vector<16xf32>
    %19 = vector.multi_reduction <add>, %18, %cst_10 [1] : vector<16x24xf32> to vector<16xf32>
    %20 = vector.shape_cast %19 : vector<16xf32> to vector<16x1xf32>
    %cst_11 = arith.constant 2.400000e+01 : f32
    %21 = vector.broadcast %cst_11 : f32 to vector<16x1xf32>
    %22 = arith.divf %20, %21 : vector<16x1xf32>
    %23 = vector.broadcast %15 : vector<16x1xf32> to vector<16x24xf32>
    %24 = arith.subf %9, %23 : vector<16x24xf32>
    %cst_12 = arith.constant 9.99999974E-6 : f32
    %25 = vector.broadcast %cst_12 : f32 to vector<16x1xf32>
    %26 = arith.addf %22, %25 : vector<16x1xf32>
    %27 = math.rsqrt %26 : vector<16x1xf32>
    %28 = vector.broadcast %27 : vector<16x1xf32> to vector<16x24xf32>
    %29 = arith.mulf %24, %28 : vector<16x24xf32>
    %30 = vector.broadcast %10 : vector<1x24xf32> to vector<16x24xf32>
    %31 = arith.mulf %29, %30 : vector<16x24xf32>
    %32 = vector.broadcast %11 : vector<1x24xf32> to vector<16x24xf32>
    %33 = arith.addf %31, %32 : vector<16x24xf32>
    %34 = arith.truncf %33 : vector<16x24xf32> to vector<16x24xbf16>
    %c0_13 = arith.constant 0 : index
    %c0_14 = arith.constant 0 : index
    %35 = vector.load %arg4[%c0_13, %c0_14] : memref<24x24xbf16, #tpu.memory_space<vmem>>, vector<24x24xbf16>
    %cst_15 = arith.constant dense<0.000000e+00> : vector<16x24xf32>
    %36 = tpu.matmul %34, %35, %cst_15 {dimension_numbers = #tpu.dot_dimension_numbers<[1], [0], [0], [1], [0, 0, 1, 1], [], []>} : vector<16x24xbf16>, vector<24x24xbf16>, vector<16x24xf32> -> vector<16x24xf32>
    %c0_16 = arith.constant 0 : index
    %c0_17 = arith.constant 0 : index
    %37 = vector.load %arg5[%c0_16, %c0_17] : memref<24x12xbf16, #tpu.memory_space<vmem>>, vector<24x12xbf16>
    %cst_18 = arith.constant dense<0.000000e+00> : vector<16x12xf32>
    %38 = tpu.matmul %34, %37, %cst_18 {dimension_numbers = #tpu.dot_dimension_numbers<[1], [0], [0], [1], [0, 0, 1, 1], [], []>} : vector<16x24xbf16>, vector<24x12xbf16>, vector<16x12xf32> -> vector<16x12xf32>
    %c0_19 = arith.constant 0 : index
    %c0_20 = arith.constant 0 : index
    %39 = vector.load %arg6[%c0_19, %c0_20] : memref<24x12xbf16, #tpu.memory_space<vmem>>, vector<24x12xbf16>
    %cst_21 = arith.constant dense<0.000000e+00> : vector<16x12xf32>
    %40 = tpu.matmul %34, %39, %cst_21 {dimension_numbers = #tpu.dot_dimension_numbers<[1], [0], [0], [1], [0, 0, 1, 1], [], []>} : vector<16x24xbf16>, vector<24x12xbf16>, vector<16x12xf32> -> vector<16x12xf32>
    %c0_22 = arith.constant 0 : index
    %c0_23 = arith.constant 0 : index
    %41 = vector.load %arg18[%c0_22, %c0_23] : memref<16x12xf32, #tpu.memory_space<vmem>>, vector<16x12xf32>
    %c0_24 = arith.constant 0 : index
    %c0_25 = arith.constant 0 : index
    %42 = vector.load %arg19[%c0_24, %c0_25] : memref<16x12xf32, #tpu.memory_space<vmem>>, vector<16x12xf32>
    %43 = arith.mulf %38, %41 : vector<16x12xf32>
    %44 = arith.mulf %40, %42 : vector<16x12xf32>
    %45 = arith.subf %43, %44 : vector<16x12xf32>
    %46 = arith.mulf %38, %42 : vector<16x12xf32>
    %47 = arith.mulf %40, %41 : vector<16x12xf32>
    %48 = arith.addf %46, %47 : vector<16x12xf32>
    %49 = tpu.iota {dimensions = array<i32: 0>} : vector<16x32xi32>
    %c16_i32_26 = arith.constant 16 : i32
    %50 = arith.muli %arg1, %c16_i32_26 : i32
    %51 = vector.broadcast %50 : i32 to vector<16x32xi32>
    %52 = arith.addi %49, %51 : vector<16x32xi32>
    %c0_i32_27 = arith.constant 0 : i32
    %53 = vector.broadcast %c0_i32_27 : i32 to vector<16x32xi32>
    %54 = arith.addi %52, %53 : vector<16x32xi32>
    %55 = tpu.iota {dimensions = array<i32: 1>} : vector<16x32xi32>
    %56 = arith.cmpi sge, %54, %55 : vector<16x32xi32>
    %cst_28 = arith.constant 0.000000e+00 : f32
    %cst_29 = arith.constant -1.000000e+30 : f32
    %57 = vector.broadcast %cst_28 : f32 to vector<16x32xf32>
    %58 = vector.broadcast %cst_29 : f32 to vector<16x32xf32>
    %59 = arith.select %56, %57, %58 : vector<16x32xi1>, vector<16x32xf32>
    %60 = vector.extract_strided_slice %36 {offsets = [0, 0], sizes = [16, 8], strides = [1, 1]} : vector<16x24xf32> to vector<16x8xf32>
    %61 = vector.extract_strided_slice %45 {offsets = [0, 0], sizes = [16, 4], strides = [1, 1]} : vector<16x12xf32> to vector<16x4xf32>
    %62 = vector.extract_strided_slice %48 {offsets = [0, 0], sizes = [16, 4], strides = [1, 1]} : vector<16x12xf32> to vector<16x4xf32>
    %63 = tpu.concatenate %60, %61, %62 in 1 : vector<16x8xf32>, vector<16x4xf32>, vector<16x4xf32> -> vector<16x16xf32>
    %64 = arith.truncf %63 : vector<16x16xf32> to vector<16x16xbf16>
    %c0_30 = arith.constant 0 : index
    %c0_31 = arith.constant 0 : index
    %c0_32 = arith.constant 0 : index
    %65 = vector.load %arg24[%c0_30, %c0_31, %c0_32] : memref<3x32x16xbf16, #tpu.memory_space<vmem>>, vector<1x32x16xbf16>
    %66 = vector.shape_cast %65 : vector<1x32x16xbf16> to vector<32x16xbf16>
    %cst_33 = arith.constant dense<0.000000e+00> : vector<16x32xf32>
    %67 = tpu.matmul %64, %66, %cst_33 {dimension_numbers = #tpu.dot_dimension_numbers<[1], [1], [0], [0], [0, 0, 1, 0], [], []>} : vector<16x16xbf16>, vector<32x16xbf16>, vector<16x32xf32> -> vector<16x32xf32>
    %68 = arith.addf %67, %59 : vector<16x32xf32>
    %cst_34 = arith.constant dense<0xFF800000> : vector<16xf32>
    %69 = vector.multi_reduction <maximumf>, %68, %cst_34 [1] : vector<16x32xf32> to vector<16xf32>
    %70 = vector.shape_cast %69 : vector<16xf32> to vector<16x1xf32>
    %71 = vector.broadcast %70 : vector<16x1xf32> to vector<16x32xf32>
    %72 = arith.subf %68, %71 : vector<16x32xf32>
    %73 = math.exp %72 : vector<16x32xf32>
    %cst_35 = arith.constant dense<0.000000e+00> : vector<16xf32>
    %74 = vector.multi_reduction <add>, %73, %cst_35 [1] : vector<16x32xf32> to vector<16xf32>
    %75 = vector.shape_cast %74 : vector<16xf32> to vector<16x1xf32>
    %76 = arith.truncf %73 : vector<16x32xf32> to vector<16x32xbf16>
    %c0_36 = arith.constant 0 : index
    %c0_37 = arith.constant 0 : index
    %c0_38 = arith.constant 0 : index
    %77 = vector.load %arg25[%c0_36, %c0_37, %c0_38] : memref<3x32x16xbf16, #tpu.memory_space<vmem>>, vector<1x32x16xbf16>
    %78 = vector.shape_cast %77 : vector<1x32x16xbf16> to vector<32x16xbf16>
    %cst_39 = arith.constant dense<0.000000e+00> : vector<16x16xf32>
    %79 = tpu.matmul %76, %78, %cst_39 {dimension_numbers = #tpu.dot_dimension_numbers<[1], [0], [0], [1], [0, 0, 1, 1], [], []>} : vector<16x32xbf16>, vector<32x16xbf16>, vector<16x16xf32> -> vector<16x16xf32>
    %80 = tpu.reciprocal %75 {approx = true} : vector<16x1xf32> -> vector<16x1xf32>
    %81 = vector.broadcast %80 : vector<16x1xf32> to vector<16x16xf32>
    %82 = arith.mulf %79, %81 : vector<16x16xf32>
    %83 = arith.truncf %82 : vector<16x16xf32> to vector<16x16xbf16>
    %c0_40 = arith.constant 0 : index
    %c0_41 = arith.constant 0 : index
    %84 = vector.load %arg26[%c0_40, %c0_41] : memref<16x48xbf16, #tpu.memory_space<vmem>>, vector<16x16xbf16>
    tpu.vector_store %arg26[%c0_40, %c0_41], %83 {strides = array<i32>} : memref<16x48xbf16, #tpu.memory_space<vmem>>, vector<16x16xbf16>,
    %85 = vector.extract_strided_slice %36 {offsets = [0, 8], sizes = [16, 8], strides = [1, 1]} : vector<16x24xf32> to vector<16x8xf32>
    %86 = vector.extract_strided_slice %45 {offsets = [0, 4], sizes = [16, 4], strides = [1, 1]} : vector<16x12xf32> to vector<16x4xf32>
    %87 = vector.extract_strided_slice %48 {offsets = [0, 4], sizes = [16, 4], strides = [1, 1]} : vector<16x12xf32> to vector<16x4xf32>
    %88 = tpu.concatenate %85, %86, %87 in 1 : vector<16x8xf32>, vector<16x4xf32>, vector<16x4xf32> -> vector<16x16xf32>
    %89 = arith.truncf %88 : vector<16x16xf32> to vector<16x16xbf16>
    %c1 = arith.constant 1 : index
    %c0_42 = arith.constant 0 : index
    %c0_43 = arith.constant 0 : index
    %90 = vector.load %arg24[%c1, %c0_42, %c0_43] : memref<3x32x16xbf16, #tpu.memory_space<vmem>>, vector<1x32x16xbf16>
    %91 = vector.shape_cast %90 : vector<1x32x16xbf16> to vector<32x16xbf16>
    %cst_44 = arith.constant dense<0.000000e+00> : vector<16x32xf32>
    %92 = tpu.matmul %89, %91, %cst_44 {dimension_numbers = #tpu.dot_dimension_numbers<[1], [1], [0], [0], [0, 0, 1, 0], [], []>} : vector<16x16xbf16>, vector<32x16xbf16>, vector<16x32xf32> -> vector<16x32xf32>
    %93 = arith.addf %92, %59 : vector<16x32xf32>
    %cst_45 = arith.constant dense<0xFF800000> : vector<16xf32>
    %94 = vector.multi_reduction <maximumf>, %93, %cst_45 [1] : vector<16x32xf32> to vector<16xf32>
    %95 = vector.shape_cast %94 : vector<16xf32> to vector<16x1xf32>
    %96 = vector.broadcast %95 : vector<16x1xf32> to vector<16x32xf32>
    %97 = arith.subf %93, %96 : vector<16x32xf32>
    %98 = math.exp %97 : vector<16x32xf32>
    %cst_46 = arith.constant dense<0.000000e+00> : vector<16xf32>
    %99 = vector.multi_reduction <add>, %98, %cst_46 [1] : vector<16x32xf32> to vector<16xf32>
    %100 = vector.shape_cast %99 : vector<16xf32> to vector<16x1xf32>
    %101 = arith.truncf %98 : vector<16x32xf32> to vector<16x32xbf16>
    %c1_47 = arith.constant 1 : index
    %c0_48 = arith.constant 0 : index
    %c0_49 = arith.constant 0 : index
    %102 = vector.load %arg25[%c1_47, %c0_48, %c0_49] : memref<3x32x16xbf16, #tpu.memory_space<vmem>>, vector<1x32x16xbf16>
    %103 = vector.shape_cast %102 : vector<1x32x16xbf16> to vector<32x16xbf16>
    %cst_50 = arith.constant dense<0.000000e+00> : vector<16x16xf32>
    %104 = tpu.matmul %101, %103, %cst_50 {dimension_numbers = #tpu.dot_dimension_numbers<[1], [0], [0], [1], [0, 0, 1, 1], [], []>} : vector<16x32xbf16>, vector<32x16xbf16>, vector<16x16xf32> -> vector<16x16xf32>
    %105 = tpu.reciprocal %100 {approx = true} : vector<16x1xf32> -> vector<16x1xf32>
    %106 = vector.broadcast %105 : vector<16x1xf32> to vector<16x16xf32>
    %107 = arith.mulf %104, %106 : vector<16x16xf32>
    %108 = arith.truncf %107 : vector<16x16xf32> to vector<16x16xbf16>
    %c0_51 = arith.constant 0 : index
    %c16 = arith.constant 16 : index
    %109 = vector.load %arg26[%c0_51, %c16] : memref<16x48xbf16, #tpu.memory_space<vmem>>, vector<16x16xbf16>
    tpu.vector_store %arg26[%c0_51, %c16], %108 {strides = array<i32>} : memref<16x48xbf16, #tpu.memory_space<vmem>>, vector<16x16xbf16>,
    %110 = vector.extract_strided_slice %36 {offsets = [0, 16], sizes = [16, 8], strides = [1, 1]} : vector<16x24xf32> to vector<16x8xf32>
    %111 = vector.extract_strided_slice %45 {offsets = [0, 8], sizes = [16, 4], strides = [1, 1]} : vector<16x12xf32> to vector<16x4xf32>
    %112 = vector.extract_strided_slice %48 {offsets = [0, 8], sizes = [16, 4], strides = [1, 1]} : vector<16x12xf32> to vector<16x4xf32>
    %113 = tpu.concatenate %110, %111, %112 in 1 : vector<16x8xf32>, vector<16x4xf32>, vector<16x4xf32> -> vector<16x16xf32>
    %114 = arith.truncf %113 : vector<16x16xf32> to vector<16x16xbf16>
    %c2 = arith.constant 2 : index
    %c0_52 = arith.constant 0 : index
    %c0_53 = arith.constant 0 : index
    %115 = vector.load %arg24[%c2, %c0_52, %c0_53] : memref<3x32x16xbf16, #tpu.memory_space<vmem>>, vector<1x32x16xbf16>
    %116 = vector.shape_cast %115 : vector<1x32x16xbf16> to vector<32x16xbf16>
    %cst_54 = arith.constant dense<0.000000e+00> : vector<16x32xf32>
    %117 = tpu.matmul %114, %116, %cst_54 {dimension_numbers = #tpu.dot_dimension_numbers<[1], [1], [0], [0], [0, 0, 1, 0], [], []>} : vector<16x16xbf16>, vector<32x16xbf16>, vector<16x32xf32> -> vector<16x32xf32>
    %118 = arith.addf %117, %59 : vector<16x32xf32>
    %cst_55 = arith.constant dense<0xFF800000> : vector<16xf32>
    %119 = vector.multi_reduction <maximumf>, %118, %cst_55 [1] : vector<16x32xf32> to vector<16xf32>
    %120 = vector.shape_cast %119 : vector<16xf32> to vector<16x1xf32>
    %121 = vector.broadcast %120 : vector<16x1xf32> to vector<16x32xf32>
    %122 = arith.subf %118, %121 : vector<16x32xf32>
    %123 = math.exp %122 : vector<16x32xf32>
    %cst_56 = arith.constant dense<0.000000e+00> : vector<16xf32>
    %124 = vector.multi_reduction <add>, %123, %cst_56 [1] : vector<16x32xf32> to vector<16xf32>
    %125 = vector.shape_cast %124 : vector<16xf32> to vector<16x1xf32>
    %126 = arith.truncf %123 : vector<16x32xf32> to vector<16x32xbf16>
    %c2_57 = arith.constant 2 : index
    %c0_58 = arith.constant 0 : index
    %c0_59 = arith.constant 0 : index
    %127 = vector.load %arg25[%c2_57, %c0_58, %c0_59] : memref<3x32x16xbf16, #tpu.memory_space<vmem>>, vector<1x32x16xbf16>
    %128 = vector.shape_cast %127 : vector<1x32x16xbf16> to vector<32x16xbf16>
    %cst_60 = arith.constant dense<0.000000e+00> : vector<16x16xf32>
    %129 = tpu.matmul %126, %128, %cst_60 {dimension_numbers = #tpu.dot_dimension_numbers<[1], [0], [0], [1], [0, 0, 1, 1], [], []>} : vector<16x32xbf16>, vector<32x16xbf16>, vector<16x16xf32> -> vector<16x16xf32>
    %130 = tpu.reciprocal %125 {approx = true} : vector<16x1xf32> -> vector<16x1xf32>
    %131 = vector.broadcast %130 : vector<16x1xf32> to vector<16x16xf32>
    %132 = arith.mulf %129, %131 : vector<16x16xf32>
    %133 = arith.truncf %132 : vector<16x16xf32> to vector<16x16xbf16>
    %c0_61 = arith.constant 0 : index
    %c32 = arith.constant 32 : index
    %134 = vector.load %arg26[%c0_61, %c32] : memref<16x48xbf16, #tpu.memory_space<vmem>>, vector<16x16xbf16>
    tpu.vector_store %arg26[%c0_61, %c32], %133 {strides = array<i32>} : memref<16x48xbf16, #tpu.memory_space<vmem>>, vector<16x16xbf16>,
    %c0_62 = arith.constant 0 : index
    %c0_63 = arith.constant 0 : index
    %135 = vector.load %arg26[%c0_62, %c0_63] : memref<16x48xbf16, #tpu.memory_space<vmem>>, vector<16x48xbf16>
    %c0_64 = arith.constant 0 : index
    %c0_65 = arith.constant 0 : index
    %136 = vector.load %arg17[%c0_64, %c0_65] : memref<48x48xbf16, #tpu.memory_space<vmem>>, vector<48x48xbf16>
    %cst_66 = arith.constant dense<0.000000e+00> : vector<16x48xf32>
    %137 = tpu.matmul %135, %136, %cst_66 {dimension_numbers = #tpu.dot_dimension_numbers<[1], [0], [0], [1], [0, 0, 1, 1], [], []>} : vector<16x48xbf16>, vector<48x48xbf16>, vector<16x48xf32> -> vector<16x48xf32>
    %c0_67 = arith.constant 0 : index
    %c0_68 = arith.constant 0 : index
    %c0_69 = arith.constant 0 : index
    %138 = vector.load %arg22[%c0_67, %c0_68, %c0_69] : memref<1x16x48xf32, #tpu.memory_space<vmem>>, vector<1x16x48xf32>
    %139 = vector.shape_cast %138 : vector<1x16x48xf32> to vector<16x48xf32>
    %140 = vector.shape_cast %137 : vector<16x48xf32> to vector<1x16x48xf32>
    tpu.vector_store %arg22[%c0_67, %c0_68, %c0_69], %140 {strides = array<i32>} : memref<1x16x48xf32, #tpu.memory_space<vmem>>, vector<1x16x48xf32>,
    return
  }
  func.func @transform_0(%arg0: i32, %arg1: i32) -> (i32, i32, i32) {
    %c0_i32 = arith.constant 0 : i32
    %c0_i32_0 = arith.constant 0 : i32
    %c0_i32_1 = arith.constant 0 : i32
    return %arg0, %c0_i32, %c0_i32_0 : i32, i32, i32
  }
  func.func @transform_1(%arg0: i32, %arg1: i32) -> (i32, i32) {
    %c0_i32 = arith.constant 0 : i32
    %c0_i32_0 = arith.constant 0 : i32
    %c0_i32_1 = arith.constant 0 : i32
    return %c0_i32, %c0_i32_0 : i32, i32
  }
  func.func @transform_2(%arg0: i32, %arg1: i32) -> (i32, i32) {
    %c0_i32 = arith.constant 0 : i32
    %c0_i32_0 = arith.constant 0 : i32
    %c0_i32_1 = arith.constant 0 : i32
    return %c0_i32, %c0_i32_0 : i32, i32
  }
  func.func @transform_3(%arg0: i32, %arg1: i32) -> (i32, i32) {
    %c0_i32 = arith.constant 0 : i32
    %c0_i32_0 = arith.constant 0 : i32
    %c0_i32_1 = arith.constant 0 : i32
    return %c0_i32, %c0_i32_0 : i32, i32
  }
  func.func @transform_4(%arg0: i32, %arg1: i32) -> (i32, i32) {
    %c0_i32 = arith.constant 0 : i32
    %c0_i32_0 = arith.constant 0 : i32
    %c0_i32_1 = arith.constant 0 : i32
    return %c0_i32, %c0_i32_0 : i32, i32
  }
  func.func @transform_5(%arg0: i32, %arg1: i32) -> (i32, i32) {
    %c0_i32 = arith.constant 0 : i32
    %c0_i32_0 = arith.constant 0 : i32
    %c0_i32_1 = arith.constant 0 : i32
    return %c0_i32, %c0_i32_0 : i32, i32
  }
  func.func @transform_6(%arg0: i32, %arg1: i32) -> (i32, i32) {
    %c0_i32 = arith.constant 0 : i32
    %c0_i32_0 = arith.constant 0 : i32
    %c0_i32_1 = arith.constant 0 : i32
    return %c0_i32, %c0_i32_0 : i32, i32
  }
  func.func @transform_7(%arg0: i32, %arg1: i32) -> (i32, i32) {
    %c0_i32 = arith.constant 0 : i32
    %c0_i32_0 = arith.constant 0 : i32
    %c0_i32_1 = arith.constant 0 : i32
    return %c0_i32, %c0_i32_0 : i32, i32
  }
  func.func @transform_8(%arg0: i32, %arg1: i32) -> (i32, i32) {
    %c0_i32 = arith.constant 0 : i32
    %c0_i32_0 = arith.constant 0 : i32
    %c0_i32_1 = arith.constant 0 : i32
    return %c0_i32, %c0_i32_0 : i32, i32
  }
  func.func @transform_9(%arg0: i32, %arg1: i32) -> (i32, i32) {
    %c0_i32 = arith.constant 0 : i32
    %c0_i32_0 = arith.constant 0 : i32
    %c0_i32_1 = arith.constant 0 : i32
    return %c0_i32, %c0_i32_0 : i32, i32
  }
  func.func @transform_10(%arg0: i32, %arg1: i32) -> (i32, i32) {
    %c0_i32 = arith.constant 0 : i32
    %c0_i32_0 = arith.constant 0 : i32
    %c0_i32_1 = arith.constant 0 : i32
    return %c0_i32, %c0_i32_0 : i32, i32
  }
  func.func @transform_11(%arg0: i32, %arg1: i32) -> (i32, i32) {
    %c0_i32 = arith.constant 0 : i32
    %c0_i32_0 = arith.constant 0 : i32
    %c0_i32_1 = arith.constant 0 : i32
    return %c0_i32, %c0_i32_0 : i32, i32
  }
  func.func @transform_12(%arg0: i32, %arg1: i32) -> (i32, i32) {
    %c0_i32 = arith.constant 0 : i32
    %c0_i32_0 = arith.constant 0 : i32
    %c0_i32_1 = arith.constant 0 : i32
    return %c0_i32, %c0_i32_0 : i32, i32
  }
  func.func @transform_13(%arg0: i32, %arg1: i32) -> (i32, i32, i32) {
    %c0_i32 = arith.constant 0 : i32
    %c0_i32_0 = arith.constant 0 : i32
    %c0_i32_1 = arith.constant 0 : i32
    %c0_i32_2 = arith.constant 0 : i32
    return %c0_i32, %c0_i32_0, %c0_i32_1 : i32, i32, i32
  }
  func.func @transform_14(%arg0: i32, %arg1: i32) -> (i32, i32, i32) {
    %c0_i32 = arith.constant 0 : i32
    %c0_i32_0 = arith.constant 0 : i32
    %c0_i32_1 = arith.constant 0 : i32
    %c0_i32_2 = arith.constant 0 : i32
    return %c0_i32, %c0_i32_0, %c0_i32_1 : i32, i32, i32
  }
  func.func @transform_15(%arg0: i32, %arg1: i32) -> (i32, i32) {
    %c0_i32 = arith.constant 0 : i32
    %c0_i32_0 = arith.constant 0 : i32
    %c0_i32_1 = arith.constant 0 : i32
    return %c0_i32, %c0_i32_0 : i32, i32
  }
  func.func @transform_16(%arg0: i32, %arg1: i32) -> (i32, i32) {
    %c0_i32 = arith.constant 0 : i32
    %c0_i32_0 = arith.constant 0 : i32
    return %arg1, %c0_i32 : i32, i32
  }
  func.func @transform_17(%arg0: i32, %arg1: i32) -> (i32, i32) {
    %c0_i32 = arith.constant 0 : i32
    %c0_i32_0 = arith.constant 0 : i32
    return %arg1, %c0_i32 : i32, i32
  }
  func.func @transform_18(%arg0: i32, %arg1: i32) -> (i32, i32) {
    %c0_i32 = arith.constant 0 : i32
    %c0_i32_0 = arith.constant 0 : i32
    %c0_i32_1 = arith.constant 0 : i32
    return %c0_i32, %c0_i32_0 : i32, i32
  }
  func.func @transform_19(%arg0: i32, %arg1: i32) -> (i32, i32) {
    %c0_i32 = arith.constant 0 : i32
    %c0_i32_0 = arith.constant 0 : i32
    %c0_i32_1 = arith.constant 0 : i32
    return %c0_i32, %c0_i32_0 : i32, i32
  }
  func.func @transform_20(%arg0: i32, %arg1: i32) -> (i32, i32, i32) {
    %c0_i32 = arith.constant 0 : i32
    %c0_i32_0 = arith.constant 0 : i32
    return %arg0, %arg1, %c0_i32 : i32, i32, i32
  }
  func.func @transform_21(%arg0: i32, %arg1: i32) -> (i32, i32, i32) {
    %c0_i32 = arith.constant 0 : i32
    %c0_i32_0 = arith.constant 0 : i32
    %c0_i32_1 = arith.constant 0 : i32
    return %arg0, %c0_i32, %c0_i32_0 : i32, i32, i32
  }
}

</mosaic_0001>

<llo_original>
// kernel: tpu_custom_call.1
$region0: #{tpu_custom_call.1}
  #allocation0 [shape = 'u32[]', space=smem, size = 0x4, offset = 0x4, fixed_abs, tag = 'smem constant byte address 0x4 - core index']
  #allocation1 [shape = 'u32[72,128]{1,0:T(1,128)}', space=vmem, size = 0x9000, scoped, tag = 'internal scratch']
  #allocation2 [shape = 'bf16[3,32,16]{2,1,0:T(8,128)(2,1)}', space=vmem, size = 0x6000, scoped, tag = 'scratch operand']
  #allocation3 [shape = 'bf16[3,32,16]{2,1,0:T(8,128)(2,1)}', space=vmem, size = 0x6000, scoped, tag = 'scratch operand']
  #allocation4 [shape = 'bf16[16,48]{1,0:T(8,128)(2,1)}', space=vmem, size = 0x1000, scoped, tag = 'scratch operand']
  %s0 = inlined_call_operand.vmem [shape: bf16[2,32,48], index: 0, kind: input, shape index: {}]
  %s1 = inlined_call_operand.vmem [shape: bf16[48,24], index: 1, kind: input, shape index: {}]
  %s2 = inlined_call_operand.vmem [shape: bf16[24,24], index: 2, kind: input, shape index: {}]
  %s3 = inlined_call_operand.vmem [shape: bf16[24,12], index: 3, kind: input, shape index: {}]
  %s4 = inlined_call_operand.vmem [shape: bf16[24,12], index: 4, kind: input, shape index: {}]
  %s5 = inlined_call_operand.vmem [shape: f32[1,24], index: 5, kind: input, shape index: {}]
  %s6 = inlined_call_operand.vmem [shape: f32[1,24], index: 6, kind: input, shape index: {}]
  %s7 = inlined_call_operand.vmem [shape: bf16[48,128], index: 7, kind: input, shape index: {}]
  %s8 = inlined_call_operand.vmem [shape: bf16[48,32], index: 8, kind: input, shape index: {}]
  %s9 = inlined_call_operand.vmem [shape: bf16[48,4], index: 9, kind: input, shape index: {}]
  %s10 = inlined_call_operand.vmem [shape: bf16[48,4], index: 10, kind: input, shape index: {}]
  %s11 = inlined_call_operand.vmem [shape: f32[1,32], index: 11, kind: input, shape index: {}]
  %s12 = inlined_call_operand.vmem [shape: f32[1,32], index: 12, kind: input, shape index: {}]
  %s13 = inlined_call_operand.vmem [shape: bf16[3,32,16], index: 13, kind: input, shape index: {}]
  %s14 = inlined_call_operand.vmem [shape: bf16[3,32,16], index: 14, kind: input, shape index: {}]
  %s15 = inlined_call_operand.vmem [shape: bf16[48,48], index: 15, kind: input, shape index: {}]
  %s16 = inlined_call_operand.vmem [shape: f32[32,12], index: 16, kind: input, shape index: {}]
  %s17 = inlined_call_operand.vmem [shape: f32[32,12], index: 17, kind: input, shape index: {}]
  %s18 = inlined_call_operand.vmem [shape: f32[32,4], index: 18, kind: input, shape index: {}]
  %s19 = inlined_call_operand.vmem [shape: f32[32,4], index: 19, kind: input, shape index: {}]
  %s20 = inlined_call_operand.hbm [shape: f32[2,32,48], index: 20, kind: output, shape index: {0}]
  %s21 = inlined_call_operand.hbm [shape: bf16[2,32,128], index: 21, kind: output, shape index: {1}]
  %22 = xla_tuple %s20, %s21
  %s23 = sld [smem:[#allocation0]]
  $region125: #{tpu_custom_call.1} parent=0
    _
  %s25 = ssub.s32 1, %s23
  %s26 = scalar_select 0, %s25, %s23
  $region1: #{tpu_custom_call.1} parent=0
    #allocation5 [shape = 'u8[16384]{0}', space=vmem, size = 0x4000, scoped, tag = 'output window, operand 0']
    #allocation6 [shape = 's32[2]{0}', space=sflag, size = 0x8, scoped, tag = 'scoped memory for tpu_custom_call.1']
    #allocation7 [shape = 'u8[16384]{0}', space=vmem, size = 0x4000, scoped, tag = 'output window, operand 1']
    #allocation8 [shape = 's32[2]{0}', space=sflag, size = 0x8, scoped, tag = 'scoped memory for tpu_custom_call.1']
    %27 = vsyncpa [#allocation6], 0
    %s28 = scalar_lea.sflag [#allocation6], 1
    %29 = vsyncpa %s28, 0
    %30 = vsyncpa [#allocation8], 0
    %s31 = scalar_lea.sflag [#allocation8], 1
    %32 = vsyncpa %s31, 0
    loop: start=0, step=1, limit=6
    $region2: #{tpu_custom_call.1} parent=1 // loop_pre_header
      _
    $region3: #{tpu_custom_call.1} parent=1 // loop_header
      %s34 = sphi 0, %s38
      %p35 = scmp.ge.s32.totalorder %s34, 6
      %s41 = sphi 0, %s53
      %s42 = sphi 0, %s49
      %s43 = sphi 0, %s41
      %s44 = sphi 0, %s42
      %s45 = sphi 0, %s43
      %s46 = sphi 0, %s44
      %s56 = sphi 0, %s58
      %s59 = sphi 0, %s56
      %s60 = sphi 0, %s59
      %s76 = sphi 0, %s60
      %s80 = sphi 0, %s80
      %s82 = sphi 0, %s80
      %s83 = sphi 0, %s82
      %s97 = sphi 0, %s83
      %s101 = sphi 0, %s101
      %s103 = sphi 0, %s101
      %s104 = sphi 0, %s103
      %s118 = sphi 0, %s104
      %s122 = sphi 0, %s122
      %s124 = sphi 0, %s122
      %s125 = sphi 0, %s124
      %s139 = sphi 0, %s125
      %s143 = sphi 0, %s143
      %s145 = sphi 0, %s143
      %s146 = sphi 0, %s145
      %s160 = sphi 0, %s146
      %s164 = sphi 0, %s164
      %s166 = sphi 0, %s164
      %s167 = sphi 0, %s166
      %s181 = sphi 0, %s167
      %s185 = sphi 0, %s185
      %s187 = sphi 0, %s185
      %s188 = sphi 0, %s187
      %s202 = sphi 0, %s188
      %s206 = sphi 0, %s206
      %s208 = sphi 0, %s206
      %s209 = sphi 0, %s208
      %s223 = sphi 0, %s209
      %s227 = sphi 0, %s227
      %s229 = sphi 0, %s227
      %s230 = sphi 0, %s229
      %s244 = sphi 0, %s230
      %s248 = sphi 0, %s248
      %s250 = sphi 0, %s248
      %s251 = sphi 0, %s250
      %s265 = sphi 0, %s251
      %s269 = sphi 0, %s269
      %s271 = sphi 0, %s269
      %s272 = sphi 0, %s271
      %s286 = sphi 0, %s272
      %s290 = sphi 0, %s290
      %s292 = sphi 0, %s290
      %s293 = sphi 0, %s292
      %s307 = sphi 0, %s293
      %s311 = sphi 0, %s311
      %s313 = sphi 0, %s311
      %s314 = sphi 0, %s313
      %s328 = sphi 0, %s314
      %s332 = sphi 0, %s332
      %s334 = sphi 0, %s332
      %s335 = sphi 0, %s334
      %s349 = sphi 0, %s335
      %s353 = sphi 0, %s353
      %s355 = sphi 0, %s353
      %s356 = sphi 0, %s355
      %s370 = sphi 0, %s356
      %s374 = sphi 0, %s374
      %s376 = sphi 0, %s374
      %s377 = sphi 0, %s376
      %s391 = sphi 0, %s377
      %s397 = sphi 0, %s399
      %s400 = sphi 0, %s397
      %s401 = sphi 0, %s400
      %s417 = sphi 0, %s401
      %s423 = sphi 0, %s425
      %s426 = sphi 0, %s423
      %s427 = sphi 0, %s426
      %s443 = sphi 0, %s427
      %s447 = sphi 0, %s447
      %s449 = sphi 0, %s447
      %s450 = sphi 0, %s449
      %s464 = sphi 0, %s450
      %s468 = sphi 0, %s468
      %s470 = sphi 0, %s468
      %s471 = sphi 0, %s470
      %s485 = sphi 0, %s471
      %s493 = sphi 0, %s495
      %s496 = sphi 0, %s493
      %s497 = sphi 0, %s496
      %s513 = sphi 0, %s497
      %s519 = sphi 0, %s521
      %s522 = sphi 0, %s519
      %s523 = sphi 0, %s522
      %s539 = sphi 0, %s523
    $region4: #{tpu_custom_call.1} parent=1 // loop_header_branch
      %37 = sbr.rel (%p35) target = $region8
    $region5: #{tpu_custom_call.1} parent=1 // loop_body
      %s39 = ssub.s32 %s34, 1
      %s40 = ssub.s32 %s34, 2
      %s47 = sadd.s32 1, %s42
      %p48 = scmp.ge.s32.totalorder %s47, 2
      %s49 = scalar_select %p48, 0, %s47
      %s50 = sadd.s32 1, %s41
      %s51 = scalar_select %p48, %s50, %s41
      %p52 = scmp.ge.s32.totalorder %s51, 2
      %s53 = scalar_select %p52, 0, %s51
      %s54 = ssub.s32 %s41, %s53
      %p55 = scmp.eq.s32.totalorder %s54, 0
      %s57 = sadd.s32 %s56, 1
      %s58 = scalar_select %p55, %s56, %s57
      %p61 = pneg %p55
      %p62 = scmp.eq.s32.totalorder %s34, 3
      %p63 = por %p61, %p62
      %p64 = scmp.ne.s32.totalorder %s56, %s59
      %p65 = scmp.eq.s32.totalorder %s34, 0
      %p66 = por %p64, %p65
      %p67 = scmp.ne.s32.totalorder %s56, %s59
      %p68 = scmp.eq.s32.totalorder %s39, 3
      %p69 = por %p67, %p68
      %p70 = scmp.ne.s32.totalorder %s59, %s60
      %p71 = scmp.eq.s32.totalorder %s39, 0
      %p72 = por %p70, %p71
      %p73 = scmp.ne.s32.totalorder %s59, %s60
      %p74 = scmp.eq.s32.totalorder %s40, 3
      %p75 = por %p73, %p74
      %p77 = scmp.ne.s32.totalorder %s60, %s76
      %p78 = scmp.eq.s32.totalorder %s40, 0
      %p79 = por %p77, %p78
      %s81 = sadd.s32 %s80, 1
      %p84 = scmp.eq.s32.totalorder %s34, 3
      %p85 = scmp.ne.s32.totalorder %s80, %s82
      %p86 = scmp.eq.s32.totalorder %s34, 0
      %p87 = por %p85, %p86
      %p88 = scmp.ne.s32.totalorder %s80, %s82
      %p89 = scmp.eq.s32.totalorder %s39, 3
      %p90 = por %p88, %p89
      %p91 = scmp.ne.s32.totalorder %s82, %s83
      %p92 = scmp.eq.s32.totalorder %s39, 0
      %p93 = por %p91, %p92
      %p94 = scmp.ne.s32.totalorder %s82, %s83
      %p95 = scmp.eq.s32.totalorder %s40, 3
      %p96 = por %p94, %p95
      %p98 = scmp.ne.s32.totalorder %s83, %s97
      %p99 = scmp.eq.s32.totalorder %s40, 0
      %p100 = por %p98, %p99
      %s102 = sadd.s32 %s101, 1
      %p105 = scmp.eq.s32.totalorder %s34, 3
      %p106 = scmp.ne.s32.totalorder %s101, %s103
      %p107 = scmp.eq.s32.totalorder %s34, 0
      %p108 = por %p106, %p107
      %p109 = scmp.ne.s32.totalorder %s101, %s103
      %p110 = scmp.eq.s32.totalorder %s39, 3
      %p111 = por %p109, %p110
      %p112 = scmp.ne.s32.totalorder %s103, %s104
      %p113 = scmp.eq.s32.totalorder %s39, 0
      %p114 = por %p112, %p113
      %p115 = scmp.ne.s32.totalorder %s103, %s104
      %p116 = scmp.eq.s32.totalorder %s40, 3
      %p117 = por %p115, %p116
      %p119 = scmp.ne.s32.totalorder %s104, %s118
      %p120 = scmp.eq.s32.totalorder %s40, 0
      %p121 = por %p119, %p120
      %s123 = sadd.s32 %s122, 1
      %p126 = scmp.eq.s32.totalorder %s34, 3
      %p127 = scmp.ne.s32.totalorder %s122, %s124
      %p128 = scmp.eq.s32.totalorder %s34, 0
      %p129 = por %p127, %p128
      %p130 = scmp.ne.s32.totalorder %s122, %s124
      %p131 = scmp.eq.s32.totalorder %s39, 3
      %p132 = por %p130, %p131
      %p133 = scmp.ne.s32.totalorder %s124, %s125
      %p134 = scmp.eq.s32.totalorder %s39, 0
      %p135 = por %p133, %p134
      %p136 = scmp.ne.s32.totalorder %s124, %s125
      %p137 = scmp.eq.s32.totalorder %s40, 3
      %p138 = por %p136, %p137
      %p140 = scmp.ne.s32.totalorder %s125, %s139
      %p141 = scmp.eq.s32.totalorder %s40, 0
      %p142 = por %p140, %p141
      %s144 = sadd.s32 %s143, 1
      %p147 = scmp.eq.s32.totalorder %s34, 3
      %p148 = scmp.ne.s32.totalorder %s143, %s145
      %p149 = scmp.eq.s32.totalorder %s34, 0
      %p150 = por %p148, %p149
      %p151 = scmp.ne.s32.totalorder %s143, %s145
      %p152 = scmp.eq.s32.totalorder %s39, 3
      %p153 = por %p151, %p152
      %p154 = scmp.ne.s32.totalorder %s145, %s146
      %p155 = scmp.eq.s32.totalorder %s39, 0
      %p156 = por %p154, %p155
      %p157 = scmp.ne.s32.totalorder %s145, %s146
      %p158 = scmp.eq.s32.totalorder %s40, 3
      %p159 = por %p157, %p158
      %p161 = scmp.ne.s32.totalorder %s146, %s160
      %p162 = scmp.eq.s32.totalorder %s40, 0
      %p163 = por %p161, %p162
      %s165 = sadd.s32 %s164, 1
      %p168 = scmp.eq.s32.totalorder %s34, 3
      %p169 = scmp.ne.s32.totalorder %s164, %s166
      %p170 = scmp.eq.s32.totalorder %s34, 0
      %p171 = por %p169, %p170
      %p172 = scmp.ne.s32.totalorder %s164, %s166
      %p173 = scmp.eq.s32.totalorder %s39, 3
      %p174 = por %p172, %p173
      %p175 = scmp.ne.s32.totalorder %s166, %s167
      %p176 = scmp.eq.s32.totalorder %s39, 0
      %p177 = por %p175, %p176
      %p178 = scmp.ne.s32.totalorder %s166, %s167
      %p179 = scmp.eq.s32.totalorder %s40, 3
      %p180 = por %p178, %p179
      %p182 = scmp.ne.s32.totalorder %s167, %s181
      %p183 = scmp.eq.s32.totalorder %s40, 0
      %p184 = por %p182, %p183
      %s186 = sadd.s32 %s185, 1
      %p189 = scmp.eq.s32.totalorder %s34, 3
      %p190 = scmp.ne.s32.totalorder %s185, %s187
      %p191 = scmp.eq.s32.totalorder %s34, 0
      %p192 = por %p190, %p191
      %p193 = scmp.ne.s32.totalorder %s185, %s187
      %p194 = scmp.eq.s32.totalorder %s39, 3
      %p195 = por %p193, %p194
      %p196 = scmp.ne.s32.totalorder %s187, %s188
      %p197 = scmp.eq.s32.totalorder %s39, 0
      %p198 = por %p196, %p197
      %p199 = scmp.ne.s32.totalorder %s187, %s188
      %p200 = scmp.eq.s32.totalorder %s40, 3
      %p201 = por %p199, %p200
      %p203 = scmp.ne.s32.totalorder %s188, %s202
      %p204 = scmp.eq.s32.totalorder %s40, 0
      %p205 = por %p203, %p204
      %s207 = sadd.s32 %s206, 1
      %p210 = scmp.eq.s32.totalorder %s34, 3
      %p211 = scmp.ne.s32.totalorder %s206, %s208
      %p212 = scmp.eq.s32.totalorder %s34, 0
      %p213 = por %p211, %p212
      %p214 = scmp.ne.s32.totalorder %s206, %s208
      %p215 = scmp.eq.s32.totalorder %s39, 3
      %p216 = por %p214, %p215
      %p217 = scmp.ne.s32.totalorder %s208, %s209
      %p218 = scmp.eq.s32.totalorder %s39, 0
      %p219 = por %p217, %p218
      %p220 = scmp.ne.s32.totalorder %s208, %s209
      %p221 = scmp.eq.s32.totalorder %s40, 3
      %p222 = por %p220, %p221
      %p224 = scmp.ne.s32.totalorder %s209, %s223
      %p225 = scmp.eq.s32.totalorder %s40, 0
      %p226 = por %p224, %p225
      %s228 = sadd.s32 %s227, 1
      %p231 = scmp.eq.s32.totalorder %s34, 3
      %p232 = scmp.ne.s32.totalorder %s227, %s229
      %p233 = scmp.eq.s32.totalorder %s34, 0
      %p234 = por %p232, %p233
      %p235 = scmp.ne.s32.totalorder %s227, %s229
      %p236 = scmp.eq.s32.totalorder %s39, 3
      %p237 = por %p235, %p236
      %p238 = scmp.ne.s32.totalorder %s229, %s230
      %p239 = scmp.eq.s32.totalorder %s39, 0
      %p240 = por %p238, %p239
      %p241 = scmp.ne.s32.totalorder %s229, %s230
      %p242 = scmp.eq.s32.totalorder %s40, 3
      %p243 = por %p241, %p242
      %p245 = scmp.ne.s32.totalorder %s230, %s244
      %p246 = scmp.eq.s32.totalorder %s40, 0
      %p247 = por %p245, %p246
      %s249 = sadd.s32 %s248, 1
      %p252 = scmp.eq.s32.totalorder %s34, 3
      %p253 = scmp.ne.s32.totalorder %s248, %s250
      %p254 = scmp.eq.s32.totalorder %s34, 0
      %p255 = por %p253, %p254
      %p256 = scmp.ne.s32.totalorder %s248, %s250
      %p257 = scmp.eq.s32.totalorder %s39, 3
      %p258 = por %p256, %p257
      %p259 = scmp.ne.s32.totalorder %s250, %s251
      %p260 = scmp.eq.s32.totalorder %s39, 0
      %p261 = por %p259, %p260
      %p262 = scmp.ne.s32.totalorder %s250, %s251
      %p263 = scmp.eq.s32.totalorder %s40, 3
      %p264 = por %p262, %p263
      %p266 = scmp.ne.s32.totalorder %s251, %s265
      %p267 = scmp.eq.s32.totalorder %s40, 0
      %p268 = por %p266, %p267
      %s270 = sadd.s32 %s269, 1
      %p273 = scmp.eq.s32.totalorder %s34, 3
      %p274 = scmp.ne.s32.totalorder %s269, %s271
      %p275 = scmp.eq.s32.totalorder %s34, 0
      %p276 = por %p274, %p275
      %p277 = scmp.ne.s32.totalorder %s269, %s271
      %p278 = scmp.eq.s32.totalorder %s39, 3
      %p279 = por %p277, %p278
      %p280 = scmp.ne.s32.totalorder %s271, %s272
      %p281 = scmp.eq.s32.totalorder %s39, 0
      %p282 = por %p280, %p281
      %p283 = scmp.ne.s32.totalorder %s271, %s272
      %p284 = scmp.eq.s32.totalorder %s40, 3
      %p285 = por %p283, %p284
      %p287 = scmp.ne.s32.totalorder %s272, %s286
      %p288 = scmp.eq.s32.totalorder %s40, 0
      %p289 = por %p287, %p288
      %s291 = sadd.s32 %s290, 1
      %p294 = scmp.eq.s32.totalorder %s34, 3
      %p295 = scmp.ne.s32.totalorder %s290, %s292
      %p296 = scmp.eq.s32.totalorder %s34, 0
      %p297 = por %p295, %p296
      %p298 = scmp.ne.s32.totalorder %s290, %s292
      %p299 = scmp.eq.s32.totalorder %s39, 3
      %p300 = por %p298, %p299
      %p301 = scmp.ne.s32.totalorder %s292, %s293
      %p302 = scmp.eq.s32.totalorder %s39, 0
      %p303 = por %p301, %p302
      %p304 = scmp.ne.s32.totalorder %s292, %s293
      %p305 = scmp.eq.s32.totalorder %s40, 3
      %p306 = por %p304, %p305
      %p308 = scmp.ne.s32.totalorder %s293, %s307
      %p309 = scmp.eq.s32.totalorder %s40, 0
      %p310 = por %p308, %p309
      %s312 = sadd.s32 %s311, 1
      %p315 = scmp.eq.s32.totalorder %s34, 3
      %p316 = scmp.ne.s32.totalorder %s311, %s313
      %p317 = scmp.eq.s32.totalorder %s34, 0
      %p318 = por %p316, %p317
      %p319 = scmp.ne.s32.totalorder %s311, %s313
      %p320 = scmp.eq.s32.totalorder %s39, 3
      %p321 = por %p319, %p320
      %p322 = scmp.ne.s32.totalorder %s313, %s314
      %p323 = scmp.eq.s32.totalorder %s39, 0
      %p324 = por %p322, %p323
      %p325 = scmp.ne.s32.totalorder %s313, %s314
      %p326 = scmp.eq.s32.totalorder %s40, 3
      %p327 = por %p325, %p326
      %p329 = scmp.ne.s32.totalorder %s314, %s328
      %p330 = scmp.eq.s32.totalorder %s40, 0
      %p331 = por %p329, %p330
      %s333 = sadd.s32 %s332, 1
      %p336 = scmp.eq.s32.totalorder %s34, 3
      %p337 = scmp.ne.s32.totalorder %s332, %s334
      %p338 = scmp.eq.s32.totalorder %s34, 0
      %p339 = por %p337, %p338
      %p340 = scmp.ne.s32.totalorder %s332, %s334
      %p341 = scmp.eq.s32.totalorder %s39, 3
      %p342 = por %p340, %p341
      %p343 = scmp.ne.s32.totalorder %s334, %s335
      %p344 = scmp.eq.s32.totalorder %s39, 0
      %p345 = por %p343, %p344
      %p346 = scmp.ne.s32.totalorder %s334, %s335
      %p347 = scmp.eq.s32.totalorder %s40, 3
      %p348 = por %p346, %p347
      %p350 = scmp.ne.s32.totalorder %s335, %s349
      %p351 = scmp.eq.s32.totalorder %s40, 0
      %p352 = por %p350, %p351
      %s354 = sadd.s32 %s353, 1
      %p357 = scmp.eq.s32.totalorder %s34, 3
      %p358 = scmp.ne.s32.totalorder %s353, %s355
      %p359 = scmp.eq.s32.totalorder %s34, 0
      %p360 = por %p358, %p359
      %p361 = scmp.ne.s32.totalorder %s353, %s355
      %p362 = scmp.eq.s32.totalorder %s39, 3
      %p363 = por %p361, %p362
      %p364 = scmp.ne.s32.totalorder %s355, %s356
      %p365 = scmp.eq.s32.totalorder %s39, 0
      %p366 = por %p364, %p365
      %p367 = scmp.ne.s32.totalorder %s355, %s356
      %p368 = scmp.eq.s32.totalorder %s40, 3
      %p369 = por %p367, %p368
      %p371 = scmp.ne.s32.totalorder %s356, %s370
      %p372 = scmp.eq.s32.totalorder %s40, 0
      %p373 = por %p371, %p372
      %s375 = sadd.s32 %s374, 1
      %p378 = scmp.eq.s32.totalorder %s34, 3
      %p379 = scmp.ne.s32.totalorder %s374, %s376
      %p380 = scmp.eq.s32.totalorder %s34, 0
      %p381 = por %p379, %p380
      %p382 = scmp.ne.s32.totalorder %s374, %s376
      %p383 = scmp.eq.s32.totalorder %s39, 3
      %p384 = por %p382, %p383
      %p385 = scmp.ne.s32.totalorder %s376, %s377
      %p386 = scmp.eq.s32.totalorder %s39, 0
      %p387 = por %p385, %p386
      %p388 = scmp.ne.s32.totalorder %s376, %s377
      %p389 = scmp.eq.s32.totalorder %s40, 3
      %p390 = por %p388, %p389
      %p392 = scmp.ne.s32.totalorder %s377, %s391
      %p393 = scmp.eq.s32.totalorder %s40, 0
      %p394 = por %p392, %p393
      %s395 = ssub.s32 %s42, %s49
      %p396 = scmp.eq.s32.totalorder %s395, 0
      %s398 = sadd.s32 %s397, 1
      %s399 = scalar_select %p396, %s397, %s398
      %p402 = pneg %p396
      %p403 = scmp.eq.s32.totalorder %s34, 3
      %p404 = por %p402, %p403
      %p405 = scmp.ne.s32.totalorder %s397, %s400
      %p406 = scmp.eq.s32.totalorder %s34, 0
      %p407 = por %p405, %p406
      %p408 = scmp.ne.s32.totalorder %s397, %s400
      %p409 = scmp.eq.s32.totalorder %s39, 3
      %p410 = por %p408, %p409
      %p411 = scmp.ne.s32.totalorder %s400, %s401
      %p412 = scmp.eq.s32.totalorder %s39, 0
      %p413 = por %p411, %p412
      %p414 = scmp.ne.s32.totalorder %s400, %s401
      %p415 = scmp.eq.s32.totalorder %s40, 3
      %p416 = por %p414, %p415
      %p418 = scmp.ne.s32.totalorder %s401, %s417
      %p419 = scmp.eq.s32.totalorder %s40, 0
      %p420 = por %p418, %p419
      %s421 = ssub.s32 %s42, %s49
      %p422 = scmp.eq.s32.totalorder %s421, 0
      %s424 = sadd.s32 %s423, 1
      %s425 = scalar_select %p422, %s423, %s424
      %p428 = pneg %p422
      %p429 = scmp.eq.s32.totalorder %s34, 3
      %p430 = por %p428, %p429
      %p431 = scmp.ne.s32.totalorder %s423, %s426
      %p432 = scmp.eq.s32.totalorder %s34, 0
      %p433 = por %p431, %p432
      %p434 = scmp.ne.s32.totalorder %s423, %s426
      %p435 = scmp.eq.s32.totalorder %s39, 3
      %p436 = por %p434, %p435
      %p437 = scmp.ne.s32.totalorder %s426, %s427
      %p438 = scmp.eq.s32.totalorder %s39, 0
      %p439 = por %p437, %p438
      %p440 = scmp.ne.s32.totalorder %s426, %s427
      %p441 = scmp.eq.s32.totalorder %s40, 3
      %p442 = por %p440, %p441
      %p444 = scmp.ne.s32.totalorder %s427, %s443
      %p445 = scmp.eq.s32.totalorder %s40, 0
      %p446 = por %p444, %p445
      %s448 = sadd.s32 %s447, 1
      %p451 = scmp.eq.s32.totalorder %s34, 3
      %p452 = scmp.ne.s32.totalorder %s447, %s449
      %p453 = scmp.eq.s32.totalorder %s34, 0
      %p454 = por %p452, %p453
      %p455 = scmp.ne.s32.totalorder %s447, %s449
      %p456 = scmp.eq.s32.totalorder %s39, 3
      %p457 = por %p455, %p456
      %p458 = scmp.ne.s32.totalorder %s449, %s450
      %p459 = scmp.eq.s32.totalorder %s39, 0
      %p460 = por %p458, %p459
      %p461 = scmp.ne.s32.totalorder %s449, %s450
      %p462 = scmp.eq.s32.totalorder %s40, 3
      %p463 = por %p461, %p462
      %p465 = scmp.ne.s32.totalorder %s450, %s464
      %p466 = scmp.eq.s32.totalorder %s40, 0
      %p467 = por %p465, %p466
      %s469 = sadd.s32 %s468, 1
      %p472 = scmp.eq.s32.totalorder %s34, 3
      %p473 = scmp.ne.s32.totalorder %s468, %s470
      %p474 = scmp.eq.s32.totalorder %s34, 0
      %p475 = por %p473, %p474
      %p476 = scmp.ne.s32.totalorder %s468, %s470
      %p477 = scmp.eq.s32.totalorder %s39, 3
      %p478 = por %p476, %p477
      %p479 = scmp.ne.s32.totalorder %s470, %s471
      %p480 = scmp.eq.s32.totalorder %s39, 0
      %p481 = por %p479, %p480
      %p482 = scmp.ne.s32.totalorder %s470, %s471
      %p483 = scmp.eq.s32.totalorder %s40, 3
      %p484 = por %p482, %p483
      %p486 = scmp.ne.s32.totalorder %s471, %s485
      %p487 = scmp.eq.s32.totalorder %s40, 0
      %p488 = por %p486, %p487
      %s489 = ssub.s32 %s41, %s53
      %s490 = ssub.s32 %s42, %s49
      %s491 = sor.u32 %s489, %s490
      %p492 = scmp.eq.s32.totalorder %s491, 0
      %s494 = sadd.s32 %s493, 1
      %s495 = scalar_select %p492, %s493, %s494
      %p498 = pneg %p492
      %p499 = scmp.eq.s32.totalorder %s34, 3
      %p500 = por %p498, %p499
      %p501 = scmp.ne.s32.totalorder %s493, %s496
      %p502 = scmp.eq.s32.totalorder %s34, 0
      %p503 = por %p501, %p502
      %p504 = scmp.ne.s32.totalorder %s493, %s496
      %p505 = scmp.eq.s32.totalorder %s39, 3
      %p506 = por %p504, %p505
      %p507 = scmp.ne.s32.totalorder %s496, %s497
      %p508 = scmp.eq.s32.totalorder %s39, 0
      %p509 = por %p507, %p508
      %p510 = scmp.ne.s32.totalorder %s496, %s497
      %p511 = scmp.eq.s32.totalorder %s40, 3
      %p512 = por %p510, %p511
      %p514 = scmp.ne.s32.totalorder %s497, %s513
      %p515 = scmp.eq.s32.totalorder %s40, 0
      %p516 = por %p514, %p515
      %s517 = ssub.s32 %s41, %s53
      %p518 = scmp.eq.s32.totalorder %s517, 0
      %s520 = sadd.s32 %s519, 1
      %s521 = scalar_select %p518, %s519, %s520
      %p524 = pneg %p518
      %p525 = scmp.eq.s32.totalorder %s34, 3
      %p526 = por %p524, %p525
      %p527 = scmp.ne.s32.totalorder %s519, %s522
      %p528 = scmp.eq.s32.totalorder %s34, 0
      %p529 = por %p527, %p528
      %p530 = scmp.ne.s32.totalorder %s519, %s522
      %p531 = scmp.eq.s32.totalorder %s39, 3
      %p532 = por %p530, %p531
      %p533 = scmp.ne.s32.totalorder %s522, %s523
      %p534 = scmp.eq.s32.totalorder %s39, 0
      %p535 = por %p533, %p534
      %p536 = scmp.ne.s32.totalorder %s522, %s523
      %p537 = scmp.eq.s32.totalorder %s40, 3
      %p538 = por %p536, %p537
      %p540 = scmp.ne.s32.totalorder %s523, %s539
      %p541 = scmp.eq.s32.totalorder %s40, 0
      %p542 = por %p540, %p541
      %p543 = scmp.le.s32.totalorder 1, %s34
      %p544 = scmp.lt.s32.totalorder %s34, 5
      %p545 = pnand %p543, %p544
      %p546 = pneg %p545
      // Predicated region
      $region9: #{tpu_custom_call.1} parent=5 // pred_check
        _
      $region10: #{tpu_custom_call.1} parent=5 // pred_check_branch
        %548 = sbr.rel (%p545) target = $region12
      $region11: #{tpu_custom_call.1} parent=5 // pred_region
        %s549 = ssub.s32 %s34, 1
        // Predicated region
        $region13: #{tpu_custom_call.1} parent=11 // pred_check
          %p550 = pneg %p93
        $region14: #{tpu_custom_call.1} parent=11 // pred_check_branch
          %552 = sbr.rel (%p550) target = $region16
        $region15: #{tpu_custom_call.1} parent=11 // pred_region
          _
        $region16: #{tpu_custom_call.1} parent=11 // pred_fallthru
          _
        // Predicated region
        $region17: #{tpu_custom_call.1} parent=11 // pred_check
          %p553 = pneg %p114
        $region18: #{tpu_custom_call.1} parent=11 // pred_check_branch
          %555 = sbr.rel (%p553) target = $region20
        $region19: #{tpu_custom_call.1} parent=11 // pred_region
          _
        $region20: #{tpu_custom_call.1} parent=11 // pred_fallthru
          _
        // Predicated region
        $region21: #{tpu_custom_call.1} parent=11 // pred_check
          %p556 = pneg %p135
        $region22: #{tpu_custom_call.1} parent=11 // pred_check_branch
          %558 = sbr.rel (%p556) target = $region24
        $region23: #{tpu_custom_call.1} parent=11 // pred_region
          _
        $region24: #{tpu_custom_call.1} parent=11 // pred_fallthru
          _
        // Predicated region
        $region25: #{tpu_custom_call.1} parent=11 // pred_check
          %p559 = pneg %p156
        $region26: #{tpu_custom_call.1} parent=11 // pred_check_branch
          %561 = sbr.rel (%p559) target = $region28
        $region27: #{tpu_custom_call.1} parent=11 // pred_region
          _
        $region28: #{tpu_custom_call.1} parent=11 // pred_fallthru
          _
        // Predicated region
        $region29: #{tpu_custom_call.1} parent=11 // pred_check
          %p562 = pneg %p177
        $region30: #{tpu_custom_call.1} parent=11 // pred_check_branch
          %564 = sbr.rel (%p562) target = $region32
        $region31: #{tpu_custom_call.1} parent=11 // pred_region
          _
        $region32: #{tpu_custom_call.1} parent=11 // pred_fallthru
          _
        // Predicated region
        $region33: #{tpu_custom_call.1} parent=11 // pred_check
          %p565 = pneg %p198
        $region34: #{tpu_custom_call.1} parent=11 // pred_check_branch
          %567 = sbr.rel (%p565) target = $region36
        $region35: #{tpu_custom_call.1} parent=11 // pred_region
          _
        $region36: #{tpu_custom_call.1} parent=11 // pred_fallthru
          _
        // Predicated region
        $region37: #{tpu_custom_call.1} parent=11 // pred_check
          %p568 = pneg %p219
        $region38: #{tpu_custom_call.1} parent=11 // pred_check_branch
          %570 = sbr.rel (%p568) target = $region40
        $region39: #{tpu_custom_call.1} parent=11 // pred_region
          _
        $region40: #{tpu_custom_call.1} parent=11 // pred_fallthru
          _
        // Predicated region
        $region41: #{tpu_custom_call.1} parent=11 // pred_check
          %p571 = pneg %p240
        $region42: #{tpu_custom_call.1} parent=11 // pred_check_branch
          %573 = sbr.rel (%p571) target = $region44
        $region43: #{tpu_custom_call.1} parent=11 // pred_region
          _
        $region44: #{tpu_custom_call.1} parent=11 // pred_fallthru
          _
        // Predicated region
        $region45: #{tpu_custom_call.1} parent=11 // pred_check
          %p574 = pneg %p261
        $region46: #{tpu_custom_call.1} parent=11 // pred_check_branch
          %576 = sbr.rel (%p574) target = $region48
        $region47: #{tpu_custom_call.1} parent=11 // pred_region
          _
        $region48: #{tpu_custom_call.1} parent=11 // pred_fallthru
          _
        // Predicated region
        $region49: #{tpu_custom_call.1} parent=11 // pred_check
          %p577 = pneg %p282
        $region50: #{tpu_custom_call.1} parent=11 // pred_check_branch
          %579 = sbr.rel (%p577) target = $region52
        $region51: #{tpu_custom_call.1} parent=11 // pred_region
          _
        $region52: #{tpu_custom_call.1} parent=11 // pred_fallthru
          _
        // Predicated region
        $region53: #{tpu_custom_call.1} parent=11 // pred_check
          %p580 = pneg %p303
        $region54: #{tpu_custom_call.1} parent=11 // pred_check_branch
          %582 = sbr.rel (%p580) target = $region56
        $region55: #{tpu_custom_call.1} parent=11 // pred_region
          _
        $region56: #{tpu_custom_call.1} parent=11 // pred_fallthru
          _
        // Predicated region
        $region57: #{tpu_custom_call.1} parent=11 // pred_check
          %p583 = pneg %p324
        $region58: #{tpu_custom_call.1} parent=11 // pred_check_branch
          %585 = sbr.rel (%p583) target = $region60
        $region59: #{tpu_custom_call.1} parent=11 // pred_region
          _
        $region60: #{tpu_custom_call.1} parent=11 // pred_fallthru
          _
        // Predicated region
        $region61: #{tpu_custom_call.1} parent=11 // pred_check
          %p586 = pneg %p345
        $region62: #{tpu_custom_call.1} parent=11 // pred_check_branch
          %588 = sbr.rel (%p586) target = $region64
        $region63: #{tpu_custom_call.1} parent=11 // pred_region
          _
        $region64: #{tpu_custom_call.1} parent=11 // pred_fallthru
          _
        // Predicated region
        $region65: #{tpu_custom_call.1} parent=11 // pred_check
          %p589 = pneg %p366
        $region66: #{tpu_custom_call.1} parent=11 // pred_check_branch
          %591 = sbr.rel (%p589) target = $region68
        $region67: #{tpu_custom_call.1} parent=11 // pred_region
          _
        $region68: #{tpu_custom_call.1} parent=11 // pred_fallthru
          _
        // Predicated region
        $region69: #{tpu_custom_call.1} parent=11 // pred_check
          %p592 = pneg %p387
        $region70: #{tpu_custom_call.1} parent=11 // pred_check_branch
          %594 = sbr.rel (%p592) target = $region72
        $region71: #{tpu_custom_call.1} parent=11 // pred_region
          _
        $region72: #{tpu_custom_call.1} parent=11 // pred_fallthru
          _
        // Predicated region
        $region73: #{tpu_custom_call.1} parent=11 // pred_check
          %p595 = pneg %p460
        $region74: #{tpu_custom_call.1} parent=11 // pred_check_branch
          %597 = sbr.rel (%p595) target = $region76
        $region75: #{tpu_custom_call.1} parent=11 // pred_region
          _
        $region76: #{tpu_custom_call.1} parent=11 // pred_fallthru
          _
        // Predicated region
        $region77: #{tpu_custom_call.1} parent=11 // pred_check
          %p598 = pneg %p481
        $region78: #{tpu_custom_call.1} parent=11 // pred_check_branch
          %600 = sbr.rel (%p598) target = $region80
        $region79: #{tpu_custom_call.1} parent=11 // pred_region
          _
        $region80: #{tpu_custom_call.1} parent=11 // pred_fallthru
          _
      $region12: #{tpu_custom_call.1} parent=5 // pred_fallthru
        _
      %p601 = scmp.lt.s32.totalorder %s34, 4
      // Predicated region
      $region81: #{tpu_custom_call.1} parent=5 // pred_check
        %p602 = pneg %p601
      $region82: #{tpu_custom_call.1} parent=5 // pred_check_branch
        %604 = sbr.rel (%p602) target = $region84
      $region83: #{tpu_custom_call.1} parent=5 // pred_region
        // Predicated region
        $region85: #{tpu_custom_call.1} parent=83 // pred_check
          %p605 = pneg %p66
        $region86: #{tpu_custom_call.1} parent=83 // pred_check_branch
          %607 = sbr.rel (%p605) target = $region88
        $region87: #{tpu_custom_call.1} parent=83 // pred_region
          %p608 = scmp.lt.s32.totalorder %s41, 1
          %s609 = scalar_select %p608, %s41, 1
          %s610 = smul.addr %s609, 4
          %s611 = smul.addr %s610, 4
          %s612 = scalar_lea.vmem %s0, %s611
        $region88: #{tpu_custom_call.1} parent=83 // pred_fallthru
          _
        // Predicated region
        $region89: #{tpu_custom_call.1} parent=83 // pred_check
          %p613 = pneg %p407
        $region90: #{tpu_custom_call.1} parent=83 // pred_check_branch
          %615 = sbr.rel (%p613) target = $region92
        $region91: #{tpu_custom_call.1} parent=83 // pred_region
          %s616 = smul.u32 2, %s42
          %p617 = scmp.lt.s32.totalorder %s616, 3
          %s618 = scalar_select %p617, %s616, 3
          %s619 = smul.addr %s618, 8
          %s620 = scalar_lea.vmem %s16, %s619
          %s621 = smul.u32 2, %s42
        $region92: #{tpu_custom_call.1} parent=83 // pred_fallthru
          _
        // Predicated region
        $region93: #{tpu_custom_call.1} parent=83 // pred_check
          %p622 = pneg %p433
        $region94: #{tpu_custom_call.1} parent=83 // pred_check_branch
          %624 = sbr.rel (%p622) target = $region96
        $region95: #{tpu_custom_call.1} parent=83 // pred_region
          %s625 = smul.u32 2, %s42
          %p626 = scmp.lt.s32.totalorder %s625, 3
          %s627 = scalar_select %p626, %s625, 3
          %s628 = smul.addr %s627, 8
          %s629 = scalar_lea.vmem %s17, %s628
          %s630 = smul.u32 2, %s42
        $region96: #{tpu_custom_call.1} parent=83 // pred_fallthru
          _
      $region84: #{tpu_custom_call.1} parent=5 // pred_fallthru
        _
      %p631 = scmp.le.s32.totalorder 1, %s34
      %p632 = scmp.lt.s32.totalorder %s34, 5
      %p633 = pnand %p631, %p632
      %p634 = pneg %p633
      // Predicated region
      $region97: #{tpu_custom_call.1} parent=5 // pred_check
        _
      $region98: #{tpu_custom_call.1} parent=5 // pred_check_branch
        %636 = sbr.rel (%p633) target = $region100
      $region99: #{tpu_custom_call.1} parent=5 // pred_region
        %s637 = ssub.s32 %s34, 1
        %p638 = scmp.lt.s32.totalorder %s43, 1
        %s639 = scalar_select %p638, %s43, 1
        %s640 = smul.addr %s639, 4
        %s641 = smul.addr %s640, 4
        %s642 = scalar_lea.vmem %s0, %s641
        %p643 = pneg %p72
        %p644 = pneg %p69
        %p645 = pneg %p93
        %p646 = pneg %p90
        %p647 = pneg %p114
        %p648 = pneg %p111
        %p649 = pneg %p135
        %p650 = pneg %p132
        %p651 = pneg %p156
        %p652 = pneg %p153
        %p653 = pneg %p177
        %p654 = pneg %p174
        %p655 = pneg %p198
        %p656 = pneg %p195
        %p657 = pneg %p219
        %p658 = pneg %p216
        %p659 = pneg %p240
        %p660 = pneg %p237
        %p661 = pneg %p261
        %p662 = pneg %p258
        %p663 = pneg %p282
        %p664 = pneg %p279
        %p665 = pneg %p303
        %p666 = pneg %p300
        %p667 = pneg %p324
        %p668 = pneg %p321
        %p669 = pneg %p345
        %p670 = pneg %p342
        %p671 = pneg %p366
        %p672 = pneg %p363
        %p673 = pneg %p387
        %p674 = pneg %p384
        %s675 = smul.u32 2, %s44
        %p676 = scmp.lt.s32.totalorder %s675, 3
        %s677 = scalar_select %p676, %s675, 3
        %s678 = smul.addr %s677, 8
        %s679 = scalar_lea.vmem %s16, %s678
        %p680 = pneg %p413
        %p681 = pneg %p410
        %s682 = smul.u32 2, %s44
        %p683 = scmp.lt.s32.totalorder %s682, 3
        %s684 = scalar_select %p683, %s682, 3
        %s685 = smul.addr %s684, 8
        %s686 = scalar_lea.vmem %s17, %s685
        %p687 = pneg %p439
        %p688 = pneg %p436
        %p689 = pneg %p460
        %p690 = pneg %p457
        %p691 = pneg %p481
        %p692 = pneg %p478
        %p693 = pneg %p509
        %p694 = pneg %p506
        %s695 = sand.u32 %s496, 1
        %s696 = scalar_lea.sflag [#allocation6], %s695
        %s697 = sand.u32 %s496, 1
        %s698 = smul.addr %s697, 16
        %s699 = scalar_lea.vmem [#allocation5], %s698
        %p700 = pneg %p535
        %p701 = pneg %p532
        %s702 = sand.u32 %s522, 1
        %s703 = scalar_lea.sflag [#allocation8], %s702
        %s704 = sand.u32 %s522, 1
        %s705 = smul.addr %s704, 16
        %s706 = scalar_lea.vmem [#allocation7], %s705
        %p707 = scmp.lt.s32.totalorder %s43, 1
        %s708 = scalar_select %p707, %s43, 1
        %s709 = smul.addr %s708, 4
        %s710 = smul.addr %s709, 4
        %s711 = scalar_lea.vmem %s0, %s710
        %s712 = smul.u32 2, %s44
        %p713 = scmp.lt.s32.totalorder %s712, 3
        %s714 = scalar_select %p713, %s712, 3
        %s715 = smul.addr %s714, 8
        %s716 = scalar_lea.vmem %s16, %s715
        %s717 = smul.u32 2, %s44
        %s718 = smul.u32 2, %s44
        %p719 = scmp.lt.s32.totalorder %s718, 3
        %s720 = scalar_select %p719, %s718, 3
        %s721 = smul.addr %s720, 8
        %s722 = scalar_lea.vmem %s17, %s721
        %s723 = smul.u32 2, %s44
        %s724 = smul.u32 2, %s44
        %p726 = scmp.eq.s32.totalorder %s44, 0
        // Predicated region
        $region101: #{tpu_custom_call.1} parent=99 // pred_check
          %p727 = pneg %p726
        $region102: #{tpu_custom_call.1} parent=99 // pred_check_branch
          %729 = sbr.rel (%p727) target = $region104
        $region103: #{tpu_custom_call.1} parent=99 // pred_region
          %v730 = vld [vmem:[%s711] sm:$0xf]
          %v731 = vld [vmem:[%s711 + $0x4] sm:$0xf]
          %v732 = vld [vmem:[%s711 + $0x8] sm:$0xf]
          %v733 = vld [vmem:[%s711 + $0xc] sm:$0xf]
          %v734 = vld [vmem:[%s7] sm:$0xf]
          %v735 = vld [vmem:[%s7 + $0x4] sm:$0xf]
          %v736 = vld [vmem:[%s7 + $0x8] sm:$0xf]
          %v737 = vld [vmem:[%s7 + $0xc] sm:$0xf]
          %v738 = vld [vmem:[%s7 + $0x10] sm:$0xf]
          %v739 = vld [vmem:[%s7 + $0x14] sm:$0xf]
          %v744 = vunpack.c.l.b16 %v730
          %v745 = vunpack.c.l.b16 %v731
          %v746 = vunpack.c.l.b16 %v732
          %v747 = vunpack.c.l.b16 %v733
          %v748 = vpack.c.b16 %v745, %v744
          %v749 = vpack.c.b16 %v747, %v746
          %v756 = vunpack.c.l.b16 %v734
          %v757 = vunpack.c.l.b16 %v735
          %v758 = vunpack.c.l.b16 %v736
          %v759 = vunpack.c.l.b16 %v737
          %v760 = vunpack.c.l.b16 %v738
          %v761 = vunpack.c.l.b16 %v739
          %v762 = vpack.c.b16 %v757, %v756
          %v763 = vpack.c.b16 %v759, %v758
          %v764 = vpack.c.b16 %v761, %v760
          %vm768 = vcmask 392192
          %v770 = vsel %vm768, %v748, 0
          %v773 = vsel %vm768, %v749, 0
          %775 = vmatpush.bf16.msra.mxu0 0
          %776 = vmatpush.bf16.msra.mxu0 0
          %777 = vmatpush.bf16.msra.mxu0 0
          %778 = vmatpush.bf16.msra.mxu0 0
          %779 = vmatpush.bf16.msra.mxu0 0
          %780 = vmatpush.bf16.msra.mxu0 %v764
          %781 = vmatpush.bf16.msra.mxu0 %v763
          %782 = vmatpush.bf16.msra.mxu0 %v762
          %783 = vmatmul.bf16.gmra.mxu0 %v770
          %v784 = vpop.f32.mrf.mxu0
          %v785 = vadd.f32 0.0, %v784
          %v786 = vpop.f32.mrf.mxu0
          %v787 = vadd.f32 0.0, %v786
          %788 = vmatmul.bf16.gmra.mxu0 %v773
          %v789 = vpop.f32.mrf.mxu0
          %v790 = vadd.f32 0.0, %v789
          %v791 = vpop.f32.mrf.mxu0
          %v792 = vadd.f32 0.0, %v791
          %793 = vdwg.mxu0
          %v794 = vpack.c.bf16 %v785, %v785
          %v795 = vpack.c.bf16 %v787, %v787
          %v796 = vpack.c.bf16 %v790, %v790
          %v797 = vpack.c.bf16 %v792, %v792
          %798 = vst [vmem:[%s706] sm:$0xf] %v794
          %799 = vst [vmem:[%s706 + $0x4] sm:$0xf] %v795
          %800 = vst [vmem:[%s706 + $0x8] sm:$0xf] %v796
          %801 = vst [vmem:[%s706 + $0xc] sm:$0xf] %v797
          %v802 = vld [vmem:[%s8] sm:$0xf]
          %v803 = vld [vmem:[%s8 + $0x4] sm:$0xf]
          %v804 = vld [vmem:[%s8 + $0x8] sm:$0xf]
          %v805 = vld [vmem:[%s8 + $0xc] sm:$0xf]
          %v806 = vld [vmem:[%s8 + $0x10] sm:$0xf]
          %v807 = vld [vmem:[%s8 + $0x14] sm:$0xf]
          %v814 = vunpack.c.l.b16 %v802
          %v815 = vunpack.c.l.b16 %v803
          %v816 = vunpack.c.l.b16 %v804
          %v817 = vunpack.c.l.b16 %v805
          %v818 = vunpack.c.l.b16 %v806
          %v819 = vunpack.c.l.b16 %v807
          %v820 = vpack.c.b16 %v815, %v814
          %v821 = vpack.c.b16 %v817, %v816
          %v822 = vpack.c.b16 %v819, %v818
          %826 = vmatpush.bf16.msra.mxu0 0
          %827 = vmatpush.bf16.msra.mxu0 0
          %828 = vmatpush.bf16.msra.mxu0 0
          %829 = vmatpush.bf16.msra.mxu0 0
          %830 = vmatpush.bf16.msra.mxu0 0
          %831 = vmatpush.bf16.msra.mxu0 %v822
          %832 = vmatpush.bf16.msra.mxu0 %v821
          %833 = vmatpush.bf16.msra.mxu0 %v820
          %834 = vmatmul.bf16.gmra.mxu0 %v770
          %v835 = vpop.f32.mrf.mxu0
          %v836 = vadd.f32 0.0, %v835
          %v837 = vpop.f32.mrf.mxu0
          %v838 = vadd.f32 0.0, %v837
          %839 = vmatmul.bf16.gmra.mxu0 %v773
          %v840 = vpop.f32.mrf.mxu0
          %v841 = vadd.f32 0.0, %v840
          %v842 = vpop.f32.mrf.mxu0
          %v843 = vadd.f32 0.0, %v842
          %844 = vdwg.mxu0
          %v845 = vld [vmem:[%s11] sm:$0x1]
          %v846 = vld [vmem:[%s12] sm:$0x1]
          %vm847 = vcmask 261120
          %v848 = vsel %vm847, %v836, 0.0
          %849 = vadd.xlane.f32.xlu0 %v848
          %v850 = vpop.xlane.xlu0 %849
          %v851 = vsel %vm847, %v838, 0.0
          %852 = vadd.xlane.f32.xlu0 %v851
          %v853 = vpop.xlane.xlu0 %852
          %v854 = vsel %vm847, %v841, 0.0
          %855 = vadd.xlane.f32.xlu0 %v854
          %v856 = vpop.xlane.xlu0 %855
          %v857 = vsel %vm847, %v843, 0.0
          %858 = vadd.xlane.f32.xlu0 %v857
          %v859 = vpop.xlane.xlu0 %858
          %v860 = vrcp.pop 32.0
          %v861 = vmul.f32 32.0, %v860
          %v862 = vsub.f32 1.0, %v861
          %v863 = vmul.f32 %v860, %v862
          %v864 = vadd.f32 %v860, %v863
          %vm865 = vweird.f32 %v860
          %v866 = vsel %vm865, %v860, %v864
          %v867 = vmul.f32 %v850, %v866
          %v868 = vmul.f32 %v853, %v866
          %v869 = vmul.f32 %v856, %v866
          %v870 = vmul.f32 %v859, %v866
          %v871 = vsub.f32 %v836, %v867
          %v872 = vsub.f32 %v838, %v868
          %v873 = vsub.f32 %v841, %v869
          %v874 = vsub.f32 %v843, %v870
          %v875 = vmul.f32 %v871, %v871
          %v876 = vmul.f32 %v872, %v872
          %v877 = vmul.f32 %v873, %v873
          %v878 = vmul.f32 %v874, %v874
          %v879 = vsel %vm847, %v875, 0.0
          %880 = vadd.xlane.f32.xlu0 %v879
          %v881 = vpop.xlane.xlu0 %880
          %v882 = vsel %vm847, %v876, 0.0
          %883 = vadd.xlane.f32.xlu0 %v882
          %v884 = vpop.xlane.xlu0 %883
          %v885 = vsel %vm847, %v877, 0.0
          %886 = vadd.xlane.f32.xlu0 %v885
          %v887 = vpop.xlane.xlu0 %886
          %v888 = vsel %vm847, %v878, 0.0
          %889 = vadd.xlane.f32.xlu0 %v888
          %v890 = vpop.xlane.xlu0 %889
          %v891 = vmul.f32 %v881, %v866
          %v892 = vmul.f32 %v884, %v866
          %v893 = vmul.f32 %v887, %v866
          %v894 = vmul.f32 %v890, %v866
          %v895 = vadd.f32 %v891, 1e-05
          %v896 = vadd.f32 %v892, 1e-05
          %v897 = vadd.f32 %v893, 1e-05
          %v898 = vadd.f32 %v894, 1e-05
          %v899 = vrsqrt.pop %v895
          %v900 = vmul.f32 %v899, %v895
          %v901 = vmul.f32 %v900, %v899
          %v902 = vmul.f32 0.5, %v901
          %v903 = vsub.f32 1.5, %v902
          %v904 = vmul.f32 %v899, %v903
          %vm905 = vweird.f32 %v895
          %vm906 = vweird.f32 %v899
          %vm907 = vmor %vm905, %vm906
          %v908 = vsel %vm907, %v899, %v904
          %v909 = vrsqrt.pop %v896
          %v910 = vmul.f32 %v909, %v896
          %v911 = vmul.f32 %v910, %v909
          %v912 = vmul.f32 0.5, %v911
          %v913 = vsub.f32 1.5, %v912
          %v914 = vmul.f32 %v909, %v913
          %vm915 = vweird.f32 %v896
          %vm916 = vweird.f32 %v909
          %vm917 = vmor %vm915, %vm916
          %v918 = vsel %vm917, %v909, %v914
          %v919 = vrsqrt.pop %v897
          %v920 = vmul.f32 %v919, %v897
          %v921 = vmul.f32 %v920, %v919
          %v922 = vmul.f32 0.5, %v921
          %v923 = vsub.f32 1.5, %v922
          %v924 = vmul.f32 %v919, %v923
          %vm925 = vweird.f32 %v897
          %vm926 = vweird.f32 %v919
          %vm927 = vmor %vm925, %vm926
          %v928 = vsel %vm927, %v919, %v924
          %v929 = vrsqrt.pop %v898
          %v930 = vmul.f32 %v929, %v898
          %v931 = vmul.f32 %v930, %v929
          %v932 = vmul.f32 0.5, %v931
          %v933 = vsub.f32 1.5, %v932
          %v934 = vmul.f32 %v929, %v933
          %vm935 = vweird.f32 %v898
          %vm936 = vweird.f32 %v929
          %vm937 = vmor %vm935, %vm936
          %v938 = vsel %vm937, %v929, %v934
          %v939 = vmul.f32 %v871, %v908
          %v940 = vmul.f32 %v872, %v918
          %v941 = vmul.f32 %v873, %v928
          %v942 = vmul.f32 %v874, %v938
          %v944 = vperm.slane %v845, 0
          %v946 = vmul.f32 %v939, %v944
          %v947 = vmul.f32 %v940, %v944
          %v948 = vmul.f32 %v941, %v944
          %v949 = vmul.f32 %v942, %v944
          %v951 = vperm.slane %v846, 0
          %v953 = vadd.f32 %v946, %v951
          %v954 = vadd.f32 %v947, %v951
          %v955 = vadd.f32 %v948, %v951
          %v956 = vadd.f32 %v949, %v951
          %v957 = vpack.c.bf16 %v954, %v953
          %v958 = vpack.c.bf16 %v956, %v955
          %v959 = vld [vmem:[%s9] sm:$0xf]
          %v960 = vld [vmem:[%s9 + $0x4] sm:$0xf]
          %v961 = vld [vmem:[%s9 + $0x8] sm:$0xf]
          %v962 = vld [vmem:[%s9 + $0xc] sm:$0xf]
          %v963 = vld [vmem:[%s9 + $0x10] sm:$0xf]
          %v964 = vld [vmem:[%s9 + $0x14] sm:$0xf]
          %v971 = vunpack.c.l.b16 %v959
          %v972 = vunpack.c.l.b16 %v960
          %v973 = vunpack.c.l.b16 %v961
          %v974 = vunpack.c.l.b16 %v962
          %v975 = vunpack.c.l.b16 %v963
          %v976 = vunpack.c.l.b16 %v964
          %v977 = vpack.c.b16 %v972, %v971
          %v978 = vpack.c.b16 %v974, %v973
          %v979 = vpack.c.b16 %v976, %v975
          %983 = vmatpush.bf16.msra.mxu0 0
          %984 = vmatpush.bf16.msra.mxu0 0
          %985 = vmatpush.bf16.msra.mxu0 0
          %986 = vmatpush.bf16.msra.mxu0 0
          %987 = vmatpush.bf16.msra.mxu0 0
          %988 = vmatpush.bf16.msra.mxu0 %v979
          %989 = vmatpush.bf16.msra.mxu0 %v978
          %990 = vmatpush.bf16.msra.mxu0 %v977
          %991 = vmatmul.bf16.gmra.mxu0 %v770
          %v992 = vpop.f32.mrf.mxu0
          %v993 = vadd.f32 0.0, %v992
          %v994 = vpop.f32.mrf.mxu0
          %v995 = vadd.f32 0.0, %v994
          %996 = vmatmul.bf16.gmra.mxu0 %v773
          %v997 = vpop.f32.mrf.mxu0
          %v998 = vadd.f32 0.0, %v997
          %v999 = vpop.f32.mrf.mxu0
          %v1000 = vadd.f32 0.0, %v999
          %1001 = vdwg.mxu0
          %v1002 = vld [vmem:[%s10] sm:$0xf]
          %v1003 = vld [vmem:[%s10 + $0x4] sm:$0xf]
          %v1004 = vld [vmem:[%s10 + $0x8] sm:$0xf]
          %v1005 = vld [vmem:[%s10 + $0xc] sm:$0xf]
          %v1006 = vld [vmem:[%s10 + $0x10] sm:$0xf]
          %v1007 = vld [vmem:[%s10 + $0x14] sm:$0xf]
          %v1014 = vunpack.c.l.b16 %v1002
          %v1015 = vunpack.c.l.b16 %v1003
          %v1016 = vunpack.c.l.b16 %v1004
          %v1017 = vunpack.c.l.b16 %v1005
          %v1018 = vunpack.c.l.b16 %v1006
          %v1019 = vunpack.c.l.b16 %v1007
          %v1020 = vpack.c.b16 %v1015, %v1014
          %v1021 = vpack.c.b16 %v1017, %v1016
          %v1022 = vpack.c.b16 %v1019, %v1018
          %1026 = vmatpush.bf16.msra.mxu0 0
          %1027 = vmatpush.bf16.msra.mxu0 0
          %1028 = vmatpush.bf16.msra.mxu0 0
          %1029 = vmatpush.bf16.msra.mxu0 0
          %1030 = vmatpush.bf16.msra.mxu0 0
          %1031 = vmatpush.bf16.msra.mxu0 %v1022
          %1032 = vmatpush.bf16.msra.mxu0 %v1021
          %1033 = vmatpush.bf16.msra.mxu0 %v1020
          %1034 = vmatmul.bf16.gmra.mxu0 %v770
          %v1035 = vpop.f32.mrf.mxu0
          %v1036 = vadd.f32 0.0, %v1035
          %v1037 = vpop.f32.mrf.mxu0
          %v1038 = vadd.f32 0.0, %v1037
          %1039 = vmatmul.bf16.gmra.mxu0 %v773
          %v1040 = vpop.f32.mrf.mxu0
          %v1041 = vadd.f32 0.0, %v1040
          %v1042 = vpop.f32.mrf.mxu0
          %v1043 = vadd.f32 0.0, %v1042
          %1044 = vdwg.mxu0
          %v1045 = vld [vmem:[%s18] sm:$0xff]
          %v1046 = vld [vmem:[%s18 + $0x8] sm:$0xff]
          %v1047 = vld [vmem:[%s18 + $0x10] sm:$0xff]
          %v1048 = vld [vmem:[%s18 + $0x18] sm:$0xff]
          %v1049 = vld [vmem:[%s19] sm:$0xff]
          %v1050 = vld [vmem:[%s19 + $0x8] sm:$0xff]
          %v1051 = vld [vmem:[%s19 + $0x10] sm:$0xff]
          %v1052 = vld [vmem:[%s19 + $0x18] sm:$0xff]
          %v1053 = vmul.f32 %v993, %v1045
          %v1054 = vmul.f32 %v995, %v1046
          %v1055 = vmul.f32 %v998, %v1047
          %v1056 = vmul.f32 %v1000, %v1048
          %v1057 = vmul.f32 %v1036, %v1049
          %v1058 = vmul.f32 %v1038, %v1050
          %v1059 = vmul.f32 %v1041, %v1051
          %v1060 = vmul.f32 %v1043, %v1052
          %v1061 = vsub.f32 %v1053, %v1057
          %v1062 = vsub.f32 %v1054, %v1058
          %v1063 = vsub.f32 %v1055, %v1059
          %v1064 = vsub.f32 %v1056, %v1060
          %v1065 = vmul.f32 %v993, %v1049
          %v1066 = vmul.f32 %v995, %v1050
          %v1067 = vmul.f32 %v998, %v1051
          %v1068 = vmul.f32 %v1000, %v1052
          %v1069 = vmul.f32 %v1036, %v1045
          %v1070 = vmul.f32 %v1038, %v1046
          %v1071 = vmul.f32 %v1041, %v1047
          %v1072 = vmul.f32 %v1043, %v1048
          %v1073 = vadd.f32 %v1065, %v1069
          %v1074 = vadd.f32 %v1066, %v1070
          %v1075 = vadd.f32 %v1067, %v1071
          %v1076 = vadd.f32 %v1068, %v1072
          %1081 = vrot.lane.b32.xlu0 %v1061, 8
          %v1082 = vpop.permute.xlu0 %1081
          %1083 = vrot.lane.b32.xlu0 %v1062, 8
          %v1084 = vpop.permute.xlu0 %1083
          %1085 = vrot.lane.b32.xlu0 %v1063, 8
          %v1086 = vpop.permute.xlu0 %1085
          %1087 = vrot.lane.b32.xlu0 %v1064, 8
          %v1088 = vpop.permute.xlu0 %1087
          %1097 = vrot.lane.b32.xlu0 %v1073, 12
          %v1098 = vpop.permute.xlu0 %1097
          %1099 = vrot.lane.b32.xlu0 %v1074, 12
          %v1100 = vpop.permute.xlu0 %1099
          %1101 = vrot.lane.b32.xlu0 %v1075, 12
          %v1102 = vpop.permute.xlu0 %1101
          %1103 = vrot.lane.b32.xlu0 %v1076, 12
          %v1104 = vpop.permute.xlu0 %1103
          %vm1109 = vcmask 64512
          %v1110 = vsel %vm1109, 0.0, %v1082
          %v1111 = vsel %vm1109, 0.0, %v1084
          %v1112 = vsel %vm1109, 0.0, %v1086
          %v1113 = vsel %vm1109, 0.0, %v1088
          %vm1114 = vcmask 97280
          %v1115 = vsel %vm1114, %v1110, %v1098
          %v1116 = vsel %vm1114, %v1111, %v1100
          %v1117 = vsel %vm1114, %v1112, %v1102
          %v1118 = vsel %vm1114, %v1113, %v1104
          %v1119 = vld [vmem:[%s13] sm:$0xf]
          %v1120 = vld [vmem:[%s13 + $0x4] sm:$0xf]
          %v1121 = vld [vmem:[%s13 + $0x8] sm:$0xf]
          %v1122 = vld [vmem:[%s13 + $0xc] sm:$0xf]
          %v1127 = vunpack.c.l.b16 %v1119
          %v1128 = vunpack.c.l.b16 %v1120
          %v1129 = vunpack.c.l.b16 %v1121
          %v1130 = vunpack.c.l.b16 %v1122
          %v1131 = vpack.c.b16 %v1128, %v1127
          %v1132 = vpack.c.b16 %v1130, %v1129
          %v1136 = vsel %vm847, %v957, 0
          %v1139 = vsel %vm847, %v958, 0
          %1141 = vmatpush.bf16.msra.mxu0 0
          %1142 = vmatpush.bf16.msra.mxu0 0
          %1143 = vmatpush.bf16.msra.mxu0 0
          %1144 = vmatpush.bf16.msra.mxu0 0
          %1145 = vmatpush.bf16.msra.mxu0 0
          %1146 = vmatpush.bf16.msra.mxu0 0
          %1147 = vmatpush.bf16.msra.mxu0 %v1132
          %1148 = vmatpush.bf16.msra.mxu0 %v1131
          %1149 = vmatmul.bf16.gmra.mxu0 %v1136
          %v1150 = vpop.f32.mrf.mxu0
          %v1151 = vadd.f32 %v1115, %v1150
          %v1152 = vpop.f32.mrf.mxu0
          %v1153 = vadd.f32 %v1116, %v1152
          %1154 = vmatmul.bf16.gmra.mxu0 %v1139
          %v1155 = vpop.f32.mrf.mxu0
          %v1156 = vadd.f32 %v1117, %v1155
          %v1157 = vpop.f32.mrf.mxu0
          %v1158 = vadd.f32 %v1118, %v1157
          %1159 = vdwg.mxu0
          %v1160 = vpack.c.bf16 %v1151, %v1151
          %v1161 = vpack.c.bf16 %v1153, %v1153
          %v1162 = vpack.c.bf16 %v1156, %v1156
          %v1163 = vpack.c.bf16 %v1158, %v1158
          %vm1164 = vcmask 125952
          %1165 = vst.msk [vmem:[#allocation2] sm:$0xf] %vm1164, %v1160
          %1166 = vst.msk [vmem:[#allocation2 + $0x4] sm:$0xf] %vm1164, %v1161
          %1167 = vst.msk [vmem:[#allocation2 + $0x8] sm:$0xf] %vm1164, %v1162
          %1168 = vst.msk [vmem:[#allocation2 + $0xc] sm:$0xf] %vm1164, %v1163
          %v1169 = vld [vmem:[%s14] sm:$0xf]
          %v1170 = vld [vmem:[%s14 + $0x4] sm:$0xf]
          %v1171 = vld [vmem:[%s14 + $0x8] sm:$0xf]
          %v1172 = vld [vmem:[%s14 + $0xc] sm:$0xf]
          %v1177 = vunpack.c.l.b16 %v1169
          %v1178 = vunpack.c.l.b16 %v1170
          %v1179 = vunpack.c.l.b16 %v1171
          %v1180 = vunpack.c.l.b16 %v1172
          %v1181 = vpack.c.b16 %v1178, %v1177
          %v1182 = vpack.c.b16 %v1180, %v1179
          %1185 = vmatpush.bf16.msra.mxu0 0
          %1186 = vmatpush.bf16.msra.mxu0 0
          %1187 = vmatpush.bf16.msra.mxu0 0
          %1188 = vmatpush.bf16.msra.mxu0 0
          %1189 = vmatpush.bf16.msra.mxu0 0
          %1190 = vmatpush.bf16.msra.mxu0 0
          %1191 = vmatpush.bf16.msra.mxu0 %v1182
          %1192 = vmatpush.bf16.msra.mxu0 %v1181
          %1193 = vmatmul.bf16.gmra.mxu0 %v1136
          %v1194 = vpop.f32.mrf.mxu0
          %v1195 = vadd.f32 0.0, %v1194
          %v1196 = vpop.f32.mrf.mxu0
          %v1197 = vadd.f32 0.0, %v1196
          %1198 = vmatmul.bf16.gmra.mxu0 %v1139
          %v1199 = vpop.f32.mrf.mxu0
          %v1200 = vadd.f32 0.0, %v1199
          %v1201 = vpop.f32.mrf.mxu0
          %v1202 = vadd.f32 0.0, %v1201
          %1203 = vdwg.mxu0
          %v1204 = vpack.c.bf16 %v1195, %v1195
          %v1205 = vpack.c.bf16 %v1197, %v1197
          %v1206 = vpack.c.bf16 %v1200, %v1200
          %v1207 = vpack.c.bf16 %v1202, %v1202
          %1208 = vst.msk [vmem:[#allocation3] sm:$0xf] %vm1164, %v1204
          %1209 = vst.msk [vmem:[#allocation3 + $0x4] sm:$0xf] %vm1164, %v1205
          %1210 = vst.msk [vmem:[#allocation3 + $0x8] sm:$0xf] %vm1164, %v1206
          %1211 = vst.msk [vmem:[#allocation3 + $0xc] sm:$0xf] %vm1164, %v1207
          %s1212 = scalar_lea.vmem %s13, 16
          %v1213 = vld [vmem:[%s1212] sm:$0xf]
          %v1214 = vld [vmem:[%s1212 + $0x4] sm:$0xf]
          %v1215 = vld [vmem:[%s1212 + $0x8] sm:$0xf]
          %v1216 = vld [vmem:[%s1212 + $0xc] sm:$0xf]
          %v1221 = vunpack.c.l.b16 %v1213
          %v1222 = vunpack.c.l.b16 %v1214
          %v1223 = vunpack.c.l.b16 %v1215
          %v1224 = vunpack.c.l.b16 %v1216
          %v1225 = vpack.c.b16 %v1222, %v1221
          %v1226 = vpack.c.b16 %v1224, %v1223
          %1229 = vmatpush.bf16.msra.mxu0 0
          %1230 = vmatpush.bf16.msra.mxu0 0
          %1231 = vmatpush.bf16.msra.mxu0 0
          %1232 = vmatpush.bf16.msra.mxu0 0
          %1233 = vmatpush.bf16.msra.mxu0 0
          %1234 = vmatpush.bf16.msra.mxu0 0
          %1235 = vmatpush.bf16.msra.mxu0 %v1226
          %1236 = vmatpush.bf16.msra.mxu0 %v1225
          %1237 = vmatmul.bf16.gmra.mxu0 %v1136
          %v1238 = vpop.f32.mrf.mxu0
          %v1239 = vadd.f32 %v1115, %v1238
          %v1240 = vpop.f32.mrf.mxu0
          %v1241 = vadd.f32 %v1116, %v1240
          %1242 = vmatmul.bf16.gmra.mxu0 %v1139
          %v1243 = vpop.f32.mrf.mxu0
          %v1244 = vadd.f32 %v1117, %v1243
          %v1245 = vpop.f32.mrf.mxu0
          %v1246 = vadd.f32 %v1118, %v1245
          %1247 = vdwg.mxu0
          %v1248 = vpack.c.bf16 %v1239, %v1239
          %v1249 = vpack.c.bf16 %v1241, %v1241
          %v1250 = vpack.c.bf16 %v1244, %v1244
          %v1251 = vpack.c.bf16 %v1246, %v1246
          %s1252 = scalar_lea.vmem [#allocation2], 16
          %1253 = vst.msk [vmem:[%s1252] sm:$0xf] %vm1164, %v1248
          %1254 = vst.msk [vmem:[%s1252 + $0x4] sm:$0xf] %vm1164, %v1249
          %1255 = vst.msk [vmem:[%s1252 + $0x8] sm:$0xf] %vm1164, %v1250
          %1256 = vst.msk [vmem:[%s1252 + $0xc] sm:$0xf] %vm1164, %v1251
          %s1257 = scalar_lea.vmem %s14, 16
          %v1258 = vld [vmem:[%s1257] sm:$0xf]
          %v1259 = vld [vmem:[%s1257 + $0x4] sm:$0xf]
          %v1260 = vld [vmem:[%s1257 + $0x8] sm:$0xf]
          %v1261 = vld [vmem:[%s1257 + $0xc] sm:$0xf]
          %v1266 = vunpack.c.l.b16 %v1258
          %v1267 = vunpack.c.l.b16 %v1259
          %v1268 = vunpack.c.l.b16 %v1260
          %v1269 = vunpack.c.l.b16 %v1261
          %v1270 = vpack.c.b16 %v1267, %v1266
          %v1271 = vpack.c.b16 %v1269, %v1268
          %1274 = vmatpush.bf16.msra.mxu0 0
          %1275 = vmatpush.bf16.msra.mxu0 0
          %1276 = vmatpush.bf16.msra.mxu0 0
          %1277 = vmatpush.bf16.msra.mxu0 0
          %1278 = vmatpush.bf16.msra.mxu0 0
          %1279 = vmatpush.bf16.msra.mxu0 0
          %1280 = vmatpush.bf16.msra.mxu0 %v1271
          %1281 = vmatpush.bf16.msra.mxu0 %v1270
          %1282 = vmatmul.bf16.gmra.mxu0 %v1136
          %v1283 = vpop.f32.mrf.mxu0
          %v1284 = vadd.f32 0.0, %v1283
          %v1285 = vpop.f32.mrf.mxu0
          %v1286 = vadd.f32 0.0, %v1285
          %1287 = vmatmul.bf16.gmra.mxu0 %v1139
          %v1288 = vpop.f32.mrf.mxu0
          %v1289 = vadd.f32 0.0, %v1288
          %v1290 = vpop.f32.mrf.mxu0
          %v1291 = vadd.f32 0.0, %v1290
          %1292 = vdwg.mxu0
          %v1293 = vpack.c.bf16 %v1284, %v1284
          %v1294 = vpack.c.bf16 %v1286, %v1286
          %v1295 = vpack.c.bf16 %v1289, %v1289
          %v1296 = vpack.c.bf16 %v1291, %v1291
          %s1297 = scalar_lea.vmem [#allocation3], 16
          %1298 = vst.msk [vmem:[%s1297] sm:$0xf] %vm1164, %v1293
          %1299 = vst.msk [vmem:[%s1297 + $0x4] sm:$0xf] %vm1164, %v1294
          %1300 = vst.msk [vmem:[%s1297 + $0x8] sm:$0xf] %vm1164, %v1295
          %1301 = vst.msk [vmem:[%s1297 + $0xc] sm:$0xf] %vm1164, %v1296
          %s1302 = scalar_lea.vmem %s13, 32
          %v1303 = vld [vmem:[%s1302] sm:$0xf]
          %v1304 = vld [vmem:[%s1302 + $0x4] sm:$0xf]
          %v1305 = vld [vmem:[%s1302 + $0x8] sm:$0xf]
          %v1306 = vld [vmem:[%s1302 + $0xc] sm:$0xf]
          %v1311 = vunpack.c.l.b16 %v1303
          %v1312 = vunpack.c.l.b16 %v1304
          %v1313 = vunpack.c.l.b16 %v1305
          %v1314 = vunpack.c.l.b16 %v1306
          %v1315 = vpack.c.b16 %v1312, %v1311
          %v1316 = vpack.c.b16 %v1314, %v1313
          %1319 = vmatpush.bf16.msra.mxu0 0
          %1320 = vmatpush.bf16.msra.mxu0 0
          %1321 = vmatpush.bf16.msra.mxu0 0
          %1322 = vmatpush.bf16.msra.mxu0 0
          %1323 = vmatpush.bf16.msra.mxu0 0
          %1324 = vmatpush.bf16.msra.mxu0 0
          %1325 = vmatpush.bf16.msra.mxu0 %v1316
          %1326 = vmatpush.bf16.msra.mxu0 %v1315
          %1327 = vmatmul.bf16.gmra.mxu0 %v1136
          %v1328 = vpop.f32.mrf.mxu0
          %v1329 = vadd.f32 %v1115, %v1328
          %v1330 = vpop.f32.mrf.mxu0
          %v1331 = vadd.f32 %v1116, %v1330
          %1332 = vmatmul.bf16.gmra.mxu0 %v1139
          %v1333 = vpop.f32.mrf.mxu0
          %v1334 = vadd.f32 %v1117, %v1333
          %v1335 = vpop.f32.mrf.mxu0
          %v1336 = vadd.f32 %v1118, %v1335
          %1337 = vdwg.mxu0
          %v1338 = vpack.c.bf16 %v1329, %v1329
          %v1339 = vpack.c.bf16 %v1331, %v1331
          %v1340 = vpack.c.bf16 %v1334, %v1334
          %v1341 = vpack.c.bf16 %v1336, %v1336
          %s1342 = scalar_lea.vmem [#allocation2], 32
          %1343 = vst.msk [vmem:[%s1342] sm:$0xf] %vm1164, %v1338
          %1344 = vst.msk [vmem:[%s1342 + $0x4] sm:$0xf] %vm1164, %v1339
          %1345 = vst.msk [vmem:[%s1342 + $0x8] sm:$0xf] %vm1164, %v1340
          %1346 = vst.msk [vmem:[%s1342 + $0xc] sm:$0xf] %vm1164, %v1341
          %s1347 = scalar_lea.vmem %s14, 32
          %v1348 = vld [vmem:[%s1347] sm:$0xf]
          %v1349 = vld [vmem:[%s1347 + $0x4] sm:$0xf]
          %v1350 = vld [vmem:[%s1347 + $0x8] sm:$0xf]
          %v1351 = vld [vmem:[%s1347 + $0xc] sm:$0xf]
          %v1356 = vunpack.c.l.b16 %v1348
          %v1357 = vunpack.c.l.b16 %v1349
          %v1358 = vunpack.c.l.b16 %v1350
          %v1359 = vunpack.c.l.b16 %v1351
          %v1360 = vpack.c.b16 %v1357, %v1356
          %v1361 = vpack.c.b16 %v1359, %v1358
          %1364 = vmatpush.bf16.msra.mxu0 0
          %1365 = vmatpush.bf16.msra.mxu0 0
          %1366 = vmatpush.bf16.msra.mxu0 0
          %1367 = vmatpush.bf16.msra.mxu0 0
          %1368 = vmatpush.bf16.msra.mxu0 0
          %1369 = vmatpush.bf16.msra.mxu0 0
          %1370 = vmatpush.bf16.msra.mxu0 %v1361
          %1371 = vmatpush.bf16.msra.mxu0 %v1360
          %1372 = vmatmul.bf16.gmra.mxu0 %v1136
          %v1373 = vpop.f32.mrf.mxu0
          %v1374 = vadd.f32 0.0, %v1373
          %v1375 = vpop.f32.mrf.mxu0
          %v1376 = vadd.f32 0.0, %v1375
          %1377 = vmatmul.bf16.gmra.mxu0 %v1139
          %v1378 = vpop.f32.mrf.mxu0
          %v1379 = vadd.f32 0.0, %v1378
          %v1380 = vpop.f32.mrf.mxu0
          %v1381 = vadd.f32 0.0, %v1380
          %1382 = vdwg.mxu0
          %v1383 = vpack.c.bf16 %v1374, %v1374
          %v1384 = vpack.c.bf16 %v1376, %v1376
          %v1385 = vpack.c.bf16 %v1379, %v1379
          %v1386 = vpack.c.bf16 %v1381, %v1381
          %s1387 = scalar_lea.vmem [#allocation3], 32
          %1388 = vst.msk [vmem:[%s1387] sm:$0xf] %vm1164, %v1383
          %1389 = vst.msk [vmem:[%s1387 + $0x4] sm:$0xf] %vm1164, %v1384
          %1390 = vst.msk [vmem:[%s1387 + $0x8] sm:$0xf] %vm1164, %v1385
          %1391 = vst.msk [vmem:[%s1387 + $0xc] sm:$0xf] %vm1164, %v1386
        $region104: #{tpu_custom_call.1} parent=99 // pred_fallthru
          _
        %s1392 = smul.u32 %s44, 16
        %s1393 = sshra.s32 %s1392, 3
        %s1394 = sand.u32 %s1392, 7
        %s1395 = smul.addr %s1393, 4
        %s1396 = scalar_lea.vmem %s711, %s1395
        %v1397 = vld [vmem:[%s1396] sm:$0xf]
        %v1398 = vld [vmem:[%s1396 + $0x4] sm:$0xf]
        %v1399 = vld [vmem:[%s1] sm:$0xf]
        %v1400 = vld [vmem:[%s1 + $0x4] sm:$0xf]
        %v1401 = vld [vmem:[%s1 + $0x8] sm:$0xf]
        %v1402 = vld [vmem:[%s1 + $0xc] sm:$0xf]
        %v1403 = vld [vmem:[%s1 + $0x10] sm:$0xf]
        %v1404 = vld [vmem:[%s1 + $0x14] sm:$0xf]
        %v1407 = vunpack.c.l.b16 %v1397
        %v1408 = vunpack.c.l.b16 %v1398
        %v1409 = vpack.c.b16 %v1408, %v1407
        %v1416 = vunpack.c.l.b16 %v1399
        %v1417 = vunpack.c.l.b16 %v1400
        %v1418 = vunpack.c.l.b16 %v1401
        %v1419 = vunpack.c.l.b16 %v1402
        %v1420 = vunpack.c.l.b16 %v1403
        %v1421 = vunpack.c.l.b16 %v1404
        %v1422 = vpack.c.b16 %v1417, %v1416
        %v1423 = vpack.c.b16 %v1419, %v1418
        %v1424 = vpack.c.b16 %v1421, %v1420
        %vm1428 = vcmask 392192
        %v1430 = vsel %vm1428, %v1409, 0
        %1432 = vmatpush.bf16.msra.mxu0 0
        %1433 = vmatpush.bf16.msra.mxu0 0
        %1434 = vmatpush.bf16.msra.mxu0 0
        %1435 = vmatpush.bf16.msra.mxu0 0
        %1436 = vmatpush.bf16.msra.mxu0 0
        %1437 = vmatpush.bf16.msra.mxu0 %v1424
        %1438 = vmatpush.bf16.msra.mxu0 %v1423
        %1439 = vmatpush.bf16.msra.mxu0 %v1422
        %1440 = vmatmul.bf16.gmra.mxu0 %v1430
        %v1441 = vpop.f32.mrf.mxu0
        %v1442 = vadd.f32 0.0, %v1441
        %v1443 = vpop.f32.mrf.mxu0
        %v1444 = vadd.f32 0.0, %v1443
        %1445 = vdwg.mxu0
        %v1446 = vld [vmem:[%s5] sm:$0x1]
        %v1447 = vld [vmem:[%s6] sm:$0x1]
        %vm1448 = vcmask 195584
        %v1449 = vsel %vm1448, %v1442, 0.0
        %1450 = vadd.xlane.f32.xlu0 %v1449
        %v1451 = vpop.xlane.xlu0 %1450
        %v1452 = vsel %vm1448, %v1444, 0.0
        %1453 = vadd.xlane.f32.xlu0 %v1452
        %v1454 = vpop.xlane.xlu0 %1453
        %v1455 = vrcp.pop 24.0
        %v1456 = vmul.f32 24.0, %v1455
        %v1457 = vsub.f32 1.0, %v1456
        %v1458 = vmul.f32 %v1455, %v1457
        %v1459 = vadd.f32 %v1455, %v1458
        %vm1460 = vweird.f32 %v1455
        %v1461 = vsel %vm1460, %v1455, %v1459
        %v1462 = vmul.f32 %v1451, %v1461
        %v1463 = vmul.f32 %v1454, %v1461
        %v1464 = vsub.f32 %v1442, %v1462
        %v1465 = vsub.f32 %v1444, %v1463
        %v1466 = vmul.f32 %v1464, %v1464
        %v1467 = vmul.f32 %v1465, %v1465
        %v1468 = vsel %vm1448, %v1466, 0.0
        %1469 = vadd.xlane.f32.xlu0 %v1468
        %v1470 = vpop.xlane.xlu0 %1469
        %v1471 = vsel %vm1448, %v1467, 0.0
        %1472 = vadd.xlane.f32.xlu0 %v1471
        %v1473 = vpop.xlane.xlu0 %1472
        %v1474 = vmul.f32 %v1470, %v1461
        %v1475 = vmul.f32 %v1473, %v1461
        %v1476 = vadd.f32 %v1474, 1e-05
        %v1477 = vadd.f32 %v1475, 1e-05
        %v1478 = vrsqrt.pop %v1476
        %v1479 = vmul.f32 %v1478, %v1476
        %v1480 = vmul.f32 %v1479, %v1478
        %v1481 = vmul.f32 0.5, %v1480
        %v1482 = vsub.f32 1.5, %v1481
        %v1483 = vmul.f32 %v1478, %v1482
        %vm1484 = vweird.f32 %v1476
        %vm1485 = vweird.f32 %v1478
        %vm1486 = vmor %vm1484, %vm1485
        %v1487 = vsel %vm1486, %v1478, %v1483
        %v1488 = vrsqrt.pop %v1477
        %v1489 = vmul.f32 %v1488, %v1477
        %v1490 = vmul.f32 %v1489, %v1488
        %v1491 = vmul.f32 0.5, %v1490
        %v1492 = vsub.f32 1.5, %v1491
        %v1493 = vmul.f32 %v1488, %v1492
        %vm1494 = vweird.f32 %v1477
        %vm1495 = vweird.f32 %v1488
        %vm1496 = vmor %vm1494, %vm1495
        %v1497 = vsel %vm1496, %v1488, %v1493
        %v1498 = vmul.f32 %v1464, %v1487
        %v1499 = vmul.f32 %v1465, %v1497
        %v1501 = vperm.slane %v1446, 0
        %v1503 = vmul.f32 %v1498, %v1501
        %v1504 = vmul.f32 %v1499, %v1501
        %v1506 = vperm.slane %v1447, 0
        %v1508 = vadd.f32 %v1503, %v1506
        %v1509 = vadd.f32 %v1504, %v1506
        %v1510 = vpack.c.bf16 %v1509, %v1508
        %v1511 = vld [vmem:[%s2] sm:$0xf]
        %v1512 = vld [vmem:[%s2 + $0x4] sm:$0xf]
        %v1513 = vld [vmem:[%s2 + $0x8] sm:$0xf]
        %v1517 = vunpack.c.l.b16 %v1511
        %v1518 = vunpack.c.l.b16 %v1512
        %v1519 = vunpack.c.l.b16 %v1513
        %v1520 = vpack.c.b16 %v1518, %v1517
        %v1521 = vpack.c.b16 %v1519, %v1519
        %v1524 = vsel %vm1448, %v1510, 0
        %vm1526 = vcmask 1043456
        %v1528 = vsel %vm1526, %v1521, 0
        %1530 = vmatpush.bf16.msra.mxu0 0
        %1531 = vmatpush.bf16.msra.mxu0 0
        %1532 = vmatpush.bf16.msra.mxu0 0
        %1533 = vmatpush.bf16.msra.mxu0 0
        %1534 = vmatpush.bf16.msra.mxu0 0
        %1535 = vmatpush.bf16.msra.mxu0 0
        %1536 = vmatpush.bf16.msra.mxu0 %v1528
        %1537 = vmatpush.bf16.msra.mxu0 %v1520
        %1538 = vmatmul.bf16.gmra.mxu0 %v1524
        %v1539 = vpop.f32.mrf.mxu0
        %v1540 = vadd.f32 0.0, %v1539
        %v1541 = vpop.f32.mrf.mxu0
        %v1542 = vadd.f32 0.0, %v1541
        %1543 = vdwg.mxu0
        %v1544 = vld [vmem:[%s3] sm:$0xf]
        %v1545 = vld [vmem:[%s3 + $0x4] sm:$0xf]
        %v1546 = vld [vmem:[%s3 + $0x8] sm:$0xf]
        %v1550 = vunpack.c.l.b16 %v1544
        %v1551 = vunpack.c.l.b16 %v1545
        %v1552 = vunpack.c.l.b16 %v1546
        %v1553 = vpack.c.b16 %v1551, %v1550
        %v1554 = vpack.c.b16 %v1552, %v1552
        %v1557 = vsel %vm1526, %v1554, 0
        %1559 = vmatpush.bf16.msra.mxu0 0
        %1560 = vmatpush.bf16.msra.mxu0 0
        %1561 = vmatpush.bf16.msra.mxu0 0
        %1562 = vmatpush.bf16.msra.mxu0 0
        %1563 = vmatpush.bf16.msra.mxu0 0
        %1564 = vmatpush.bf16.msra.mxu0 0
        %1565 = vmatpush.bf16.msra.mxu0 %v1557
        %1566 = vmatpush.bf16.msra.mxu0 %v1553
        %1567 = vmatmul.bf16.gmra.mxu0 %v1524
        %v1568 = vpop.f32.mrf.mxu0
        %v1569 = vadd.f32 0.0, %v1568
        %v1570 = vpop.f32.mrf.mxu0
        %v1571 = vadd.f32 0.0, %v1570
        %1572 = vdwg.mxu0
        %v1573 = vld [vmem:[%s4] sm:$0xf]
        %v1574 = vld [vmem:[%s4 + $0x4] sm:$0xf]
        %v1575 = vld [vmem:[%s4 + $0x8] sm:$0xf]
        %v1579 = vunpack.c.l.b16 %v1573
        %v1580 = vunpack.c.l.b16 %v1574
        %v1581 = vunpack.c.l.b16 %v1575
        %v1582 = vpack.c.b16 %v1580, %v1579
        %v1583 = vpack.c.b16 %v1581, %v1581
        %v1586 = vsel %vm1526, %v1583, 0
        %1588 = vmatpush.bf16.msra.mxu0 0
        %1589 = vmatpush.bf16.msra.mxu0 0
        %1590 = vmatpush.bf16.msra.mxu0 0
        %1591 = vmatpush.bf16.msra.mxu0 0
        %1592 = vmatpush.bf16.msra.mxu0 0
        %1593 = vmatpush.bf16.msra.mxu0 0
        %1594 = vmatpush.bf16.msra.mxu0 %v1586
        %1595 = vmatpush.bf16.msra.mxu0 %v1582
        %1596 = vmatmul.bf16.gmra.mxu0 %v1524
        %v1597 = vpop.f32.mrf.mxu0
        %v1598 = vadd.f32 0.0, %v1597
        %v1599 = vpop.f32.mrf.mxu0
        %v1600 = vadd.f32 0.0, %v1599
        %1601 = vdwg.mxu0
        %v1602 = vld [vmem:[%s716] sm:$0xff]
        %v1603 = vld [vmem:[%s716 + $0x8] sm:$0xff]
        %v1604 = vld [vmem:[%s722] sm:$0xff]
        %v1605 = vld [vmem:[%s722 + $0x8] sm:$0xff]
        %v1606 = vmul.f32 %v1569, %v1602
        %v1607 = vmul.f32 %v1571, %v1603
        %v1608 = vmul.f32 %v1598, %v1604
        %v1609 = vmul.f32 %v1600, %v1605
        %v1610 = vsub.f32 %v1606, %v1608
        %v1611 = vsub.f32 %v1607, %v1609
        %v1612 = vmul.f32 %v1569, %v1604
        %v1613 = vmul.f32 %v1571, %v1605
        %v1614 = vmul.f32 %v1598, %v1602
        %v1615 = vmul.f32 %v1600, %v1603
        %v1616 = vadd.f32 %v1612, %v1614
        %v1617 = vadd.f32 %v1613, %v1615
        %v1618 = vlaneseq
        %v1619 = vshrl.u32 %v1618, 7
        %v1620 = vadd.s32 %v1619, 8
        %v1621 = vstv %s1392
        %v1622 = vadd.s32 %v1619, %v1621
        %v1623 = vadd.s32 %v1620, %v1621
        %v1624 = vlaneseq
        %v1625 = vand.u32 %v1624, 127
        %vm1626 = vcmp.ge.s32.totalorder %v1622, %v1625
        %vm1627 = vcmp.ge.s32.totalorder %v1623, %v1625
        %v1628 = vsel %vm1626, 0.0, -1e+30
        %v1629 = vsel %vm1627, 0.0, -1e+30
        %1632 = vrot.lane.b32.xlu0 %v1610, 8
        %v1633 = vpop.permute.xlu0 %1632
        %1634 = vrot.lane.b32.xlu0 %v1611, 8
        %v1635 = vpop.permute.xlu0 %1634
        %1640 = vrot.lane.b32.xlu0 %v1616, 12
        %v1641 = vpop.permute.xlu0 %1640
        %1642 = vrot.lane.b32.xlu0 %v1617, 12
        %v1643 = vpop.permute.xlu0 %1642
        %vm1646 = vcmask 64512
        %v1647 = vsel %vm1646, %v1540, %v1633
        %v1648 = vsel %vm1646, %v1542, %v1635
        %vm1649 = vcmask 97280
        %v1650 = vsel %vm1649, %v1647, %v1641
        %v1651 = vsel %vm1649, %v1648, %v1643
        %v1652 = vpack.c.bf16 %v1651, %v1650
        %v1653 = vld [vmem:[#allocation2] sm:$0xf]
        %v1654 = vld [vmem:[#allocation2 + $0x4] sm:$0xf]
        %v1655 = vld [vmem:[#allocation2 + $0x8] sm:$0xf]
        %v1656 = vld [vmem:[#allocation2 + $0xc] sm:$0xf]
        %v1661 = vunpack.c.l.b16 %v1653
        %v1662 = vunpack.c.l.b16 %v1654
        %v1663 = vunpack.c.l.b16 %v1655
        %v1664 = vunpack.c.l.b16 %v1656
        %v1665 = vpack.c.b16 %v1662, %v1661
        %v1666 = vpack.c.b16 %v1664, %v1663
        %vm1667 = vcmask 130048
        %v1669 = vsel %vm1667, %v1652, 0
        %v1672 = vsel %vm1667, %v1665, 0
        %v1675 = vsel %vm1667, %v1666, 0
        %1677 = vmatpush.bf16.xpose.msra.mxu0 0
        %1678 = vmatpush.bf16.xpose.msra.mxu0 0
        %1679 = vmatpush.bf16.xpose.msra.mxu0 0
        %1680 = vmatpush.bf16.xpose.msra.mxu0 0
        %1681 = vmatpush.bf16.xpose.msra.mxu0 0
        %1682 = vmatpush.bf16.xpose.msra.mxu0 0
        %1683 = vmatpush.bf16.xpose.msra.mxu0 %v1675
        %1684 = vmatpush.bf16.xpose.msra.mxu0 %v1672
        %1685 = vmatmul.bf16.gmra.mxu0 %v1669
        %v1686 = vpop.f32.mrf.mxu0
        %v1687 = vadd.f32 %v1628, %v1686
        %v1688 = vpop.f32.mrf.mxu0
        %v1689 = vadd.f32 %v1629, %v1688
        %1690 = vdwg.mxu0
        %vm1691 = vcmask 261120
        %v1692 = vsel %vm1691, %v1687, -inf
        %1693 = vmax.xlane.f32.xlu0 %v1692
        %v1694 = vpop.xlane.xlu0 %1693
        %v1695 = vsel %vm1691, %v1689, -inf
        %1696 = vmax.xlane.f32.xlu0 %v1695
        %v1697 = vpop.xlane.xlu0 %1696
        %v1698 = vsub.f32 %v1687, %v1694
        %v1699 = vsub.f32 %v1689, %v1697
        %v1700 = vmul.f32 %v1698, 1.442695
        %v1701 = vpow.pop %v1700
        %v1702 = vmul.f32 %v1699, 1.442695
        %v1703 = vpow.pop %v1702
        %v1704 = vsel %vm1691, %v1701, 0.0
        %1705 = vadd.xlane.f32.xlu0 %v1704
        %v1706 = vpop.xlane.xlu0 %1705
        %v1707 = vsel %vm1691, %v1703, 0.0
        %1708 = vadd.xlane.f32.xlu0 %v1707
        %v1709 = vpop.xlane.xlu0 %1708
        %v1710 = vpack.c.bf16 %v1703, %v1701
        %v1711 = vld [vmem:[#allocation3] sm:$0xf]
        %v1712 = vld [vmem:[#allocation3 + $0x4] sm:$0xf]
        %v1713 = vld [vmem:[#allocation3 + $0x8] sm:$0xf]
        %v1714 = vld [vmem:[#allocation3 + $0xc] sm:$0xf]
        %v1719 = vunpack.c.l.b16 %v1711
        %v1720 = vunpack.c.l.b16 %v1712
        %v1721 = vunpack.c.l.b16 %v1713
        %v1722 = vunpack.c.l.b16 %v1714
        %v1723 = vpack.c.b16 %v1720, %v1719
        %v1724 = vpack.c.b16 %v1722, %v1721
        %v1728 = vsel %vm1691, %v1710, 0
        %1730 = vmatpush.bf16.msra.mxu0 0
        %1731 = vmatpush.bf16.msra.mxu0 0
        %1732 = vmatpush.bf16.msra.mxu0 0
        %1733 = vmatpush.bf16.msra.mxu0 0
        %1734 = vmatpush.bf16.msra.mxu0 0
        %1735 = vmatpush.bf16.msra.mxu0 0
        %1736 = vmatpush.bf16.msra.mxu0 %v1724
        %1737 = vmatpush.bf16.msra.mxu0 %v1723
        %1738 = vmatmul.bf16.gmra.mxu0 %v1728
        %v1739 = vpop.f32.mrf.mxu0
        %v1740 = vadd.f32 0.0, %v1739
        %v1741 = vpop.f32.mrf.mxu0
        %v1742 = vadd.f32 0.0, %v1741
        %1743 = vdwg.mxu0
        %v1744 = vrcp.pop %v1706
        %v1745 = vrcp.pop %v1709
        %v1746 = vmul.f32 %v1740, %v1744
        %v1747 = vmul.f32 %v1742, %v1745
        %v1748 = vpack.c.bf16 %v1746, %v1746
        %v1749 = vpack.c.bf16 %v1747, %v1747
        %vm1750 = vcmask 125952
        %1751 = vst.msk [vmem:[#allocation4] sm:$0xf] %vm1750, %v1748
        %1752 = vst.msk [vmem:[#allocation4 + $0x4] sm:$0xf] %vm1750, %v1749
        %1755 = vrot.lane.b32.xlu0 %v1540, 120
        %v1756 = vpop.permute.xlu0 %1755
        %1757 = vrot.lane.b32.xlu0 %v1542, 120
        %v1758 = vpop.permute.xlu0 %1757
        %1761 = vrot.lane.b32.xlu0 %v1610, 4
        %v1762 = vpop.permute.xlu0 %1761
        %1763 = vrot.lane.b32.xlu0 %v1611, 4
        %v1764 = vpop.permute.xlu0 %1763
        %1767 = vrot.lane.b32.xlu0 %v1616, 8
        %v1768 = vpop.permute.xlu0 %1767
        %1769 = vrot.lane.b32.xlu0 %v1617, 8
        %v1770 = vpop.permute.xlu0 %1769
        %v1773 = vsel %vm1646, %v1756, %v1762
        %v1774 = vsel %vm1646, %v1758, %v1764
        %v1775 = vsel %vm1649, %v1773, %v1768
        %v1776 = vsel %vm1649, %v1774, %v1770
        %v1777 = vpack.c.bf16 %v1776, %v1775
        %s1778 = scalar_lea.vmem [#allocation2], 16
        %v1779 = vld [vmem:[%s1778] sm:$0xf]
        %v1780 = vld [vmem:[%s1778 + $0x4] sm:$0xf]
        %v1781 = vld [vmem:[%s1778 + $0x8] sm:$0xf]
        %v1782 = vld [vmem:[%s1778 + $0xc] sm:$0xf]
        %v1787 = vunpack.c.l.b16 %v1779
        %v1788 = vunpack.c.l.b16 %v1780
        %v1789 = vunpack.c.l.b16 %v1781
        %v1790 = vunpack.c.l.b16 %v1782
        %v1791 = vpack.c.b16 %v1788, %v1787
        %v1792 = vpack.c.b16 %v1790, %v1789
        %v1794 = vsel %vm1667, %v1777, 0
        %v1797 = vsel %vm1667, %v1791, 0
        %v1800 = vsel %vm1667, %v1792, 0
        %1802 = vmatpush.bf16.xpose.msra.mxu0 0
        %1803 = vmatpush.bf16.xpose.msra.mxu0 0
        %1804 = vmatpush.bf16.xpose.msra.mxu0 0
        %1805 = vmatpush.bf16.xpose.msra.mxu0 0
        %1806 = vmatpush.bf16.xpose.msra.mxu0 0
        %1807 = vmatpush.bf16.xpose.msra.mxu0 0
        %1808 = vmatpush.bf16.xpose.msra.mxu0 %v1800
        %1809 = vmatpush.bf16.xpose.msra.mxu0 %v1797
        %1810 = vmatmul.bf16.gmra.mxu0 %v1794
        %v1811 = vpop.f32.mrf.mxu0
        %v1812 = vadd.f32 %v1628, %v1811
        %v1813 = vpop.f32.mrf.mxu0
        %v1814 = vadd.f32 %v1629, %v1813
        %1815 = vdwg.mxu0
        %v1816 = vsel %vm1691, %v1812, -inf
        %1817 = vmax.xlane.f32.xlu0 %v1816
        %v1818 = vpop.xlane.xlu0 %1817
        %v1819 = vsel %vm1691, %v1814, -inf
        %1820 = vmax.xlane.f32.xlu0 %v1819
        %v1821 = vpop.xlane.xlu0 %1820
        %v1822 = vsub.f32 %v1812, %v1818
        %v1823 = vsub.f32 %v1814, %v1821
        %v1824 = vmul.f32 %v1822, 1.442695
        %v1825 = vpow.pop %v1824
        %v1826 = vmul.f32 %v1823, 1.442695
        %v1827 = vpow.pop %v1826
        %v1828 = vsel %vm1691, %v1825, 0.0
        %1829 = vadd.xlane.f32.xlu0 %v1828
        %v1830 = vpop.xlane.xlu0 %1829
        %v1831 = vsel %vm1691, %v1827, 0.0
        %1832 = vadd.xlane.f32.xlu0 %v1831
        %v1833 = vpop.xlane.xlu0 %1832
        %v1834 = vpack.c.bf16 %v1827, %v1825
        %s1835 = scalar_lea.vmem [#allocation3], 16
        %v1836 = vld [vmem:[%s1835] sm:$0xf]
        %v1837 = vld [vmem:[%s1835 + $0x4] sm:$0xf]
        %v1838 = vld [vmem:[%s1835 + $0x8] sm:$0xf]
        %v1839 = vld [vmem:[%s1835 + $0xc] sm:$0xf]
        %v1844 = vunpack.c.l.b16 %v1836
        %v1845 = vunpack.c.l.b16 %v1837
        %v1846 = vunpack.c.l.b16 %v1838
        %v1847 = vunpack.c.l.b16 %v1839
        %v1848 = vpack.c.b16 %v1845, %v1844
        %v1849 = vpack.c.b16 %v1847, %v1846
        %v1853 = vsel %vm1691, %v1834, 0
        %1855 = vmatpush.bf16.msra.mxu0 0
        %1856 = vmatpush.bf16.msra.mxu0 0
        %1857 = vmatpush.bf16.msra.mxu0 0
        %1858 = vmatpush.bf16.msra.mxu0 0
        %1859 = vmatpush.bf16.msra.mxu0 0
        %1860 = vmatpush.bf16.msra.mxu0 0
        %1861 = vmatpush.bf16.msra.mxu0 %v1849
        %1862 = vmatpush.bf16.msra.mxu0 %v1848
        %1863 = vmatmul.bf16.gmra.mxu0 %v1853
        %v1864 = vpop.f32.mrf.mxu0
        %v1865 = vadd.f32 0.0, %v1864
        %v1866 = vpop.f32.mrf.mxu0
        %v1867 = vadd.f32 0.0, %v1866
        %1868 = vdwg.mxu0
        %v1869 = vrcp.pop %v1830
        %v1870 = vrcp.pop %v1833
        %v1871 = vmul.f32 %v1865, %v1869
        %v1872 = vmul.f32 %v1867, %v1870
        %v1873 = vpack.c.bf16 %v1871, %v1871
        %v1874 = vpack.c.bf16 %v1872, %v1872
        %1877 = vrot.lane.b32.xlu0 %v1873, 16
        %v1878 = vpop.permute.xlu0 %1877
        %1879 = vrot.lane.b32.xlu0 %v1874, 16
        %v1880 = vpop.permute.xlu0 %1879
        %vm1883 = vcmask 257152
        %1884 = vst.msk [vmem:[#allocation4] sm:$0xf] %vm1883, %v1878
        %1885 = vst.msk [vmem:[#allocation4 + $0x4] sm:$0xf] %vm1883, %v1880
        %1886 = vrot.lane.b32.xlu0 %v1540, 112
        %v1887 = vpop.permute.xlu0 %1886
        %1888 = vrot.lane.b32.xlu0 %v1542, 112
        %v1889 = vpop.permute.xlu0 %1888
        %1892 = vrot.lane.b32.xlu0 %v1616, 4
        %v1893 = vpop.permute.xlu0 %1892
        %1894 = vrot.lane.b32.xlu0 %v1617, 4
        %v1895 = vpop.permute.xlu0 %1894
        %v1898 = vsel %vm1646, %v1887, %v1610
        %v1899 = vsel %vm1646, %v1889, %v1611
        %v1900 = vsel %vm1649, %v1898, %v1893
        %v1901 = vsel %vm1649, %v1899, %v1895
        %v1902 = vpack.c.bf16 %v1901, %v1900
        %s1903 = scalar_lea.vmem [#allocation2], 32
        %v1904 = vld [vmem:[%s1903] sm:$0xf]
        %v1905 = vld [vmem:[%s1903 + $0x4] sm:$0xf]
        %v1906 = vld [vmem:[%s1903 + $0x8] sm:$0xf]
        %v1907 = vld [vmem:[%s1903 + $0xc] sm:$0xf]
        %v1912 = vunpack.c.l.b16 %v1904
        %v1913 = vunpack.c.l.b16 %v1905
        %v1914 = vunpack.c.l.b16 %v1906
        %v1915 = vunpack.c.l.b16 %v1907
        %v1916 = vpack.c.b16 %v1913, %v1912
        %v1917 = vpack.c.b16 %v1915, %v1914
        %v1919 = vsel %vm1667, %v1902, 0
        %v1922 = vsel %vm1667, %v1916, 0
        %v1925 = vsel %vm1667, %v1917, 0
        %1927 = vmatpush.bf16.xpose.msra.mxu0 0
        %1928 = vmatpush.bf16.xpose.msra.mxu0 0
        %1929 = vmatpush.bf16.xpose.msra.mxu0 0
        %1930 = vmatpush.bf16.xpose.msra.mxu0 0
        %1931 = vmatpush.bf16.xpose.msra.mxu0 0
        %1932 = vmatpush.bf16.xpose.msra.mxu0 0
        %1933 = vmatpush.bf16.xpose.msra.mxu0 %v1925
        %1934 = vmatpush.bf16.xpose.msra.mxu0 %v1922
        %1935 = vmatmul.bf16.gmra.mxu0 %v1919
        %v1936 = vpop.f32.mrf.mxu0
        %v1937 = vadd.f32 %v1628, %v1936
        %v1938 = vpop.f32.mrf.mxu0
        %v1939 = vadd.f32 %v1629, %v1938
        %1940 = vdwg.mxu0
        %v1941 = vsel %vm1691, %v1937, -inf
        %1942 = vmax.xlane.f32.xlu0 %v1941
        %v1943 = vpop.xlane.xlu0 %1942
        %v1944 = vsel %vm1691, %v1939, -inf
        %1945 = vmax.xlane.f32.xlu0 %v1944
        %v1946 = vpop.xlane.xlu0 %1945
        %v1947 = vsub.f32 %v1937, %v1943
        %v1948 = vsub.f32 %v1939, %v1946
        %v1949 = vmul.f32 %v1947, 1.442695
        %v1950 = vpow.pop %v1949
        %v1951 = vmul.f32 %v1948, 1.442695
        %v1952 = vpow.pop %v1951
        %v1953 = vsel %vm1691, %v1950, 0.0
        %1954 = vadd.xlane.f32.xlu0 %v1953
        %v1955 = vpop.xlane.xlu0 %1954
        %v1956 = vsel %vm1691, %v1952, 0.0
        %1957 = vadd.xlane.f32.xlu0 %v1956
        %v1958 = vpop.xlane.xlu0 %1957
        %v1959 = vpack.c.bf16 %v1952, %v1950
        %s1960 = scalar_lea.vmem [#allocation3], 32
        %v1961 = vld [vmem:[%s1960] sm:$0xf]
        %v1962 = vld [vmem:[%s1960 + $0x4] sm:$0xf]
        %v1963 = vld [vmem:[%s1960 + $0x8] sm:$0xf]
        %v1964 = vld [vmem:[%s1960 + $0xc] sm:$0xf]
        %v1969 = vunpack.c.l.b16 %v1961
        %v1970 = vunpack.c.l.b16 %v1962
        %v1971 = vunpack.c.l.b16 %v1963
        %v1972 = vunpack.c.l.b16 %v1964
        %v1973 = vpack.c.b16 %v1970, %v1969
        %v1974 = vpack.c.b16 %v1972, %v1971
        %v1978 = vsel %vm1691, %v1959, 0
        %1980 = vmatpush.bf16.msra.mxu0 0
        %1981 = vmatpush.bf16.msra.mxu0 0
        %1982 = vmatpush.bf16.msra.mxu0 0
        %1983 = vmatpush.bf16.msra.mxu0 0
        %1984 = vmatpush.bf16.msra.mxu0 0
        %1985 = vmatpush.bf16.msra.mxu0 0
        %1986 = vmatpush.bf16.msra.mxu0 %v1974
        %1987 = vmatpush.bf16.msra.mxu0 %v1973
        %1988 = vmatmul.bf16.gmra.mxu0 %v1978
        %v1989 = vpop.f32.mrf.mxu0
        %v1990 = vadd.f32 0.0, %v1989
        %v1991 = vpop.f32.mrf.mxu0
        %v1992 = vadd.f32 0.0, %v1991
        %1993 = vdwg.mxu0
        %v1994 = vrcp.pop %v1955
        %v1995 = vrcp.pop %v1958
        %v1996 = vmul.f32 %v1990, %v1994
        %v1997 = vmul.f32 %v1992, %v1995
        %v1998 = vpack.c.bf16 %v1996, %v1996
        %v1999 = vpack.c.bf16 %v1997, %v1997
        %2002 = vrot.lane.b32.xlu0 %v1998, 32
        %v2003 = vpop.permute.xlu0 %2002
        %2004 = vrot.lane.b32.xlu0 %v1999, 32
        %v2005 = vpop.permute.xlu0 %2004
        %vm2008 = vcmask 388352
        %2009 = vst.msk [vmem:[#allocation4] sm:$0xf] %vm2008, %v2003
        %2010 = vst.msk [vmem:[#allocation4 + $0x4] sm:$0xf] %vm2008, %v2005
        %v2011 = vld [vmem:[#allocation4] sm:$0xf]
        %v2012 = vld [vmem:[#allocation4 + $0x4] sm:$0xf]
        %v2013 = vld [vmem:[%s15] sm:$0xf]
        %v2014 = vld [vmem:[%s15 + $0x4] sm:$0xf]
        %v2015 = vld [vmem:[%s15 + $0x8] sm:$0xf]
        %v2016 = vld [vmem:[%s15 + $0xc] sm:$0xf]
        %v2017 = vld [vmem:[%s15 + $0x10] sm:$0xf]
        %v2018 = vld [vmem:[%s15 + $0x14] sm:$0xf]
        %v2021 = vunpack.c.l.b16 %v2011
        %v2022 = vunpack.c.l.b16 %v2012
        %v2023 = vpack.c.b16 %v2022, %v2021
        %v2030 = vunpack.c.l.b16 %v2013
        %v2031 = vunpack.c.l.b16 %v2014
        %v2032 = vunpack.c.l.b16 %v2015
        %v2033 = vunpack.c.l.b16 %v2016
        %v2034 = vunpack.c.l.b16 %v2017
        %v2035 = vunpack.c.l.b16 %v2018
        %v2036 = vpack.c.b16 %v2031, %v2030
        %v2037 = vpack.c.b16 %v2033, %v2032
        %v2038 = vpack.c.b16 %v2035, %v2034
        %v2043 = vsel %vm1428, %v2023, 0
        %2045 = vmatpush.bf16.msra.mxu0 0
        %2046 = vmatpush.bf16.msra.mxu0 0
        %2047 = vmatpush.bf16.msra.mxu0 0
        %2048 = vmatpush.bf16.msra.mxu0 0
        %2049 = vmatpush.bf16.msra.mxu0 0
        %2050 = vmatpush.bf16.msra.mxu0 %v2038
        %2051 = vmatpush.bf16.msra.mxu0 %v2037
        %2052 = vmatpush.bf16.msra.mxu0 %v2036
        %2053 = vmatmul.bf16.gmra.mxu0 %v2043
        %v2054 = vpop.f32.mrf.mxu0
        %v2055 = vadd.f32 0.0, %v2054
        %v2056 = vpop.f32.mrf.mxu0
        %v2057 = vadd.f32 0.0, %v2056
        %2058 = vdwg.mxu0
        %2059 = vst.msk [vmem:[%s699] sm:$0xff] %vm1428, %v2055
        %2060 = vst.msk [vmem:[%s699 + $0x8] sm:$0xff] %vm1428, %v2057
        %s2061 = sand.u32 %s496, 1
        %s2062 = scalar_lea.sflag [#allocation6], %s2061
        %s2063 = sand.u32 %s496, 1
        %s2064 = smul.addr %s2063, 16
        %s2065 = scalar_lea.vmem [#allocation5], %s2064
        %s2066 = sand.u32 %s522, 1
        %s2067 = scalar_lea.sflag [#allocation8], %s2066
        %s2068 = sand.u32 %s522, 1
        %s2069 = smul.addr %s2068, 16
        %s2070 = scalar_lea.vmem [#allocation7], %s2069
        // Predicated region
        $region105: #{tpu_custom_call.1} parent=99 // pred_check
          %p2071 = pneg %p506
        $region106: #{tpu_custom_call.1} parent=99 // pred_check_branch
          %2073 = sbr.rel (%p2071) target = $region108
        $region107: #{tpu_custom_call.1} parent=99 // pred_region
          %s2074 = smul.u32 2, %s44
          %2076 = vsyncadd %s2062, 0
          %s2077 = smul.addr %s43, 4
          %s2078 = sadd.s32 %s2074, %s2077
          %s2079 = smul.addr %s2078, 8
          %s2080 = scalar_lea.hbm %s20, %s2079
          %s2081 = sshll.u32 %s2065, 4
          %s2082 = int_to_ptr.vmem [resolvable:$true] %s2081
          %s2083 = sshll.u32 %s2080, 4
          %s2084 = int_to_ptr.hbm [resolvable:$true] %s2083
          %2089 = dma.vmem_to_hbm [thread:$0]  %s2082, 256, %s2084, %s2062, 128, 128, 8
        $region108: #{tpu_custom_call.1} parent=99 // pred_fallthru
          _
        // Predicated region
        $region109: #{tpu_custom_call.1} parent=99 // pred_check
          %p2090 = pneg %p532
        $region110: #{tpu_custom_call.1} parent=99 // pred_check_branch
          %2092 = sbr.rel (%p2090) target = $region112
        $region111: #{tpu_custom_call.1} parent=99 // pred_region
          %2094 = vsyncadd %s2067, 0
          %s2095 = smul.addr %s43, 4
          %s2096 = smul.addr %s2095, 4
          %s2097 = scalar_lea.hbm %s21, %s2096
          %s2098 = sshll.u32 %s2070, 4
          %s2099 = int_to_ptr.vmem [resolvable:$true] %s2098
          %s2100 = sshll.u32 %s2097, 4
          %s2101 = int_to_ptr.hbm [resolvable:$true] %s2100
          %2106 = dma.vmem_to_hbm [thread:$0]  %s2099, 256, %s2101, %s2067, 64, 64, 4
        $region112: #{tpu_custom_call.1} parent=99 // pred_fallthru
          _
      $region100: #{tpu_custom_call.1} parent=5 // pred_fallthru
        _
      %p2107 = scmp.le.s32.totalorder 2, %s34
      // Predicated region
      $region113: #{tpu_custom_call.1} parent=5 // pred_check
        %p2108 = pneg %p2107
      $region114: #{tpu_custom_call.1} parent=5 // pred_check_branch
        %2110 = sbr.rel (%p2108) target = $region116
      $region115: #{tpu_custom_call.1} parent=5 // pred_region
        %s2111 = ssub.s32 %s34, 2
        // Predicated region
        $region117: #{tpu_custom_call.1} parent=115 // pred_check
          %p2112 = pneg %p512
        $region118: #{tpu_custom_call.1} parent=115 // pred_check_branch
          %2114 = sbr.rel (%p2112) target = $region120
        $region119: #{tpu_custom_call.1} parent=115 // pred_region
          %s2115 = sand.u32 %s497, 1
          %s2116 = scalar_lea.sflag [#allocation6], %s2115
          %s2117 = sand.u32 %s497, 1
          %s2118 = smul.addr %s2117, 16
          %s2119 = scalar_lea.vmem [#allocation5], %s2118
          %2121 = dma.done %s2116, 256
        $region120: #{tpu_custom_call.1} parent=115 // pred_fallthru
          _
        // Predicated region
        $region121: #{tpu_custom_call.1} parent=115 // pred_check
          %p2122 = pneg %p538
        $region122: #{tpu_custom_call.1} parent=115 // pred_check_branch
          %2124 = sbr.rel (%p2122) target = $region124
        $region123: #{tpu_custom_call.1} parent=115 // pred_region
          %s2125 = sand.u32 %s523, 1
          %s2126 = scalar_lea.sflag [#allocation8], %s2125
          %s2127 = sand.u32 %s523, 1
          %s2128 = smul.addr %s2127, 16
          %s2129 = scalar_lea.vmem [#allocation7], %s2128
          %2131 = dma.done %s2126, 256
        $region124: #{tpu_custom_call.1} parent=115 // pred_fallthru
          _
      $region116: #{tpu_custom_call.1} parent=5 // pred_fallthru
        _
    $region6: #{tpu_custom_call.1} parent=1 // loop_footer
      %s38 = sadd.s32 1, %s34
    $region7: #{tpu_custom_call.1} parent=1 // loop_footer_branch
      %33 = sbr.rel target = $region3
    $region8: #{tpu_custom_call.1} parent=1 // loop_exit
      _
    %2132 = vsyncpa [#allocation6], 1
    %s2133 = scalar_lea.sflag [#allocation6], 1
    %2134 = vsyncpa %s2133, 1
    %2135 = vsyncpa [#allocation8], 1
    %s2136 = scalar_lea.sflag [#allocation8], 1
    %2137 = vsyncpa %s2136, 1

// kernel: tpu_custom_call.1
$region0: #{tpu_custom_call.1}
  #allocation0 [shape = 'u32[]', space=smem, size = 0x4, offset = 0x4, fixed_abs, tag = 'smem constant byte address 0x4 - core index']
  #allocation1 [shape = 'u32[72,128]{1,0:T(1,128)}', space=vmem, size = 0x9000, scoped, tag = 'internal scratch']
  #allocation2 [shape = 'bf16[3,32,16]{2,1,0:T(8,128)(2,1)}', space=vmem, size = 0x6000, scoped, tag = 'scratch operand']
  #allocation3 [shape = 'bf16[3,32,16]{2,1,0:T(8,128)(2,1)}', space=vmem, size = 0x6000, scoped, tag = 'scratch operand']
  #allocation4 [shape = 'bf16[16,48]{1,0:T(8,128)(2,1)}', space=vmem, size = 0x1000, scoped, tag = 'scratch operand']
  %s0 = inlined_call_operand.vmem [shape: bf16[2,32,48], index: 0, kind: input, shape index: {}]
  %s1 = inlined_call_operand.vmem [shape: bf16[48,24], index: 1, kind: input, shape index: {}]
  %s2 = inlined_call_operand.vmem [shape: bf16[24,24], index: 2, kind: input, shape index: {}]
  %s3 = inlined_call_operand.vmem [shape: bf16[24,12], index: 3, kind: input, shape index: {}]
  %s4 = inlined_call_operand.vmem [shape: bf16[24,12], index: 4, kind: input, shape index: {}]
  %s5 = inlined_call_operand.vmem [shape: f32[1,24], index: 5, kind: input, shape index: {}]
  %s6 = inlined_call_operand.vmem [shape: f32[1,24], index: 6, kind: input, shape index: {}]
  %s7 = inlined_call_operand.vmem [shape: bf16[48,128], index: 7, kind: input, shape index: {}]
  %s8 = inlined_call_operand.vmem [shape: bf16[48,32], index: 8, kind: input, shape index: {}]
  %s9 = inlined_call_operand.vmem [shape: bf16[48,4], index: 9, kind: input, shape index: {}]
  %s10 = inlined_call_operand.vmem [shape: bf16[48,4], index: 10, kind: input, shape index: {}]
  %s11 = inlined_call_operand.vmem [shape: f32[1,32], index: 11, kind: input, shape index: {}]
  %s12 = inlined_call_operand.vmem [shape: f32[1,32], index: 12, kind: input, shape index: {}]
  %s13 = inlined_call_operand.vmem [shape: bf16[3,32,16], index: 13, kind: input, shape index: {}]
  %s14 = inlined_call_operand.vmem [shape: bf16[3,32,16], index: 14, kind: input, shape index: {}]
  %s15 = inlined_call_operand.vmem [shape: bf16[48,48], index: 15, kind: input, shape index: {}]
  %s16 = inlined_call_operand.vmem [shape: f32[32,12], index: 16, kind: input, shape index: {}]
  %s17 = inlined_call_operand.vmem [shape: f32[32,12], index: 17, kind: input, shape index: {}]
  %s18 = inlined_call_operand.vmem [shape: f32[32,4], index: 18, kind: input, shape index: {}]
  %s19 = inlined_call_operand.vmem [shape: f32[32,4], index: 19, kind: input, shape index: {}]
  %s20 = inlined_call_operand.hbm [shape: f32[2,32,48], index: 20, kind: output, shape index: {0}]
  %s21 = inlined_call_operand.hbm [shape: bf16[2,32,128], index: 21, kind: output, shape index: {1}]
  %22 = xla_tuple %s20, %s21
  %s23 = sld [smem:[#allocation0]]
  $region125: #{tpu_custom_call.1} parent=0
    _
  %s25 = ssub.s32 1, %s23
  %s26 = scalar_select 0, %s25, %s23
  $region1: #{tpu_custom_call.1} parent=0
    #allocation5 [shape = 'u8[16384]{0}', space=vmem, size = 0x4000, scoped, tag = 'output window, operand 0']
    #allocation6 [shape = 's32[2]{0}', space=sflag, size = 0x8, scoped, tag = 'scoped memory for tpu_custom_call.1']
    #allocation7 [shape = 'u8[16384]{0}', space=vmem, size = 0x4000, scoped, tag = 'output window, operand 1']
    #allocation8 [shape = 's32[2]{0}', space=sflag, size = 0x8, scoped, tag = 'scoped memory for tpu_custom_call.1']
    %27 = vsyncpa [#allocation6], 0
    %s28 = scalar_lea.sflag [#allocation6], 1
    %29 = vsyncpa %s28, 0
    %30 = vsyncpa [#allocation8], 0
    %s31 = scalar_lea.sflag [#allocation8], 1
    %32 = vsyncpa %s31, 0
    loop: start=0, step=1, limit=6
    $region2: #{tpu_custom_call.1} parent=1 // loop_pre_header
      _
    $region3: #{tpu_custom_call.1} parent=1 // loop_header
      %s34 = sphi 0, %s38
      %p35 = scmp.ge.s32.totalorder %s34, 6
      %s41 = sphi 0, %s53
      %s42 = sphi 0, %s49
      %s43 = sphi 0, %s41
      %s44 = sphi 0, %s42
      %s45 = sphi 0, %s43
      %s46 = sphi 0, %s44
      %s56 = sphi 0, %s58
      %s59 = sphi 0, %s56
      %s60 = sphi 0, %s59
      %s76 = sphi 0, %s60
      %s80 = sphi 0, %s80
      %s82 = sphi 0, %s80
      %s83 = sphi 0, %s82
      %s97 = sphi 0, %s83
      %s101 = sphi 0, %s101
      %s103 = sphi 0, %s101
      %s104 = sphi 0, %s103
      %s118 = sphi 0, %s104
      %s122 = sphi 0, %s122
      %s124 = sphi 0, %s122
      %s125 = sphi 0, %s124
      %s139 = sphi 0, %s125
      %s143 = sphi 0, %s143
      %s145 = sphi 0, %s143
      %s146 = sphi 0, %s145
      %s160 = sphi 0, %s146
      %s164 = sphi 0, %s164
      %s166 = sphi 0, %s164
      %s167 = sphi 0, %s166
      %s181 = sphi 0, %s167
      %s185 = sphi 0, %s185
      %s187 = sphi 0, %s185
      %s188 = sphi 0, %s187
      %s202 = sphi 0, %s188
      %s206 = sphi 0, %s206
      %s208 = sphi 0, %s206
      %s209 = sphi 0, %s208
      %s223 = sphi 0, %s209
      %s227 = sphi 0, %s227
      %s229 = sphi 0, %s227
      %s230 = sphi 0, %s229
      %s244 = sphi 0, %s230
      %s248 = sphi 0, %s248
      %s250 = sphi 0, %s248
      %s251 = sphi 0, %s250
      %s265 = sphi 0, %s251
      %s269 = sphi 0, %s269
      %s271 = sphi 0, %s269
      %s272 = sphi 0, %s271
      %s286 = sphi 0, %s272
      %s290 = sphi 0, %s290
      %s292 = sphi 0, %s290
      %s293 = sphi 0, %s292
      %s307 = sphi 0, %s293
      %s311 = sphi 0, %s311
      %s313 = sphi 0, %s311
      %s314 = sphi 0, %s313
      %s328 = sphi 0, %s314
      %s332 = sphi 0, %s332
      %s334 = sphi 0, %s332
      %s335 = sphi 0, %s334
      %s349 = sphi 0, %s335
      %s353 = sphi 0, %s353
      %s355 = sphi 0, %s353
      %s356 = sphi 0, %s355
      %s370 = sphi 0, %s356
      %s374 = sphi 0, %s374
      %s376 = sphi 0, %s374
      %s377 = sphi 0, %s376
      %s391 = sphi 0, %s377
      %s397 = sphi 0, %s399
      %s400 = sphi 0, %s397
      %s401 = sphi 0, %s400
      %s417 = sphi 0, %s401
      %s423 = sphi 0, %s425
      %s426 = sphi 0, %s423
      %s427 = sphi 0, %s426
      %s443 = sphi 0, %s427
      %s447 = sphi 0, %s447
      %s449 = sphi 0, %s447
      %s450 = sphi 0, %s449
      %s464 = sphi 0, %s450
      %s468 = sphi 0, %s468
      %s470 = sphi 0, %s468
      %s471 = sphi 0, %s470
      %s485 = sphi 0, %s471
      %s493 = sphi 0, %s495
      %s496 = sphi 0, %s493
      %s497 = sphi 0, %s496
      %s513 = sphi 0, %s497
      %s519 = sphi 0, %s521
      %s522 = sphi 0, %s519
      %s523 = sphi 0, %s522
      %s539 = sphi 0, %s523
    $region4: #{tpu_custom_call.1} parent=1 // loop_header_branch
      %37 = sbr.rel (%p35) target = $region8
    $region5: #{tpu_custom_call.1} parent=1 // loop_body
      %s39 = ssub.s32 %s34, 1
      %s40 = ssub.s32 %s34, 2
      %s47 = sadd.s32 1, %s42
      %p48 = scmp.ge.s32.totalorder %s47, 2
      %s49 = scalar_select %p48, 0, %s47
      %s50 = sadd.s32 1, %s41
      %s51 = scalar_select %p48, %s50, %s41
      %p52 = scmp.ge.s32.totalorder %s51, 2
      %s53 = scalar_select %p52, 0, %s51
      %s54 = ssub.s32 %s41, %s53
      %p55 = scmp.eq.s32.totalorder %s54, 0
      %s57 = sadd.s32 %s56, 1
      %s58 = scalar_select %p55, %s56, %s57
      %p61 = pneg %p55
      %p62 = scmp.eq.s32.totalorder %s34, 3
      %p63 = por %p61, %p62
      %p64 = scmp.ne.s32.totalorder %s56, %s59
      %p65 = scmp.eq.s32.totalorder %s34, 0
      %p66 = por %p64, %p65
      %p67 = scmp.ne.s32.totalorder %s56, %s59
      %p68 = scmp.eq.s32.totalorder %s39, 3
      %p69 = por %p67, %p68
      %p70 = scmp.ne.s32.totalorder %s59, %s60
      %p71 = scmp.eq.s32.totalorder %s39, 0
      %p72 = por %p70, %p71
      %p73 = scmp.ne.s32.totalorder %s59, %s60
      %p74 = scmp.eq.s32.totalorder %s40, 3
      %p75 = por %p73, %p74
      %p77 = scmp.ne.s32.totalorder %s60, %s76
      %p78 = scmp.eq.s32.totalorder %s40, 0
      %p79 = por %p77, %p78
      %s81 = sadd.s32 %s80, 1
      %p84 = scmp.eq.s32.totalorder %s34, 3
      %p85 = scmp.ne.s32.totalorder %s80, %s82
      %p86 = scmp.eq.s32.totalorder %s34, 0
      %p87 = por %p85, %p86
      %p88 = scmp.ne.s32.totalorder %s80, %s82
      %p89 = scmp.eq.s32.totalorder %s39, 3
      %p90 = por %p88, %p89
      %p91 = scmp.ne.s32.totalorder %s82, %s83
      %p92 = scmp.eq.s32.totalorder %s39, 0
      %p93 = por %p91, %p92
      %p94 = scmp.ne.s32.totalorder %s82, %s83
      %p95 = scmp.eq.s32.totalorder %s40, 3
      %p96 = por %p94, %p95
      %p98 = scmp.ne.s32.totalorder %s83, %s97
      %p99 = scmp.eq.s32.totalorder %s40, 0
      %p100 = por %p98, %p99
      %s102 = sadd.s32 %s101, 1
      %p105 = scmp.eq.s32.totalorder %s34, 3
      %p106 = scmp.ne.s32.totalorder %s101, %s103
      %p107 = scmp.eq.s32.totalorder %s34, 0
      %p108 = por %p106, %p107
      %p109 = scmp.ne.s32.totalorder %s101, %s103
      %p110 = scmp.eq.s32.totalorder %s39, 3
      %p111 = por %p109, %p110
      %p112 = scmp.ne.s32.totalorder %s103, %s104
      %p113 = scmp.eq.s32.totalorder %s39, 0
      %p114 = por %p112, %p113
      %p115 = scmp.ne.s32.totalorder %s103, %s104
      %p116 = scmp.eq.s32.totalorder %s40, 3
      %p117 = por %p115, %p116
      %p119 = scmp.ne.s32.totalorder %s104, %s118
      %p120 = scmp.eq.s32.totalorder %s40, 0
      %p121 = por %p119, %p120
      %s123 = sadd.s32 %s122, 1
      %p126 = scmp.eq.s32.totalorder %s34, 3
      %p127 = scmp.ne.s32.totalorder %s122, %s124
      %p128 = scmp.eq.s32.totalorder %s34, 0
      %p129 = por %p127, %p128
      %p130 = scmp.ne.s32.totalorder %s122, %s124
      %p131 = scmp.eq.s32.totalorder %s39, 3
      %p132 = por %p130, %p131
      %p133 = scmp.ne.s32.totalorder %s124, %s125
      %p134 = scmp.eq.s32.totalorder %s39, 0
      %p135 = por %p133, %p134
      %p136 = scmp.ne.s32.totalorder %s124, %s125
      %p137 = scmp.eq.s32.totalorder %s40, 3
      %p138 = por %p136, %p137
      %p140 = scmp.ne.s32.totalorder %s125, %s139
      %p141 = scmp.eq.s32.totalorder %s40, 0
      %p142 = por %p140, %p141
      %s144 = sadd.s32 %s143, 1
      %p147 = scmp.eq.s32.totalorder %s34, 3
      %p148 = scmp.ne.s32.totalorder %s143, %s145
      %p149 = scmp.eq.s32.totalorder %s34, 0
      %p150 = por %p148, %p149
      %p151 = scmp.ne.s32.totalorder %s143, %s145
      %p152 = scmp.eq.s32.totalorder %s39, 3
      %p153 = por %p151, %p152
      %p154 = scmp.ne.s32.totalorder %s145, %s146
      %p155 = scmp.eq.s32.totalorder %s39, 0
      %p156 = por %p154, %p155
      %p157 = scmp.ne.s32.totalorder %s145, %s146
      %p158 = scmp.eq.s32.totalorder %s40, 3
      %p159 = por %p157, %p158
      %p161 = scmp.ne.s32.totalorder %s146, %s160
      %p162 = scmp.eq.s32.totalorder %s40, 0
      %p163 = por %p161, %p162
      %s165 = sadd.s32 %s164, 1
      %p168 = scmp.eq.s32.totalorder %s34, 3
      %p169 = scmp.ne.s32.totalorder %s164, %s166
      %p170 = scmp.eq.s32.totalorder %s34, 0
      %p171 = por %p169, %p170
      %p172 = scmp.ne.s32.totalorder %s164, %s166
      %p173 = scmp.eq.s32.totalorder %s39, 3
      %p174 = por %p172, %p173
      %p175 = scmp.ne.s32.totalorder %s166, %s167
      %p176 = scmp.eq.s32.totalorder %s39, 0
      %p177 = por %p175, %p176
      %p178 = scmp.ne.s32.totalorder %s166, %s167
      %p179 = scmp.eq.s32.totalorder %s40, 3
      %p180 = por %p178, %p179
      %p182 = scmp.ne.s32.totalorder %s167, %s181
      %p183 = scmp.eq.s32.totalorder %s40, 0
      %p184 = por %p182, %p183
      %s186 = sadd.s32 %s185, 1
      %p189 = scmp.eq.s32.totalorder %s34, 3
      %p190 = scmp.ne.s32.totalorder %s185, %s187
      %p191 = scmp.eq.s32.totalorder %s34, 0
      %p192 = por %p190, %p191
      %p193 = scmp.ne.s32.totalorder %s185, %s187
      %p194 = scmp.eq.s32.totalorder %s39, 3
      %p195 = por %p193, %p194
      %p196 = scmp.ne.s32.totalorder %s187, %s188
      %p197 = scmp.eq.s32.totalorder %s39, 0
      %p198 = por %p196, %p197
      %p199 = scmp.ne.s32.totalorder %s187, %s188
      %p200 = scmp.eq.s32.totalorder %s40, 3
      %p201 = por %p199, %p200
      %p203 = scmp.ne.s32.totalorder %s188, %s202
      %p204 = scmp.eq.s32.totalorder %s40, 0
      %p205 = por %p203, %p204
      %s207 = sadd.s32 %s206, 1
      %p210 = scmp.eq.s32.totalorder %s34, 3
      %p211 = scmp.ne.s32.totalorder %s206, %s208
      %p212 = scmp.eq.s32.totalorder %s34, 0
      %p213 = por %p211, %p212
      %p214 = scmp.ne.s32.totalorder %s206, %s208
      %p215 = scmp.eq.s32.totalorder %s39, 3
      %p216 = por %p214, %p215
      %p217 = scmp.ne.s32.totalorder %s208, %s209
      %p218 = scmp.eq.s32.totalorder %s39, 0
      %p219 = por %p217, %p218
      %p220 = scmp.ne.s32.totalorder %s208, %s209
      %p221 = scmp.eq.s32.totalorder %s40, 3
      %p222 = por %p220, %p221
      %p224 = scmp.ne.s32.totalorder %s209, %s223
      %p225 = scmp.eq.s32.totalorder %s40, 0
      %p226 = por %p224, %p225
      %s228 = sadd.s32 %s227, 1
      %p231 = scmp.eq.s32.totalorder %s34, 3
      %p232 = scmp.ne.s32.totalorder %s227, %s229
      %p233 = scmp.eq.s32.totalorder %s34, 0
      %p234 = por %p232, %p233
      %p235 = scmp.ne.s32.totalorder %s227, %s229
      %p236 = scmp.eq.s32.totalorder %s39, 3
      %p237 = por %p235, %p236
      %p238 = scmp.ne.s32.totalorder %s229, %s230
      %p239 = scmp.eq.s32.totalorder %s39, 0
      %p240 = por %p238, %p239
      %p241 = scmp.ne.s32.totalorder %s229, %s230
      %p242 = scmp.eq.s32.totalorder %s40, 3
      %p243 = por %p241, %p242
      %p245 = scmp.ne.s32.totalorder %s230, %s244
      %p246 = scmp.eq.s32.totalorder %s40, 0
      %p247 = por %p245, %p246
      %s249 = sadd.s32 %s248, 1
      %p252 = scmp.eq.s32.totalorder %s34, 3
      %p253 = scmp.ne.s32.totalorder %s248, %s250
      %p254 = scmp.eq.s32.totalorder %s34, 0
      %p255 = por %p253, %p254
      %p256 = scmp.ne.s32.totalorder %s248, %s250
      %p257 = scmp.eq.s32.totalorder %s39, 3
      %p258 = por %p256, %p257
      %p259 = scmp.ne.s32.totalorder %s250, %s251
      %p260 = scmp.eq.s32.totalorder %s39, 0
      %p261 = por %p259, %p260
      %p262 = scmp.ne.s32.totalorder %s250, %s251
      %p263 = scmp.eq.s32.totalorder %s40, 3
      %p264 = por %p262, %p263
      %p266 = scmp.ne.s32.totalorder %s251, %s265
      %p267 = scmp.eq.s32.totalorder %s40, 0
      %p268 = por %p266, %p267
      %s270 = sadd.s32 %s269, 1
      %p273 = scmp.eq.s32.totalorder %s34, 3
      %p274 = scmp.ne.s32.totalorder %s269, %s271
      %p275 = scmp.eq.s32.totalorder %s34, 0
      %p276 = por %p274, %p275
      %p277 = scmp.ne.s32.totalorder %s269, %s271
      %p278 = scmp.eq.s32.totalorder %s39, 3
      %p279 = por %p277, %p278
      %p280 = scmp.ne.s32.totalorder %s271, %s272
      %p281 = scmp.eq.s32.totalorder %s39, 0
      %p282 = por %p280, %p281
      %p283 = scmp.ne.s32.totalorder %s271, %s272
      %p284 = scmp.eq.s32.totalorder %s40, 3
      %p285 = por %p283, %p284
      %p287 = scmp.ne.s32.totalorder %s272, %s286
      %p288 = scmp.eq.s32.totalorder %s40, 0
      %p289 = por %p287, %p288
      %s291 = sadd.s32 %s290, 1
      %p294 = scmp.eq.s32.totalorder %s34, 3
      %p295 = scmp.ne.s32.totalorder %s290, %s292
      %p296 = scmp.eq.s32.totalorder %s34, 0
      %p297 = por %p295, %p296
      %p298 = scmp.ne.s32.totalorder %s290, %s292
      %p299 = scmp.eq.s32.totalorder %s39, 3
      %p300 = por %p298, %p299
      %p301 = scmp.ne.s32.totalorder %s292, %s293
      %p302 = scmp.eq.s32.totalorder %s39, 0
      %p303 = por %p301, %p302
      %p304 = scmp.ne.s32.totalorder %s292, %s293
      %p305 = scmp.eq.s32.totalorder %s40, 3
      %p306 = por %p304, %p305
      %p308 = scmp.ne.s32.totalorder %s293, %s307
      %p309 = scmp.eq.s32.totalorder %s40, 0
      %p310 = por %p308, %p309
      %s312 = sadd.s32 %s311, 1
      %p315 = scmp.eq.s32.totalorder %s34, 3
      %p316 = scmp.ne.s32.totalorder %s311, %s313
      %p317 = scmp.eq.s32.totalorder %s34, 0
      %p318 = por %p316, %p317
      %p319 = scmp.ne.s32.totalorder %s311, %s313
      %p320 = scmp.eq.s32.totalorder %s39, 3
      %p321 = por %p319, %p320
      %p322 = scmp.ne.s32.totalorder %s313, %s314
      %p323 = scmp.eq.s32.totalorder %s39, 0
      %p324 = por %p322, %p323
      %p325 = scmp.ne.s32.totalorder %s313, %s314
      %p326 = scmp.eq.s32.totalorder %s40, 3
      %p327 = por %p325, %p326
      %p329 = scmp.ne.s32.totalorder %s314, %s328
      %p330 = scmp.eq.s32.totalorder %s40, 0
      %p331 = por %p329, %p330
      %s333 = sadd.s32 %s332, 1
      %p336 = scmp.eq.s32.totalorder %s34, 3
      %p337 = scmp.ne.s32.totalorder %s332, %s334
      %p338 = scmp.eq.s32.totalorder %s34, 0
      %p339 = por %p337, %p338
      %p340 = scmp.ne.s32.totalorder %s332, %s334
      %p341 = scmp.eq.s32.totalorder %s39, 3
      %p342 = por %p340, %p341
      %p343 = scmp.ne.s32.totalorder %s334, %s335
      %p344 = scmp.eq.s32.totalorder %s39, 0
      %p345 = por %p343, %p344
      %p346 = scmp.ne.s32.totalorder %s334, %s335
      %p347 = scmp.eq.s32.totalorder %s40, 3
      %p348 = por %p346, %p347
      %p350 = scmp.ne.s32.totalorder %s335, %s349
      %p351 = scmp.eq.s32.totalorder %s40, 0
      %p352 = por %p350, %p351
      %s354 = sadd.s32 %s353, 1
      %p357 = scmp.eq.s32.totalorder %s34, 3
      %p358 = scmp.ne.s32.totalorder %s353, %s355
      %p359 = scmp.eq.s32.totalorder %s34, 0
      %p360 = por %p358, %p359
      %p361 = scmp.ne.s32.totalorder %s353, %s355
      %p362 = scmp.eq.s32.totalorder %s39, 3
      %p363 = por %p361, %p362
      %p364 = scmp.ne.s32.totalorder %s355, %s356
      %p365 = scmp.eq.s32.totalorder %s39, 0
      %p366 = por %p364, %p365
      %p367 = scmp.ne.s32.totalorder %s355, %s356
      %p368 = scmp.eq.s32.totalorder %s40, 3
      %p369 = por %p367, %p368
      %p371 = scmp.ne.s32.totalorder %s356, %s370
      %p372 = scmp.eq.s32.totalorder %s40, 0
      %p373 = por %p371, %p372
      %s375 = sadd.s32 %s374, 1
      %p378 = scmp.eq.s32.totalorder %s34, 3
      %p379 = scmp.ne.s32.totalorder %s374, %s376
      %p380 = scmp.eq.s32.totalorder %s34, 0
      %p381 = por %p379, %p380
      %p382 = scmp.ne.s32.totalorder %s374, %s376
      %p383 = scmp.eq.s32.totalorder %s39, 3
      %p384 = por %p382, %p383
      %p385 = scmp.ne.s32.totalorder %s376, %s377
      %p386 = scmp.eq.s32.totalorder %s39, 0
      %p387 = por %p385, %p386
      %p388 = scmp.ne.s32.totalorder %s376, %s377
      %p389 = scmp.eq.s32.totalorder %s40, 3
      %p390 = por %p388, %p389
      %p392 = scmp.ne.s32.totalorder %s377, %s391
      %p393 = scmp.eq.s32.totalorder %s40, 0
      %p394 = por %p392, %p393
      %s395 = ssub.s32 %s42, %s49
      %p396 = scmp.eq.s32.totalorder %s395, 0
      %s398 = sadd.s32 %s397, 1
      %s399 = scalar_select %p396, %s397, %s398
      %p402 = pneg %p396
      %p403 = scmp.eq.s32.totalorder %s34, 3
      %p404 = por %p402, %p403
      %p405 = scmp.ne.s32.totalorder %s397, %s400
      %p406 = scmp.eq.s32.totalorder %s34, 0
      %p407 = por %p405, %p406
      %p408 = scmp.ne.s32.totalorder %s397, %s400
      %p409 = scmp.eq.s32.totalorder %s39, 3
      %p410 = por %p408, %p409
      %p411 = scmp.ne.s32.totalorder %s400, %s401
      %p412 = scmp.eq.s32.totalorder %s39, 0
      %p413 = por %p411, %p412
      %p414 = scmp.ne.s32.totalorder %s400, %s401
      %p415 = scmp.eq.s32.totalorder %s40, 3
      %p416 = por %p414, %p415
      %p418 = scmp.ne.s32.totalorder %s401, %s417
      %p419 = scmp.eq.s32.totalorder %s40, 0
      %p420 = por %p418, %p419
      %s421 = ssub.s32 %s42, %s49
      %p422 = scmp.eq.s32.totalorder %s421, 0
      %s424 = sadd.s32 %s423, 1
      %s425 = scalar_select %p422, %s423, %s424
      %p428 = pneg %p422
      %p429 = scmp.eq.s32.totalorder %s34, 3
      %p430 = por %p428, %p429
      %p431 = scmp.ne.s32.totalorder %s423, %s426
      %p432 = scmp.eq.s32.totalorder %s34, 0
      %p433 = por %p431, %p432
      %p434 = scmp.ne.s32.totalorder %s423, %s426
      %p435 = scmp.eq.s32.totalorder %s39, 3
      %p436 = por %p434, %p435
      %p437 = scmp.ne.s32.totalorder %s426, %s427
      %p438 = scmp.eq.s32.totalorder %s39, 0
      %p439 = por %p437, %p438
      %p440 = scmp.ne.s32.totalorder %s426, %s427
      %p441 = scmp.eq.s32.totalorder %s40, 3
      %p442 = por %p440, %p441
      %p444 = scmp.ne.s32.totalorder %s427, %s443
      %p445 = scmp.eq.s32.totalorder %s40, 0
      %p446 = por %p444, %p445
      %s448 = sadd.s32 %s447, 1
      %p451 = scmp.eq.s32.totalorder %s34, 3
      %p452 = scmp.ne.s32.totalorder %s447, %s449
      %p453 = scmp.eq.s32.totalorder %s34, 0
      %p454 = por %p452, %p453
      %p455 = scmp.ne.s32.totalorder %s447, %s449
      %p456 = scmp.eq.s32.totalorder %s39, 3
      %p457 = por %p455, %p456
      %p458 = scmp.ne.s32.totalorder %s449, %s450
      %p459 = scmp.eq.s32.totalorder %s39, 0
      %p460 = por %p458, %p459
      %p461 = scmp.ne.s32.totalorder %s449, %s450
      %p462 = scmp.eq.s32.totalorder %s40, 3
      %p463 = por %p461, %p462
      %p465 = scmp.ne.s32.totalorder %s450, %s464
      %p466 = scmp.eq.s32.totalorder %s40, 0
      %p467 = por %p465, %p466
      %s469 = sadd.s32 %s468, 1
      %p472 = scmp.eq.s32.totalorder %s34, 3
      %p473 = scmp.ne.s32.totalorder %s468, %s470
      %p474 = scmp.eq.s32.totalorder %s34, 0
      %p475 = por %p473, %p474
      %p476 = scmp.ne.s32.totalorder %s468, %s470
      %p477 = scmp.eq.s32.totalorder %s39, 3
      %p478 = por %p476, %p477
      %p479 = scmp.ne.s32.totalorder %s470, %s471
      %p480 = scmp.eq.s32.totalorder %s39, 0
      %p481 = por %p479, %p480
      %p482 = scmp.ne.s32.totalorder %s470, %s471
      %p483 = scmp.eq.s32.totalorder %s40, 3
      %p484 = por %p482, %p483
      %p486 = scmp.ne.s32.totalorder %s471, %s485
      %p487 = scmp.eq.s32.totalorder %s40, 0
      %p488 = por %p486, %p487
      %s489 = ssub.s32 %s41, %s53
      %s490 = ssub.s32 %s42, %s49
      %s491 = sor.u32 %s489, %s490
      %p492 = scmp.eq.s32.totalorder %s491, 0
      %s494 = sadd.s32 %s493, 1
      %s495 = scalar_select %p492, %s493, %s494
      %p498 = pneg %p492
      %p499 = scmp.eq.s32.totalorder %s34, 3
      %p500 = por %p498, %p499
      %p501 = scmp.ne.s32.totalorder %s493, %s496
      %p502 = scmp.eq.s32.totalorder %s34, 0
      %p503 = por %p501, %p502
      %p504 = scmp.ne.s32.totalorder %s493, %s496
      %p505 = scmp.eq.s32.totalorder %s39, 3
      %p506 = por %p504, %p505
      %p507 = scmp.ne.s32.totalorder %s496, %s497
      %p508 = scmp.eq.s32.totalorder %s39, 0
      %p509 = por %p507, %p508
      %p510 = scmp.ne.s32.totalorder %s496, %s497
      %p511 = scmp.eq.s32.totalorder %s40, 3
      %p512 = por %p510, %p511
      %p514 = scmp.ne.s32.totalorder %s497, %s513
      %p515 = scmp.eq.s32.totalorder %s40, 0
      %p516 = por %p514, %p515
      %s517 = ssub.s32 %s41, %s53
      %p518 = scmp.eq.s32.totalorder %s517, 0
      %s520 = sadd.s32 %s519, 1
      %s521 = scalar_select %p518, %s519, %s520
      %p524 = pneg %p518
      %p525 = scmp.eq.s32.totalorder %s34, 3
      %p526 = por %p524, %p525
      %p527 = scmp.ne.s32.totalorder %s519, %s522
      %p528 = scmp.eq.s32.totalorder %s34, 0
      %p529 = por %p527, %p528
      %p530 = scmp.ne.s32.totalorder %s519, %s522
      %p531 = scmp.eq.s32.totalorder %s39, 3
      %p532 = por %p530, %p531
      %p533 = scmp.ne.s32.totalorder %s522, %s523
      %p534 = scmp.eq.s32.totalorder %s39, 0
      %p535 = por %p533, %p534
      %p536 = scmp.ne.s32.totalorder %s522, %s523
      %p537 = scmp.eq.s32.totalorder %s40, 3
      %p538 = por %p536, %p537
      %p540 = scmp.ne.s32.totalorder %s523, %s539
      %p541 = scmp.eq.s32.totalorder %s40, 0
      %p542 = por %p540, %p541
      %p543 = scmp.le.s32.totalorder 1, %s34
      %p544 = scmp.lt.s32.totalorder %s34, 5
      %p545 = pnand %p543, %p544
      %p546 = pneg %p545
      // Predicated region
      $region9: #{tpu_custom_call.1} parent=5 // pred_check
        _
      $region10: #{tpu_custom_call.1} parent=5 // pred_check_branch
        %548 = sbr.rel (%p545) target = $region12
      $region11: #{tpu_custom_call.1} parent=5 // pred_region
        %s549 = ssub.s32 %s34, 1
        // Predicated region
        $region13: #{tpu_custom_call.1} parent=11 // pred_check
          %p550 = pneg %p93
        $region14: #{tpu_custom_call.1} parent=11 // pred_check_branch
          %552 = sbr.rel (%p550) target = $region16
        $region15: #{tpu_custom_call.1} parent=11 // pred_region
          _
        $region16: #{tpu_custom_call.1} parent=11 // pred_fallthru
          _
        // Predicated region
        $region17: #{tpu_custom_call.1} parent=11 // pred_check
          %p553 = pneg %p114
        $region18: #{tpu_custom_call.1} parent=11 // pred_check_branch
          %555 = sbr.rel (%p553) target = $region20
        $region19: #{tpu_custom_call.1} parent=11 // pred_region
          _
        $region20: #{tpu_custom_call.1} parent=11 // pred_fallthru
          _
        // Predicated region
        $region21: #{tpu_custom_call.1} parent=11 // pred_check
          %p556 = pneg %p135
        $region22: #{tpu_custom_call.1} parent=11 // pred_check_branch
          %558 = sbr.rel (%p556) target = $region24
        $region23: #{tpu_custom_call.1} parent=11 // pred_region
          _
        $region24: #{tpu_custom_call.1} parent=11 // pred_fallthru
          _
        // Predicated region
        $region25: #{tpu_custom_call.1} parent=11 // pred_check
          %p559 = pneg %p156
        $region26: #{tpu_custom_call.1} parent=11 // pred_check_branch
          %561 = sbr.rel (%p559) target = $region28
        $region27: #{tpu_custom_call.1} parent=11 // pred_region
          _
        $region28: #{tpu_custom_call.1} parent=11 // pred_fallthru
          _
        // Predicated region
        $region29: #{tpu_custom_call.1} parent=11 // pred_check
          %p562 = pneg %p177
        $region30: #{tpu_custom_call.1} parent=11 // pred_check_branch
          %564 = sbr.rel (%p562) target = $region32
        $region31: #{tpu_custom_call.1} parent=11 // pred_region
          _
        $region32: #{tpu_custom_call.1} parent=11 // pred_fallthru
          _
        // Predicated region
        $region33: #{tpu_custom_call.1} parent=11 // pred_check
          %p565 = pneg %p198
        $region34: #{tpu_custom_call.1} parent=11 // pred_check_branch
          %567 = sbr.rel (%p565) target = $region36
        $region35: #{tpu_custom_call.1} parent=11 // pred_region
          _
        $region36: #{tpu_custom_call.1} parent=11 // pred_fallthru
          _
        // Predicated region
        $region37: #{tpu_custom_call.1} parent=11 // pred_check
          %p568 = pneg %p219
        $region38: #{tpu_custom_call.1} parent=11 // pred_check_branch
          %570 = sbr.rel (%p568) target = $region40
        $region39: #{tpu_custom_call.1} parent=11 // pred_region
          _
        $region40: #{tpu_custom_call.1} parent=11 // pred_fallthru
          _
        // Predicated region
        $region41: #{tpu_custom_call.1} parent=11 // pred_check
          %p571 = pneg %p240
        $region42: #{tpu_custom_call.1} parent=11 // pred_check_branch
          %573 = sbr.rel (%p571) target = $region44
        $region43: #{tpu_custom_call.1} parent=11 // pred_region
          _
        $region44: #{tpu_custom_call.1} parent=11 // pred_fallthru
          _
        // Predicated region
        $region45: #{tpu_custom_call.1} parent=11 // pred_check
          %p574 = pneg %p261
        $region46: #{tpu_custom_call.1} parent=11 // pred_check_branch
          %576 = sbr.rel (%p574) target = $region48
        $region47: #{tpu_custom_call.1} parent=11 // pred_region
          _
        $region48: #{tpu_custom_call.1} parent=11 // pred_fallthru
          _
        // Predicated region
        $region49: #{tpu_custom_call.1} parent=11 // pred_check
          %p577 = pneg %p282
        $region50: #{tpu_custom_call.1} parent=11 // pred_check_branch
          %579 = sbr.rel (%p577) target = $region52
        $region51: #{tpu_custom_call.1} parent=11 // pred_region
          _
        $region52: #{tpu_custom_call.1} parent=11 // pred_fallthru
          _
        // Predicated region
        $region53: #{tpu_custom_call.1} parent=11 // pred_check
          %p580 = pneg %p303
        $region54: #{tpu_custom_call.1} parent=11 // pred_check_branch
          %582 = sbr.rel (%p580) target = $region56
        $region55: #{tpu_custom_call.1} parent=11 // pred_region
          _
        $region56: #{tpu_custom_call.1} parent=11 // pred_fallthru
          _
        // Predicated region
        $region57: #{tpu_custom_call.1} parent=11 // pred_check
          %p583 = pneg %p324
        $region58: #{tpu_custom_call.1} parent=11 // pred_check_branch
          %585 = sbr.rel (%p583) target = $region60
        $region59: #{tpu_custom_call.1} parent=11 // pred_region
          _
        $region60: #{tpu_custom_call.1} parent=11 // pred_fallthru
          _
        // Predicated region
        $region61: #{tpu_custom_call.1} parent=11 // pred_check
          %p586 = pneg %p345
        $region62: #{tpu_custom_call.1} parent=11 // pred_check_branch
          %588 = sbr.rel (%p586) target = $region64
        $region63: #{tpu_custom_call.1} parent=11 // pred_region
          _
        $region64: #{tpu_custom_call.1} parent=11 // pred_fallthru
          _
        // Predicated region
        $region65: #{tpu_custom_call.1} parent=11 // pred_check
          %p589 = pneg %p366
        $region66: #{tpu_custom_call.1} parent=11 // pred_check_branch
          %591 = sbr.rel (%p589) target = $region68
        $region67: #{tpu_custom_call.1} parent=11 // pred_region
          _
        $region68: #{tpu_custom_call.1} parent=11 // pred_fallthru
          _
        // Predicated region
        $region69: #{tpu_custom_call.1} parent=11 // pred_check
          %p592 = pneg %p387
        $region70: #{tpu_custom_call.1} parent=11 // pred_check_branch
          %594 = sbr.rel (%p592) target = $region72
        $region71: #{tpu_custom_call.1} parent=11 // pred_region
          _
        $region72: #{tpu_custom_call.1} parent=11 // pred_fallthru
          _
        // Predicated region
        $region73: #{tpu_custom_call.1} parent=11 // pred_check
          %p595 = pneg %p460
        $region74: #{tpu_custom_call.1} parent=11 // pred_check_branch
          %597 = sbr.rel (%p595) target = $region76
        $region75: #{tpu_custom_call.1} parent=11 // pred_region
          _
        $region76: #{tpu_custom_call.1} parent=11 // pred_fallthru
          _
        // Predicated region
        $region77: #{tpu_custom_call.1} parent=11 // pred_check
          %p598 = pneg %p481
        $region78: #{tpu_custom_call.1} parent=11 // pred_check_branch
          %600 = sbr.rel (%p598) target = $region80
        $region79: #{tpu_custom_call.1} parent=11 // pred_region
          _
        $region80: #{tpu_custom_call.1} parent=11 // pred_fallthru
          _
      $region12: #{tpu_custom_call.1} parent=5 // pred_fallthru
        _
      %p601 = scmp.lt.s32.totalorder %s34, 4
      // Predicated region
      $region81: #{tpu_custom_call.1} parent=5 // pred_check
        %p602 = pneg %p601
      $region82: #{tpu_custom_call.1} parent=5 // pred_check_branch
        %604 = sbr.rel (%p602) target = $region84
      $region83: #{tpu_custom_call.1} parent=5 // pred_region
        // Predicated region
        $region85: #{tpu_custom_call.1} parent=83 // pred_check
          %p605 = pneg %p66
        $region86: #{tpu_custom_call.1} parent=83 // pred_check_branch
          %607 = sbr.rel (%p605) target = $region88
        $region87: #{tpu_custom_call.1} parent=83 // pred_region
          %p608 = scmp.lt.s32.totalorder %s41, 1
          %s609 = scalar_select %p608, %s41, 1
          %s610 = smul.addr %s609, 4
          %s611 = smul.addr %s610, 4
          %s612 = scalar_lea.vmem %s0, %s611
        $region88: #{tpu_custom_call.1} parent=83 // pred_fallthru
          _
        // Predicated region
        $region89: #{tpu_custom_call.1} parent=83 // pred_check
          %p613 = pneg %p407
        $region90: #{tpu_custom_call.1} parent=83 // pred_check_branch
          %615 = sbr.rel (%p613) target = $region92
        $region91: #{tpu_custom_call.1} parent=83 // pred_region
          %s616 = smul.u32 2, %s42
          %p617 = scmp.lt.s32.totalorder %s616, 3
          %s618 = scalar_select %p617, %s616, 3
          %s619 = smul.addr %s618, 8
          %s620 = scalar_lea.vmem %s16, %s619
          %s621 = smul.u32 2, %s42
        $region92: #{tpu_custom_call.1} parent=83 // pred_fallthru
          _
        // Predicated region
        $region93: #{tpu_custom_call.1} parent=83 // pred_check
          %p622 = pneg %p433
        $region94: #{tpu_custom_call.1} parent=83 // pred_check_branch
          %624 = sbr.rel (%p622) target = $region96
        $region95: #{tpu_custom_call.1} parent=83 // pred_region
          %s625 = smul.u32 2, %s42
          %p626 = scmp.lt.s32.totalorder %s625, 3
          %s627 = scalar_select %p626, %s625, 3
          %s628 = smul.addr %s627, 8
          %s629 = scalar_lea.vmem %s17, %s628
          %s630 = smul.u32 2, %s42
        $region96: #{tpu_custom_call.1} parent=83 // pred_fallthru
          _
      $region84: #{tpu_custom_call.1} parent=5 // pred_fallthru
        _
      %p631 = scmp.le.s32.totalorder 1, %s34
      %p632 = scmp.lt.s32.totalorder %s34, 5
      %p633 = pnand %p631, %p632
      %p634 = pneg %p633
      // Predicated region
      $region97: #{tpu_custom_call.1} parent=5 // pred_check
        _
      $region98: #{tpu_custom_call.1} parent=5 // pred_check_branch
        %636 = sbr.rel (%p633) target = $region100
      $region99: #{tpu_custom_call.1} parent=5 // pred_region
        %s637 = ssub.s32 %s34, 1
        %p638 = scmp.lt.s32.totalorder %s43, 1
        %s639 = scalar_select %p638, %s43, 1
        %s640 = smul.addr %s639, 4
        %s641 = smul.addr %s640, 4
        %s642 = scalar_lea.vmem %s0, %s641
        %p643 = pneg %p72
        %p644 = pneg %p69
        %p645 = pneg %p93
        %p646 = pneg %p90
        %p647 = pneg %p114
        %p648 = pneg %p111
        %p649 = pneg %p135
        %p650 = pneg %p132
        %p651 = pneg %p156
        %p652 = pneg %p153
        %p653 = pneg %p177
        %p654 = pneg %p174
        %p655 = pneg %p198
        %p656 = pneg %p195
        %p657 = pneg %p219
        %p658 = pneg %p216
        %p659 = pneg %p240
        %p660 = pneg %p237
        %p661 = pneg %p261
        %p662 = pneg %p258
        %p663 = pneg %p282
        %p664 = pneg %p279
        %p665 = pneg %p303
        %p666 = pneg %p300
        %p667 = pneg %p324
        %p668 = pneg %p321
        %p669 = pneg %p345
        %p670 = pneg %p342
        %p671 = pneg %p366
        %p672 = pneg %p363
        %p673 = pneg %p387
        %p674 = pneg %p384
        %s675 = smul.u32 2, %s44
        %p676 = scmp.lt.s32.totalorder %s675, 3
        %s677 = scalar_select %p676, %s675, 3
        %s678 = smul.addr %s677, 8
        %s679 = scalar_lea.vmem %s16, %s678
        %p680 = pneg %p413
        %p681 = pneg %p410
        %s682 = smul.u32 2, %s44
        %p683 = scmp.lt.s32.totalorder %s682, 3
        %s684 = scalar_select %p683, %s682, 3
        %s685 = smul.addr %s684, 8
        %s686 = scalar_lea.vmem %s17, %s685
        %p687 = pneg %p439
        %p688 = pneg %p436
        %p689 = pneg %p460
        %p690 = pneg %p457
        %p691 = pneg %p481
        %p692 = pneg %p478
        %p693 = pneg %p509
        %p694 = pneg %p506
        %s695 = sand.u32 %s496, 1
        %s696 = scalar_lea.sflag [#allocation6], %s695
        %s697 = sand.u32 %s496, 1
        %s698 = smul.addr %s697, 16
        %s699 = scalar_lea.vmem [#allocation5], %s698
        %p700 = pneg %p535
        %p701 = pneg %p532
        %s702 = sand.u32 %s522, 1
        %s703 = scalar_lea.sflag [#allocation8], %s702
        %s704 = sand.u32 %s522, 1
        %s705 = smul.addr %s704, 16
        %s706 = scalar_lea.vmem [#allocation7], %s705
        %p707 = scmp.lt.s32.totalorder %s43, 1
        %s708 = scalar_select %p707, %s43, 1
        %s709 = smul.addr %s708, 4
        %s710 = smul.addr %s709, 4
        %s711 = scalar_lea.vmem %s0, %s710
        %s712 = smul.u32 2, %s44
        %p713 = scmp.lt.s32.totalorder %s712, 3
        %s714 = scalar_select %p713, %s712, 3
        %s715 = smul.addr %s714, 8
        %s716 = scalar_lea.vmem %s16, %s715
        %s717 = smul.u32 2, %s44
        %s718 = smul.u32 2, %s44
        %p719 = scmp.lt.s32.totalorder %s718, 3
        %s720 = scalar_select %p719, %s718, 3
        %s721 = smul.addr %s720, 8
        %s722 = scalar_lea.vmem %s17, %s721
        %s723 = smul.u32 2, %s44
        %s724 = smul.u32 2, %s44
        %p726 = scmp.eq.s32.totalorder %s44, 0
        // Predicated region
        $region101: #{tpu_custom_call.1} parent=99 // pred_check
          %p727 = pneg %p726
        $region102: #{tpu_custom_call.1} parent=99 // pred_check_branch
          %729 = sbr.rel (%p727) target = $region104
        $region103: #{tpu_custom_call.1} parent=99 // pred_region
          %v730 = vld [vmem:[%s711] sm:$0xf]
          %v731 = vld [vmem:[%s711 + $0x4] sm:$0xf]
          %v732 = vld [vmem:[%s711 + $0x8] sm:$0xf]
          %v733 = vld [vmem:[%s711 + $0xc] sm:$0xf]
          %v734 = vld [vmem:[%s7] sm:$0xf]
          %v735 = vld [vmem:[%s7 + $0x4] sm:$0xf]
          %v736 = vld [vmem:[%s7 + $0x8] sm:$0xf]
          %v737 = vld [vmem:[%s7 + $0xc] sm:$0xf]
          %v738 = vld [vmem:[%s7 + $0x10] sm:$0xf]
          %v739 = vld [vmem:[%s7 + $0x14] sm:$0xf]
          %v744 = vunpack.c.l.b16 %v730
          %v745 = vunpack.c.l.b16 %v731
          %v746 = vunpack.c.l.b16 %v732
          %v747 = vunpack.c.l.b16 %v733
          %v748 = vpack.c.b16 %v745, %v744
          %v749 = vpack.c.b16 %v747, %v746
          %v756 = vunpack.c.l.b16 %v734
          %v757 = vunpack.c.l.b16 %v735
          %v758 = vunpack.c.l.b16 %v736
          %v759 = vunpack.c.l.b16 %v737
          %v760 = vunpack.c.l.b16 %v738
          %v761 = vunpack.c.l.b16 %v739
          %v762 = vpack.c.b16 %v757, %v756
          %v763 = vpack.c.b16 %v759, %v758
          %v764 = vpack.c.b16 %v761, %v760
          %vm768 = vcmask 392192
          %v770 = vsel %vm768, %v748, 0
          %v773 = vsel %vm768, %v749, 0
          %775 = vmatpush.bf16.msra.mxu0 0
          %776 = vmatpush.bf16.msra.mxu0 0
          %777 = vmatpush.bf16.msra.mxu0 0
          %778 = vmatpush.bf16.msra.mxu0 0
          %779 = vmatpush.bf16.msra.mxu0 0
          %780 = vmatpush.bf16.msra.mxu0 %v764
          %781 = vmatpush.bf16.msra.mxu0 %v763
          %782 = vmatpush.bf16.msra.mxu0 %v762
          %783 = vmatmul.bf16.gmra.mxu0 %v770
          %v784 = vpop.f32.mrf.mxu0
          %v785 = vadd.f32 0.0, %v784
          %v786 = vpop.f32.mrf.mxu0
          %v787 = vadd.f32 0.0, %v786
          %788 = vmatmul.bf16.gmra.mxu0 %v773
          %v789 = vpop.f32.mrf.mxu0
          %v790 = vadd.f32 0.0, %v789
          %v791 = vpop.f32.mrf.mxu0
          %v792 = vadd.f32 0.0, %v791
          %793 = vdwg.mxu0
          %v794 = vpack.c.bf16 %v785, %v785
          %v795 = vpack.c.bf16 %v787, %v787
          %v796 = vpack.c.bf16 %v790, %v790
          %v797 = vpack.c.bf16 %v792, %v792
          %798 = vst [vmem:[%s706] sm:$0xf] %v794
          %799 = vst [vmem:[%s706 + $0x4] sm:$0xf] %v795
          %800 = vst [vmem:[%s706 + $0x8] sm:$0xf] %v796
          %801 = vst [vmem:[%s706 + $0xc] sm:$0xf] %v797
          %v802 = vld [vmem:[%s8] sm:$0xf]
          %v803 = vld [vmem:[%s8 + $0x4] sm:$0xf]
          %v804 = vld [vmem:[%s8 + $0x8] sm:$0xf]
          %v805 = vld [vmem:[%s8 + $0xc] sm:$0xf]
          %v806 = vld [vmem:[%s8 + $0x10] sm:$0xf]
          %v807 = vld [vmem:[%s8 + $0x14] sm:$0xf]
          %v814 = vunpack.c.l.b16 %v802
          %v815 = vunpack.c.l.b16 %v803
          %v816 = vunpack.c.l.b16 %v804
          %v817 = vunpack.c.l.b16 %v805
          %v818 = vunpack.c.l.b16 %v806
          %v819 = vunpack.c.l.b16 %v807
          %v820 = vpack.c.b16 %v815, %v814
          %v821 = vpack.c.b16 %v817, %v816
          %v822 = vpack.c.b16 %v819, %v818
          %826 = vmatpush.bf16.msra.mxu0 0
          %827 = vmatpush.bf16.msra.mxu0 0
          %828 = vmatpush.bf16.msra.mxu0 0
          %829 = vmatpush.bf16.msra.mxu0 0
          %830 = vmatpush.bf16.msra.mxu0 0
          %831 = vmatpush.bf16.msra.mxu0 %v822
          %832 = vmatpush.bf16.msra.mxu0 %v821
          %833 = vmatpush.bf16.msra.mxu0 %v820
          %834 = vmatmul.bf16.gmra.mxu0 %v770
          %v835 = vpop.f32.mrf.mxu0
          %v836 = vadd.f32 0.0, %v835
          %v837 = vpop.f32.mrf.mxu0
          %v838 = vadd.f32 0.0, %v837
          %839 = vmatmul.bf16.gmra.mxu0 %v773
          %v840 = vpop.f32.mrf.mxu0
          %v841 = vadd.f32 0.0, %v840
          %v842 = vpop.f32.mrf.mxu0
          %v843 = vadd.f32 0.0, %v842
          %844 = vdwg.mxu0
          %v845 = vld [vmem:[%s11] sm:$0x1]
          %v846 = vld [vmem:[%s12] sm:$0x1]
          %vm847 = vcmask 261120
          %v848 = vsel %vm847, %v836, 0.0
          %849 = vadd.xlane.f32.xlu0 %v848
          %v850 = vpop.xlane.xlu0 %849
          %v851 = vsel %vm847, %v838, 0.0
          %852 = vadd.xlane.f32.xlu0 %v851
          %v853 = vpop.xlane.xlu0 %852
          %v854 = vsel %vm847, %v841, 0.0
          %855 = vadd.xlane.f32.xlu0 %v854
          %v856 = vpop.xlane.xlu0 %855
          %v857 = vsel %vm847, %v843, 0.0
          %858 = vadd.xlane.f32.xlu0 %v857
          %v859 = vpop.xlane.xlu0 %858
          %v860 = vrcp.pop 32.0
          %v861 = vmul.f32 32.0, %v860
          %v862 = vsub.f32 1.0, %v861
          %v863 = vmul.f32 %v860, %v862
          %v864 = vadd.f32 %v860, %v863
          %vm865 = vweird.f32 %v860
          %v866 = vsel %vm865, %v860, %v864
          %v867 = vmul.f32 %v850, %v866
          %v868 = vmul.f32 %v853, %v866
          %v869 = vmul.f32 %v856, %v866
          %v870 = vmul.f32 %v859, %v866
          %v871 = vsub.f32 %v836, %v867
          %v872 = vsub.f32 %v838, %v868
          %v873 = vsub.f32 %v841, %v869
          %v874 = vsub.f32 %v843, %v870
          %v875 = vmul.f32 %v871, %v871
          %v876 = vmul.f32 %v872, %v872
          %v877 = vmul.f32 %v873, %v873
          %v878 = vmul.f32 %v874, %v874
          %v879 = vsel %vm847, %v875, 0.0
          %880 = vadd.xlane.f32.xlu0 %v879
          %v881 = vpop.xlane.xlu0 %880
          %v882 = vsel %vm847, %v876, 0.0
          %883 = vadd.xlane.f32.xlu0 %v882
          %v884 = vpop.xlane.xlu0 %883
          %v885 = vsel %vm847, %v877, 0.0
          %886 = vadd.xlane.f32.xlu0 %v885
          %v887 = vpop.xlane.xlu0 %886
          %v888 = vsel %vm847, %v878, 0.0
          %889 = vadd.xlane.f32.xlu0 %v888
          %v890 = vpop.xlane.xlu0 %889
          %v891 = vmul.f32 %v881, %v866
          %v892 = vmul.f32 %v884, %v866
          %v893 = vmul.f32 %v887, %v866
          %v894 = vmul.f32 %v890, %v866
          %v895 = vadd.f32 %v891, 1e-05
          %v896 = vadd.f32 %v892, 1e-05
          %v897 = vadd.f32 %v893, 1e-05
          %v898 = vadd.f32 %v894, 1e-05
          %v899 = vrsqrt.pop %v895
          %v900 = vmul.f32 %v899, %v895
          %v901 = vmul.f32 %v900, %v899
          %v902 = vmul.f32 0.5, %v901
          %v903 = vsub.f32 1.5, %v902
          %v904 = vmul.f32 %v899, %v903
          %vm905 = vweird.f32 %v895
          %vm906 = vweird.f32 %v899
          %vm907 = vmor %vm905, %vm906
          %v908 = vsel %vm907, %v899, %v904
          %v909 = vrsqrt.pop %v896
          %v910 = vmul.f32 %v909, %v896
          %v911 = vmul.f32 %v910, %v909
          %v912 = vmul.f32 0.5, %v911
          %v913 = vsub.f32 1.5, %v912
          %v914 = vmul.f32 %v909, %v913
          %vm915 = vweird.f32 %v896
          %vm916 = vweird.f32 %v909
          %vm917 = vmor %vm915, %vm916
          %v918 = vsel %vm917, %v909, %v914
          %v919 = vrsqrt.pop %v897
          %v920 = vmul.f32 %v919, %v897
          %v921 = vmul.f32 %v920, %v919
          %v922 = vmul.f32 0.5, %v921
          %v923 = vsub.f32 1.5, %v922
          %v924 = vmul.f32 %v919, %v923
          %vm925 = vweird.f32 %v897
          %vm926 = vweird.f32 %v919
          %vm927 = vmor %vm925, %vm926
          %v928 = vsel %vm927, %v919, %v924
          %v929 = vrsqrt.pop %v898
          %v930 = vmul.f32 %v929, %v898
          %v931 = vmul.f32 %v930, %v929
          %v932 = vmul.f32 0.5, %v931
          %v933 = vsub.f32 1.5, %v932
          %v934 = vmul.f32 %v929, %v933
          %vm935 = vweird.f32 %v898
          %vm936 = vweird.f32 %v929
          %vm937 = vmor %vm935, %vm936
          %v938 = vsel %vm937, %v929, %v934
          %v939 = vmul.f32 %v871, %v908
          %v940 = vmul.f32 %v872, %v918
          %v941 = vmul.f32 %v873, %v928
          %v942 = vmul.f32 %v874, %v938
          %v944 = vperm.slane %v845, 0
          %v946 = vmul.f32 %v939, %v944
          %v947 = vmul.f32 %v940, %v944
          %v948 = vmul.f32 %v941, %v944
          %v949 = vmul.f32 %v942, %v944
          %v951 = vperm.slane %v846, 0
          %v953 = vadd.f32 %v946, %v951
          %v954 = vadd.f32 %v947, %v951
          %v955 = vadd.f32 %v948, %v951
          %v956 = vadd.f32 %v949, %v951
          %v957 = vpack.c.bf16 %v954, %v953
          %v958 = vpack.c.bf16 %v956, %v955
          %v959 = vld [vmem:[%s9] sm:$0xf]
          %v960 = vld [vmem:[%s9 + $0x4] sm:$0xf]
          %v961 = vld [vmem:[%s9 + $0x8] sm:$0xf]
          %v962 = vld [vmem:[%s9 + $0xc] sm:$0xf]
          %v963 = vld [vmem:[%s9 + $0x10] sm:$0xf]
          %v964 = vld [vmem:[%s9 + $0x14] sm:$0xf]
          %v971 = vunpack.c.l.b16 %v959
          %v972 = vunpack.c.l.b16 %v960
          %v973 = vunpack.c.l.b16 %v961
          %v974 = vunpack.c.l.b16 %v962
          %v975 = vunpack.c.l.b16 %v963
          %v976 = vunpack.c.l.b16 %v964
          %v977 = vpack.c.b16 %v972, %v971
          %v978 = vpack.c.b16 %v974, %v973
          %v979 = vpack.c.b16 %v976, %v975
          %983 = vmatpush.bf16.msra.mxu0 0
          %984 = vmatpush.bf16.msra.mxu0 0
          %985 = vmatpush.bf16.msra.mxu0 0
          %986 = vmatpush.bf16.msra.mxu0 0
          %987 = vmatpush.bf16.msra.mxu0 0
          %988 = vmatpush.bf16.msra.mxu0 %v979
          %989 = vmatpush.bf16.msra.mxu0 %v978
          %990 = vmatpush.bf16.msra.mxu0 %v977
          %991 = vmatmul.bf16.gmra.mxu0 %v770
          %v992 = vpop.f32.mrf.mxu0
          %v993 = vadd.f32 0.0, %v992
          %v994 = vpop.f32.mrf.mxu0
          %v995 = vadd.f32 0.0, %v994
          %996 = vmatmul.bf16.gmra.mxu0 %v773
          %v997 = vpop.f32.mrf.mxu0
          %v998 = vadd.f32 0.0, %v997
          %v999 = vpop.f32.mrf.mxu0
          %v1000 = vadd.f32 0.0, %v999
          %1001 = vdwg.mxu0
          %v1002 = vld [vmem:[%s10] sm:$0xf]
          %v1003 = vld [vmem:[%s10 + $0x4] sm:$0xf]
          %v1004 = vld [vmem:[%s10 + $0x8] sm:$0xf]
          %v1005 = vld [vmem:[%s10 + $0xc] sm:$0xf]
          %v1006 = vld [vmem:[%s10 + $0x10] sm:$0xf]
          %v1007 = vld [vmem:[%s10 + $0x14] sm:$0xf]
          %v1014 = vunpack.c.l.b16 %v1002
          %v1015 = vunpack.c.l.b16 %v1003
          %v1016 = vunpack.c.l.b16 %v1004
          %v1017 = vunpack.c.l.b16 %v1005
          %v1018 = vunpack.c.l.b16 %v1006
          %v1019 = vunpack.c.l.b16 %v1007
          %v1020 = vpack.c.b16 %v1015, %v1014
          %v1021 = vpack.c.b16 %v1017, %v1016
          %v1022 = vpack.c.b16 %v1019, %v1018
          %1026 = vmatpush.bf16.msra.mxu0 0
          %1027 = vmatpush.bf16.msra.mxu0 0
          %1028 = vmatpush.bf16.msra.mxu0 0
          %1029 = vmatpush.bf16.msra.mxu0 0
          %1030 = vmatpush.bf16.msra.mxu0 0
          %1031 = vmatpush.bf16.msra.mxu0 %v1022
          %1032 = vmatpush.bf16.msra.mxu0 %v1021
          %1033 = vmatpush.bf16.msra.mxu0 %v1020
          %1034 = vmatmul.bf16.gmra.mxu0 %v770
          %v1035 = vpop.f32.mrf.mxu0
          %v1036 = vadd.f32 0.0, %v1035
          %v1037 = vpop.f32.mrf.mxu0
          %v1038 = vadd.f32 0.0, %v1037
          %1039 = vmatmul.bf16.gmra.mxu0 %v773
          %v1040 = vpop.f32.mrf.mxu0
          %v1041 = vadd.f32 0.0, %v1040
          %v1042 = vpop.f32.mrf.mxu0
          %v1043 = vadd.f32 0.0, %v1042
          %1044 = vdwg.mxu0
          %v1045 = vld [vmem:[%s18] sm:$0xff]
          %v1046 = vld [vmem:[%s18 + $0x8] sm:$0xff]
          %v1047 = vld [vmem:[%s18 + $0x10] sm:$0xff]
          %v1048 = vld [vmem:[%s18 + $0x18] sm:$0xff]
          %v1049 = vld [vmem:[%s19] sm:$0xff]
          %v1050 = vld [vmem:[%s19 + $0x8] sm:$0xff]
          %v1051 = vld [vmem:[%s19 + $0x10] sm:$0xff]
          %v1052 = vld [vmem:[%s19 + $0x18] sm:$0xff]
          %v1053 = vmul.f32 %v993, %v1045
          %v1054 = vmul.f32 %v995, %v1046
          %v1055 = vmul.f32 %v998, %v1047
          %v1056 = vmul.f32 %v1000, %v1048
          %v1057 = vmul.f32 %v1036, %v1049
          %v1058 = vmul.f32 %v1038, %v1050
          %v1059 = vmul.f32 %v1041, %v1051
          %v1060 = vmul.f32 %v1043, %v1052
          %v1061 = vsub.f32 %v1053, %v1057
          %v1062 = vsub.f32 %v1054, %v1058
          %v1063 = vsub.f32 %v1055, %v1059
          %v1064 = vsub.f32 %v1056, %v1060
          %v1065 = vmul.f32 %v993, %v1049
          %v1066 = vmul.f32 %v995, %v1050
          %v1067 = vmul.f32 %v998, %v1051
          %v1068 = vmul.f32 %v1000, %v1052
          %v1069 = vmul.f32 %v1036, %v1045
          %v1070 = vmul.f32 %v1038, %v1046
          %v1071 = vmul.f32 %v1041, %v1047
          %v1072 = vmul.f32 %v1043, %v1048
          %v1073 = vadd.f32 %v1065, %v1069
          %v1074 = vadd.f32 %v1066, %v1070
          %v1075 = vadd.f32 %v1067, %v1071
          %v1076 = vadd.f32 %v1068, %v1072
          %1081 = vrot.lane.b32.xlu0 %v1061, 8
          %v1082 = vpop.permute.xlu0 %1081
          %1083 = vrot.lane.b32.xlu0 %v1062, 8
          %v1084 = vpop.permute.xlu0 %1083
          %1085 = vrot.lane.b32.xlu0 %v1063, 8
          %v1086 = vpop.permute.xlu0 %1085
          %1087 = vrot.lane.b32.xlu0 %v1064, 8
          %v1088 = vpop.permute.xlu0 %1087
          %1097 = vrot.lane.b32.xlu0 %v1073, 12
          %v1098 = vpop.permute.xlu0 %1097
          %1099 = vrot.lane.b32.xlu0 %v1074, 12
          %v1100 = vpop.permute.xlu0 %1099
          %1101 = vrot.lane.b32.xlu0 %v1075, 12
          %v1102 = vpop.permute.xlu0 %1101
          %1103 = vrot.lane.b32.xlu0 %v1076, 12
          %v1104 = vpop.permute.xlu0 %1103
          %vm1109 = vcmask 64512
          %v1110 = vsel %vm1109, 0.0, %v1082
          %v1111 = vsel %vm1109, 0.0, %v1084
          %v1112 = vsel %vm1109, 0.0, %v1086
          %v1113 = vsel %vm1109, 0.0, %v1088
          %vm1114 = vcmask 97280
          %v1115 = vsel %vm1114, %v1110, %v1098
          %v1116 = vsel %vm1114, %v1111, %v1100
          %v1117 = vsel %vm1114, %v1112, %v1102
          %v1118 = vsel %vm1114, %v1113, %v1104
          %v1119 = vld [vmem:[%s13] sm:$0xf]
          %v1120 = vld [vmem:[%s13 + $0x4] sm:$0xf]
          %v1121 = vld [vmem:[%s13 + $0x8] sm:$0xf]
          %v1122 = vld [vmem:[%s13 + $0xc] sm:$0xf]
          %v1127 = vunpack.c.l.b16 %v1119
          %v1128 = vunpack.c.l.b16 %v1120
          %v1129 = vunpack.c.l.b16 %v1121
          %v1130 = vunpack.c.l.b16 %v1122
          %v1131 = vpack.c.b16 %v1128, %v1127
          %v1132 = vpack.c.b16 %v1130, %v1129
          %v1136 = vsel %vm847, %v957, 0
          %v1139 = vsel %vm847, %v958, 0
          %1141 = vmatpush.bf16.msra.mxu0 0
          %1142 = vmatpush.bf16.msra.mxu0 0
          %1143 = vmatpush.bf16.msra.mxu0 0
          %1144 = vmatpush.bf16.msra.mxu0 0
          %1145 = vmatpush.bf16.msra.mxu0 0
          %1146 = vmatpush.bf16.msra.mxu0 0
          %1147 = vmatpush.bf16.msra.mxu0 %v1132
          %1148 = vmatpush.bf16.msra.mxu0 %v1131
          %1149 = vmatmul.bf16.gmra.mxu0 %v1136
          %v1150 = vpop.f32.mrf.mxu0
          %v1151 = vadd.f32 %v1115, %v1150
          %v1152 = vpop.f32.mrf.mxu0
          %v1153 = vadd.f32 %v1116, %v1152
          %1154 = vmatmul.bf16.gmra.mxu0 %v1139
          %v1155 = vpop.f32.mrf.mxu0
          %v1156 = vadd.f32 %v1117, %v1155
          %v1157 = vpop.f32.mrf.mxu0
          %v1158 = vadd.f32 %v1118, %v1157
          %1159 = vdwg.mxu0
          %v1160 = vpack.c.bf16 %v1151, %v1151
          %v1161 = vpack.c.bf16 %v1153, %v1153
          %v1162 = vpack.c.bf16 %v1156, %v1156
          %v1163 = vpack.c.bf16 %v1158, %v1158
          %vm1164 = vcmask 125952
          %1165 = vst.msk [vmem:[#allocation2] sm:$0xf] %vm1164, %v1160
          %1166 = vst.msk [vmem:[#allocation2 + $0x4] sm:$0xf] %vm1164, %v1161
          %1167 = vst.msk [vmem:[#allocation2 + $0x8] sm:$0xf] %vm1164, %v1162
          %1168 = vst.msk [vmem:[#allocation2 + $0xc] sm:$0xf] %vm1164, %v1163
          %v1169 = vld [vmem:[%s14] sm:$0xf]
          %v1170 = vld [vmem:[%s14 + $0x4] sm:$0xf]
          %v1171 = vld [vmem:[%s14 + $0x8] sm:$0xf]
          %v1172 = vld [vmem:[%s14 + $0xc] sm:$0xf]
          %v1177 = vunpack.c.l.b16 %v1169
          %v1178 = vunpack.c.l.b16 %v1170
          %v1179 = vunpack.c.l.b16 %v1171
          %v1180 = vunpack.c.l.b16 %v1172
          %v1181 = vpack.c.b16 %v1178, %v1177
          %v1182 = vpack.c.b16 %v1180, %v1179
          %1185 = vmatpush.bf16.msra.mxu0 0
          %1186 = vmatpush.bf16.msra.mxu0 0
          %1187 = vmatpush.bf16.msra.mxu0 0
          %1188 = vmatpush.bf16.msra.mxu0 0
          %1189 = vmatpush.bf16.msra.mxu0 0
          %1190 = vmatpush.bf16.msra.mxu0 0
          %1191 = vmatpush.bf16.msra.mxu0 %v1182
          %1192 = vmatpush.bf16.msra.mxu0 %v1181
          %1193 = vmatmul.bf16.gmra.mxu0 %v1136
          %v1194 = vpop.f32.mrf.mxu0
          %v1195 = vadd.f32 0.0, %v1194
          %v1196 = vpop.f32.mrf.mxu0
          %v1197 = vadd.f32 0.0, %v1196
          %1198 = vmatmul.bf16.gmra.mxu0 %v1139
          %v1199 = vpop.f32.mrf.mxu0
          %v1200 = vadd.f32 0.0, %v1199
          %v1201 = vpop.f32.mrf.mxu0
          %v1202 = vadd.f32 0.0, %v1201
          %1203 = vdwg.mxu0
          %v1204 = vpack.c.bf16 %v1195, %v1195
          %v1205 = vpack.c.bf16 %v1197, %v1197
          %v1206 = vpack.c.bf16 %v1200, %v1200
          %v1207 = vpack.c.bf16 %v1202, %v1202
          %1208 = vst.msk [vmem:[#allocation3] sm:$0xf] %vm1164, %v1204
          %1209 = vst.msk [vmem:[#allocation3 + $0x4] sm:$0xf] %vm1164, %v1205
          %1210 = vst.msk [vmem:[#allocation3 + $0x8] sm:$0xf] %vm1164, %v1206
          %1211 = vst.msk [vmem:[#allocation3 + $0xc] sm:$0xf] %vm1164, %v1207
          %s1212 = scalar_lea.vmem %s13, 16
          %v1213 = vld [vmem:[%s1212] sm:$0xf]
          %v1214 = vld [vmem:[%s1212 + $0x4] sm:$0xf]
          %v1215 = vld [vmem:[%s1212 + $0x8] sm:$0xf]
          %v1216 = vld [vmem:[%s1212 + $0xc] sm:$0xf]
          %v1221 = vunpack.c.l.b16 %v1213
          %v1222 = vunpack.c.l.b16 %v1214
          %v1223 = vunpack.c.l.b16 %v1215
          %v1224 = vunpack.c.l.b16 %v1216
          %v1225 = vpack.c.b16 %v1222, %v1221
          %v1226 = vpack.c.b16 %v1224, %v1223
          %1229 = vmatpush.bf16.msra.mxu0 0
          %1230 = vmatpush.bf16.msra.mxu0 0
          %1231 = vmatpush.bf16.msra.mxu0 0
          %1232 = vmatpush.bf16.msra.mxu0 0
          %1233 = vmatpush.bf16.msra.mxu0 0
          %1234 = vmatpush.bf16.msra.mxu0 0
          %1235 = vmatpush.bf16.msra.mxu0 %v1226
          %1236 = vmatpush.bf16.msra.mxu0 %v1225
          %1237 = vmatmul.bf16.gmra.mxu0 %v1136
          %v1238 = vpop.f32.mrf.mxu0
          %v1239 = vadd.f32 %v1115, %v1238
          %v1240 = vpop.f32.mrf.mxu0
          %v1241 = vadd.f32 %v1116, %v1240
          %1242 = vmatmul.bf16.gmra.mxu0 %v1139
          %v1243 = vpop.f32.mrf.mxu0
          %v1244 = vadd.f32 %v1117, %v1243
          %v1245 = vpop.f32.mrf.mxu0
          %v1246 = vadd.f32 %v1118, %v1245
          %1247 = vdwg.mxu0
          %v1248 = vpack.c.bf16 %v1239, %v1239
          %v1249 = vpack.c.bf16 %v1241, %v1241
          %v1250 = vpack.c.bf16 %v1244, %v1244
          %v1251 = vpack.c.bf16 %v1246, %v1246
          %s1252 = scalar_lea.vmem [#allocation2], 16
          %1253 = vst.msk [vmem:[%s1252] sm:$0xf] %vm1164, %v1248
          %1254 = vst.msk [vmem:[%s1252 + $0x4] sm:$0xf] %vm1164, %v1249
          %1255 = vst.msk [vmem:[%s1252 + $0x8] sm:$0xf] %vm1164, %v1250
          %1256 = vst.msk [vmem:[%s1252 + $0xc] sm:$0xf] %vm1164, %v1251
          %s1257 = scalar_lea.vmem %s14, 16
          %v1258 = vld [vmem:[%s1257] sm:$0xf]
          %v1259 = vld [vmem:[%s1257 + $0x4] sm:$0xf]
          %v1260 = vld [vmem:[%s1257 + $0x8] sm:$0xf]
          %v1261 = vld [vmem:[%s1257 + $0xc] sm:$0xf]
          %v1266 = vunpack.c.l.b16 %v1258
          %v1267 = vunpack.c.l.b16 %v1259
          %v1268 = vunpack.c.l.b16 %v1260
          %v1269 = vunpack.c.l.b16 %v1261
          %v1270 = vpack.c.b16 %v1267, %v1266
          %v1271 = vpack.c.b16 %v1269, %v1268
          %1274 = vmatpush.bf16.msra.mxu0 0
          %1275 = vmatpush.bf16.msra.mxu0 0
          %1276 = vmatpush.bf16.msra.mxu0 0
          %1277 = vmatpush.bf16.msra.mxu0 0
          %1278 = vmatpush.bf16.msra.mxu0 0
          %1279 = vmatpush.bf16.msra.mxu0 0
          %1280 = vmatpush.bf16.msra.mxu0 %v1271
          %1281 = vmatpush.bf16.msra.mxu0 %v1270
          %1282 = vmatmul.bf16.gmra.mxu0 %v1136
          %v1283 = vpop.f32.mrf.mxu0
          %v1284 = vadd.f32 0.0, %v1283
          %v1285 = vpop.f32.mrf.mxu0
          %v1286 = vadd.f32 0.0, %v1285
          %1287 = vmatmul.bf16.gmra.mxu0 %v1139
          %v1288 = vpop.f32.mrf.mxu0
          %v1289 = vadd.f32 0.0, %v1288
          %v1290 = vpop.f32.mrf.mxu0
          %v1291 = vadd.f32 0.0, %v1290
          %1292 = vdwg.mxu0
          %v1293 = vpack.c.bf16 %v1284, %v1284
          %v1294 = vpack.c.bf16 %v1286, %v1286
          %v1295 = vpack.c.bf16 %v1289, %v1289
          %v1296 = vpack.c.bf16 %v1291, %v1291
          %s1297 = scalar_lea.vmem [#allocation3], 16
          %1298 = vst.msk [vmem:[%s1297] sm:$0xf] %vm1164, %v1293
          %1299 = vst.msk [vmem:[%s1297 + $0x4] sm:$0xf] %vm1164, %v1294
          %1300 = vst.msk [vmem:[%s1297 + $0x8] sm:$0xf] %vm1164, %v1295
          %1301 = vst.msk [vmem:[%s1297 + $0xc] sm:$0xf] %vm1164, %v1296
          %s1302 = scalar_lea.vmem %s13, 32
          %v1303 = vld [vmem:[%s1302] sm:$0xf]
          %v1304 = vld [vmem:[%s1302 + $0x4] sm:$0xf]
          %v1305 = vld [vmem:[%s1302 + $0x8] sm:$0xf]
          %v1306 = vld [vmem:[%s1302 + $0xc] sm:$0xf]
          %v1311 = vunpack.c.l.b16 %v1303
          %v1312 = vunpack.c.l.b16 %v1304
          %v1313 = vunpack.c.l.b16 %v1305
          %v1314 = vunpack.c.l.b16 %v1306
          %v1315 = vpack.c.b16 %v1312, %v1311
          %v1316 = vpack.c.b16 %v1314, %v1313
          %1319 = vmatpush.bf16.msra.mxu0 0
          %1320 = vmatpush.bf16.msra.mxu0 0
          %1321 = vmatpush.bf16.msra.mxu0 0
          %1322 = vmatpush.bf16.msra.mxu0 0
          %1323 = vmatpush.bf16.msra.mxu0 0
          %1324 = vmatpush.bf16.msra.mxu0 0
          %1325 = vmatpush.bf16.msra.mxu0 %v1316
          %1326 = vmatpush.bf16.msra.mxu0 %v1315
          %1327 = vmatmul.bf16.gmra.mxu0 %v1136
          %v1328 = vpop.f32.mrf.mxu0
          %v1329 = vadd.f32 %v1115, %v1328
          %v1330 = vpop.f32.mrf.mxu0
          %v1331 = vadd.f32 %v1116, %v1330
          %1332 = vmatmul.bf16.gmra.mxu0 %v1139
          %v1333 = vpop.f32.mrf.mxu0
          %v1334 = vadd.f32 %v1117, %v1333
          %v1335 = vpop.f32.mrf.mxu0
          %v1336 = vadd.f32 %v1118, %v1335
          %1337 = vdwg.mxu0
          %v1338 = vpack.c.bf16 %v1329, %v1329
          %v1339 = vpack.c.bf16 %v1331, %v1331
          %v1340 = vpack.c.bf16 %v1334, %v1334
          %v1341 = vpack.c.bf16 %v1336, %v1336
          %s1342 = scalar_lea.vmem [#allocation2], 32
          %1343 = vst.msk [vmem:[%s1342] sm:$0xf] %vm1164, %v1338
          %1344 = vst.msk [vmem:[%s1342 + $0x4] sm:$0xf] %vm1164, %v1339
          %1345 = vst.msk [vmem:[%s1342 + $0x8] sm:$0xf] %vm1164, %v1340
          %1346 = vst.msk [vmem:[%s1342 + $0xc] sm:$0xf] %vm1164, %v1341
          %s1347 = scalar_lea.vmem %s14, 32
          %v1348 = vld [vmem:[%s1347] sm:$0xf]
          %v1349 = vld [vmem:[%s1347 + $0x4] sm:$0xf]
          %v1350 = vld [vmem:[%s1347 + $0x8] sm:$0xf]
          %v1351 = vld [vmem:[%s1347 + $0xc] sm:$0xf]
          %v1356 = vunpack.c.l.b16 %v1348
          %v1357 = vunpack.c.l.b16 %v1349
          %v1358 = vunpack.c.l.b16 %v1350
          %v1359 = vunpack.c.l.b16 %v1351
          %v1360 = vpack.c.b16 %v1357, %v1356
          %v1361 = vpack.c.b16 %v1359, %v1358
          %1364 = vmatpush.bf16.msra.mxu0 0
          %1365 = vmatpush.bf16.msra.mxu0 0
          %1366 = vmatpush.bf16.msra.mxu0 0
          %1367 = vmatpush.bf16.msra.mxu0 0
          %1368 = vmatpush.bf16.msra.mxu0 0
          %1369 = vmatpush.bf16.msra.mxu0 0
          %1370 = vmatpush.bf16.msra.mxu0 %v1361
          %1371 = vmatpush.bf16.msra.mxu0 %v1360
          %1372 = vmatmul.bf16.gmra.mxu0 %v1136
          %v1373 = vpop.f32.mrf.mxu0
          %v1374 = vadd.f32 0.0, %v1373
          %v1375 = vpop.f32.mrf.mxu0
          %v1376 = vadd.f32 0.0, %v1375
          %1377 = vmatmul.bf16.gmra.mxu0 %v1139
          %v1378 = vpop.f32.mrf.mxu0
          %v1379 = vadd.f32 0.0, %v1378
          %v1380 = vpop.f32.mrf.mxu0
          %v1381 = vadd.f32 0.0, %v1380
          %1382 = vdwg.mxu0
          %v1383 = vpack.c.bf16 %v1374, %v1374
          %v1384 = vpack.c.bf16 %v1376, %v1376
          %v1385 = vpack.c.bf16 %v1379, %v1379
          %v1386 = vpack.c.bf16 %v1381, %v1381
          %s1387 = scalar_lea.vmem [#allocation3], 32
          %1388 = vst.msk [vmem:[%s1387] sm:$0xf] %vm1164, %v1383
          %1389 = vst.msk [vmem:[%s1387 + $0x4] sm:$0xf] %vm1164, %v1384
          %1390 = vst.msk [vmem:[%s1387 + $0x8] sm:$0xf] %vm1164, %v1385
          %1391 = vst.msk [vmem:[%s1387 + $0xc] sm:$0xf] %vm1164, %v1386
        $region104: #{tpu_custom_call.1} parent=99 // pred_fallthru
          _
        %s1392 = smul.u32 %s44, 16
        %s1393 = sshra.s32 %s1392, 3
        %s1394 = sand.u32 %s1392, 7
        %s1395 = smul.addr %s1393, 4
        %s1396 = scalar_lea.vmem %s711, %s1395
        %v1397 = vld [vmem:[%s1396] sm:$0xf]
        %v1398 = vld [vmem:[%s1396 + $0x4] sm:$0xf]
        %v1399 = vld [vmem:[%s1] sm:$0xf]
        %v1400 = vld [vmem:[%s1 + $0x4] sm:$0xf]
        %v1401 = vld [vmem:[%s1 + $0x8] sm:$0xf]
        %v1402 = vld [vmem:[%s1 + $0xc] sm:$0xf]
        %v1403 = vld [vmem:[%s1 + $0x10] sm:$0xf]
        %v1404 = vld [vmem:[%s1 + $0x14] sm:$0xf]
        %v1407 = vunpack.c.l.b16 %v1397
        %v1408 = vunpack.c.l.b16 %v1398
        %v1409 = vpack.c.b16 %v1408, %v1407
        %v1416 = vunpack.c.l.b16 %v1399
        %v1417 = vunpack.c.l.b16 %v1400
        %v1418 = vunpack.c.l.b16 %v1401
        %v1419 = vunpack.c.l.b16 %v1402
        %v1420 = vunpack.c.l.b16 %v1403
        %v1421 = vunpack.c.l.b16 %v1404
        %v1422 = vpack.c.b16 %v1417, %v1416
        %v1423 = vpack.c.b16 %v1419, %v1418
        %v1424 = vpack.c.b16 %v1421, %v1420
        %vm1428 = vcmask 392192
        %v1430 = vsel %vm1428, %v1409, 0
        %1432 = vmatpush.bf16.msra.mxu0 0
        %1433 = vmatpush.bf16.msra.mxu0 0
        %1434 = vmatpush.bf16.msra.mxu0 0
        %1435 = vmatpush.bf16.msra.mxu0 0
        %1436 = vmatpush.bf16.msra.mxu0 0
        %1437 = vmatpush.bf16.msra.mxu0 %v1424
        %1438 = vmatpush.bf16.msra.mxu0 %v1423
        %1439 = vmatpush.bf16.msra.mxu0 %v1422
        %1440 = vmatmul.bf16.gmra.mxu0 %v1430
        %v1441 = vpop.f32.mrf.mxu0
        %v1442 = vadd.f32 0.0, %v1441
        %v1443 = vpop.f32.mrf.mxu0
        %v1444 = vadd.f32 0.0, %v1443
        %1445 = vdwg.mxu0
        %v1446 = vld [vmem:[%s5] sm:$0x1]
        %v1447 = vld [vmem:[%s6] sm:$0x1]
        %vm1448 = vcmask 195584
        %v1449 = vsel %vm1448, %v1442, 0.0
        %1450 = vadd.xlane.f32.xlu0 %v1449
        %v1451 = vpop.xlane.xlu0 %1450
        %v1452 = vsel %vm1448, %v1444, 0.0
        %1453 = vadd.xlane.f32.xlu0 %v1452
        %v1454 = vpop.xlane.xlu0 %1453
        %v1455 = vrcp.pop 24.0
        %v1456 = vmul.f32 24.0, %v1455
        %v1457 = vsub.f32 1.0, %v1456
        %v1458 = vmul.f32 %v1455, %v1457
        %v1459 = vadd.f32 %v1455, %v1458
        %vm1460 = vweird.f32 %v1455
        %v1461 = vsel %vm1460, %v1455, %v1459
        %v1462 = vmul.f32 %v1451, %v1461
        %v1463 = vmul.f32 %v1454, %v1461
        %v1464 = vsub.f32 %v1442, %v1462
        %v1465 = vsub.f32 %v1444, %v1463
        %v1466 = vmul.f32 %v1464, %v1464
        %v1467 = vmul.f32 %v1465, %v1465
        %v1468 = vsel %vm1448, %v1466, 0.0
        %1469 = vadd.xlane.f32.xlu0 %v1468
        %v1470 = vpop.xlane.xlu0 %1469
        %v1471 = vsel %vm1448, %v1467, 0.0
        %1472 = vadd.xlane.f32.xlu0 %v1471
        %v1473 = vpop.xlane.xlu0 %1472
        %v1474 = vmul.f32 %v1470, %v1461
        %v1475 = vmul.f32 %v1473, %v1461
        %v1476 = vadd.f32 %v1474, 1e-05
        %v1477 = vadd.f32 %v1475, 1e-05
        %v1478 = vrsqrt.pop %v1476
        %v1479 = vmul.f32 %v1478, %v1476
        %v1480 = vmul.f32 %v1479, %v1478
        %v1481 = vmul.f32 0.5, %v1480
        %v1482 = vsub.f32 1.5, %v1481
        %v1483 = vmul.f32 %v1478, %v1482
        %vm1484 = vweird.f32 %v1476
        %vm1485 = vweird.f32 %v1478
        %vm1486 = vmor %vm1484, %vm1485
        %v1487 = vsel %vm1486, %v1478, %v1483
        %v1488 = vrsqrt.pop %v1477
        %v1489 = vmul.f32 %v1488, %v1477
        %v1490 = vmul.f32 %v1489, %v1488
        %v1491 = vmul.f32 0.5, %v1490
        %v1492 = vsub.f32 1.5, %v1491
        %v1493 = vmul.f32 %v1488, %v1492
        %vm1494 = vweird.f32 %v1477
        %vm1495 = vweird.f32 %v1488
        %vm1496 = vmor %vm1494, %vm1495
        %v1497 = vsel %vm1496, %v1488, %v1493
        %v1498 = vmul.f32 %v1464, %v1487
        %v1499 = vmul.f32 %v1465, %v1497
        %v1501 = vperm.slane %v1446, 0
        %v1503 = vmul.f32 %v1498, %v1501
        %v1504 = vmul.f32 %v1499, %v1501
        %v1506 = vperm.slane %v1447, 0
        %v1508 = vadd.f32 %v1503, %v1506
        %v1509 = vadd.f32 %v1504, %v1506
        %v1510 = vpack.c.bf16 %v1509, %v1508
        %v1511 = vld [vmem:[%s2] sm:$0xf]
        %v1512 = vld [vmem:[%s2 + $0x4] sm:$0xf]
        %v1513 = vld [vmem:[%s2 + $0x8] sm:$0xf]
        %v1517 = vunpack.c.l.b16 %v1511
        %v1518 = vunpack.c.l.b16 %v1512
        %v1519 = vunpack.c.l.b16 %v1513
        %v1520 = vpack.c.b16 %v1518, %v1517
        %v1521 = vpack.c.b16 %v1519, %v1519
        %v1524 = vsel %vm1448, %v1510, 0
        %vm1526 = vcmask 1043456
        %v1528 = vsel %vm1526, %v1521, 0
        %1530 = vmatpush.bf16.msra.mxu0 0
        %1531 = vmatpush.bf16.msra.mxu0 0
        %1532 = vmatpush.bf16.msra.mxu0 0
        %1533 = vmatpush.bf16.msra.mxu0 0
        %1534 = vmatpush.bf16.msra.mxu0 0
        %1535 = vmatpush.bf16.msra.mxu0 0
        %1536 = vmatpush.bf16.msra.mxu0 %v1528
        %1537 = vmatpush.bf16.msra.mxu0 %v1520
        %1538 = vmatmul.bf16.gmra.mxu0 %v1524
        %v1539 = vpop.f32.mrf.mxu0
        %v1540 = vadd.f32 0.0, %v1539
        %v1541 = vpop.f32.mrf.mxu0
        %v1542 = vadd.f32 0.0, %v1541
        %1543 = vdwg.mxu0
        %v1544 = vld [vmem:[%s3] sm:$0xf]
        %v1545 = vld [vmem:[%s3 + $0x4] sm:$0xf]
        %v1546 = vld [vmem:[%s3 + $0x8] sm:$0xf]
        %v1550 = vunpack.c.l.b16 %v1544
        %v1551 = vunpack.c.l.b16 %v1545
        %v1552 = vunpack.c.l.b16 %v1546
        %v1553 = vpack.c.b16 %v1551, %v1550
        %v1554 = vpack.c.b16 %v1552, %v1552
        %v1557 = vsel %vm1526, %v1554, 0
        %1559 = vmatpush.bf16.msra.mxu0 0
        %1560 = vmatpush.bf16.msra.mxu0 0
        %1561 = vmatpush.bf16.msra.mxu0 0
        %1562 = vmatpush.bf16.msra.mxu0 0
        %1563 = vmatpush.bf16.msra.mxu0 0
        %1564 = vmatpush.bf16.msra.mxu0 0
        %1565 = vmatpush.bf16.msra.mxu0 %v1557
        %1566 = vmatpush.bf16.msra.mxu0 %v1553
        %1567 = vmatmul.bf16.gmra.mxu0 %v1524
        %v1568 = vpop.f32.mrf.mxu0
        %v1569 = vadd.f32 0.0, %v1568
        %v1570 = vpop.f32.mrf.mxu0
        %v1571 = vadd.f32 0.0, %v1570
        %1572 = vdwg.mxu0
        %v1573 = vld [vmem:[%s4] sm:$0xf]
        %v1574 = vld [vmem:[%s4 + $0x4] sm:$0xf]
        %v1575 = vld [vmem:[%s4 + $0x8] sm:$0xf]
        %v1579 = vunpack.c.l.b16 %v1573
        %v1580 = vunpack.c.l.b16 %v1574
        %v1581 = vunpack.c.l.b16 %v1575
        %v1582 = vpack.c.b16 %v1580, %v1579
        %v1583 = vpack.c.b16 %v1581, %v1581
        %v1586 = vsel %vm1526, %v1583, 0
        %1588 = vmatpush.bf16.msra.mxu0 0
        %1589 = vmatpush.bf16.msra.mxu0 0
        %1590 = vmatpush.bf16.msra.mxu0 0
        %1591 = vmatpush.bf16.msra.mxu0 0
        %1592 = vmatpush.bf16.msra.mxu0 0
        %1593 = vmatpush.bf16.msra.mxu0 0
        %1594 = vmatpush.bf16.msra.mxu0 %v1586
        %1595 = vmatpush.bf16.msra.mxu0 %v1582
        %1596 = vmatmul.bf16.gmra.mxu0 %v1524
        %v1597 = vpop.f32.mrf.mxu0
        %v1598 = vadd.f32 0.0, %v1597
        %v1599 = vpop.f32.mrf.mxu0
        %v1600 = vadd.f32 0.0, %v1599
        %1601 = vdwg.mxu0
        %v1602 = vld [vmem:[%s716] sm:$0xff]
        %v1603 = vld [vmem:[%s716 + $0x8] sm:$0xff]
        %v1604 = vld [vmem:[%s722] sm:$0xff]
        %v1605 = vld [vmem:[%s722 + $0x8] sm:$0xff]
        %v1606 = vmul.f32 %v1569, %v1602
        %v1607 = vmul.f32 %v1571, %v1603
        %v1608 = vmul.f32 %v1598, %v1604
        %v1609 = vmul.f32 %v1600, %v1605
        %v1610 = vsub.f32 %v1606, %v1608
        %v1611 = vsub.f32 %v1607, %v1609
        %v1612 = vmul.f32 %v1569, %v1604
        %v1613 = vmul.f32 %v1571, %v1605
        %v1614 = vmul.f32 %v1598, %v1602
        %v1615 = vmul.f32 %v1600, %v1603
        %v1616 = vadd.f32 %v1612, %v1614
        %v1617 = vadd.f32 %v1613, %v1615
        %v1618 = vlaneseq
        %v1619 = vshrl.u32 %v1618, 7
        %v1620 = vadd.s32 %v1619, 8
        %v1621 = vstv %s1392
        %v1622 = vadd.s32 %v1619, %v1621
        %v1623 = vadd.s32 %v1620, %v1621
        %v1624 = vlaneseq
        %v1625 = vand.u32 %v1624, 127
        %vm1626 = vcmp.ge.s32.totalorder %v1622, %v1625
        %vm1627 = vcmp.ge.s32.totalorder %v1623, %v1625
        %v1628 = vsel %vm1626, 0.0, -1e+30
        %v1629 = vsel %vm1627, 0.0, -1e+30
        %1632 = vrot.lane.b32.xlu0 %v1610, 8
        %v1633 = vpop.permute.xlu0 %1632
        %1634 = vrot.lane.b32.xlu0 %v1611, 8
        %v1635 = vpop.permute.xlu0 %1634
        %1640 = vrot.lane.b32.xlu0 %v1616, 12
        %v1641 = vpop.permute.xlu0 %1640
        %1642 = vrot.lane.b32.xlu0 %v1617, 12
        %v1643 = vpop.permute.xlu0 %1642
        %vm1646 = vcmask 64512
        %v1647 = vsel %vm1646, %v1540, %v1633
        %v1648 = vsel %vm1646, %v1542, %v1635
        %vm1649 = vcmask 97280
        %v1650 = vsel %vm1649, %v1647, %v1641
        %v1651 = vsel %vm1649, %v1648, %v1643
        %v1652 = vpack.c.bf16 %v1651, %v1650
        %v1653 = vld [vmem:[#allocation2] sm:$0xf]
        %v1654 = vld [vmem:[#allocation2 + $0x4] sm:$0xf]
        %v1655 = vld [vmem:[#allocation2 + $0x8] sm:$0xf]
        %v1656 = vld [vmem:[#allocation2 + $0xc] sm:$0xf]
        %v1661 = vunpack.c.l.b16 %v1653
        %v1662 = vunpack.c.l.b16 %v1654
        %v1663 = vunpack.c.l.b16 %v1655
        %v1664 = vunpack.c.l.b16 %v1656
        %v1665 = vpack.c.b16 %v1662, %v1661
        %v1666 = vpack.c.b16 %v1664, %v1663
        %vm1667 = vcmask 130048
        %v1669 = vsel %vm1667, %v1652, 0
        %v1672 = vsel %vm1667, %v1665, 0
        %v1675 = vsel %vm1667, %v1666, 0
        %1677 = vmatpush.bf16.xpose.msra.mxu0 0
        %1678 = vmatpush.bf16.xpose.msra.mxu0 0
        %1679 = vmatpush.bf16.xpose.msra.mxu0 0
        %1680 = vmatpush.bf16.xpose.msra.mxu0 0
        %1681 = vmatpush.bf16.xpose.msra.mxu0 0
        %1682 = vmatpush.bf16.xpose.msra.mxu0 0
        %1683 = vmatpush.bf16.xpose.msra.mxu0 %v1675
        %1684 = vmatpush.bf16.xpose.msra.mxu0 %v1672
        %1685 = vmatmul.bf16.gmra.mxu0 %v1669
        %v1686 = vpop.f32.mrf.mxu0
        %v1687 = vadd.f32 %v1628, %v1686
        %v1688 = vpop.f32.mrf.mxu0
        %v1689 = vadd.f32 %v1629, %v1688
        %1690 = vdwg.mxu0
        %vm1691 = vcmask 261120
        %v1692 = vsel %vm1691, %v1687, -inf
        %1693 = vmax.xlane.f32.xlu0 %v1692
        %v1694 = vpop.xlane.xlu0 %1693
        %v1695 = vsel %vm1691, %v1689, -inf
        %1696 = vmax.xlane.f32.xlu0 %v1695
        %v1697 = vpop.xlane.xlu0 %1696
        %v1698 = vsub.f32 %v1687, %v1694
        %v1699 = vsub.f32 %v1689, %v1697
        %v1700 = vmul.f32 %v1698, 1.442695
        %v1701 = vpow.pop %v1700
        %v1702 = vmul.f32 %v1699, 1.442695
        %v1703 = vpow.pop %v1702
        %v1704 = vsel %vm1691, %v1701, 0.0
        %1705 = vadd.xlane.f32.xlu0 %v1704
        %v1706 = vpop.xlane.xlu0 %1705
        %v1707 = vsel %vm1691, %v1703, 0.0
        %1708 = vadd.xlane.f32.xlu0 %v1707
        %v1709 = vpop.xlane.xlu0 %1708
        %v1710 = vpack.c.bf16 %v1703, %v1701
        %v1711 = vld [vmem:[#allocation3] sm:$0xf]
        %v1712 = vld [vmem:[#allocation3 + $0x4] sm:$0xf]
        %v1713 = vld [vmem:[#allocation3 + $0x8] sm:$0xf]
        %v1714 = vld [vmem:[#allocation3 + $0xc] sm:$0xf]
        %v1719 = vunpack.c.l.b16 %v1711
        %v1720 = vunpack.c.l.b16 %v1712
        %v1721 = vunpack.c.l.b16 %v1713
        %v1722 = vunpack.c.l.b16 %v1714
        %v1723 = vpack.c.b16 %v1720, %v1719
        %v1724 = vpack.c.b16 %v1722, %v1721
        %v1728 = vsel %vm1691, %v1710, 0
        %1730 = vmatpush.bf16.msra.mxu0 0
        %1731 = vmatpush.bf16.msra.mxu0 0
        %1732 = vmatpush.bf16.msra.mxu0 0
        %1733 = vmatpush.bf16.msra.mxu0 0
        %1734 = vmatpush.bf16.msra.mxu0 0
        %1735 = vmatpush.bf16.msra.mxu0 0
        %1736 = vmatpush.bf16.msra.mxu0 %v1724
        %1737 = vmatpush.bf16.msra.mxu0 %v1723
        %1738 = vmatmul.bf16.gmra.mxu0 %v1728
        %v1739 = vpop.f32.mrf.mxu0
        %v1740 = vadd.f32 0.0, %v1739
        %v1741 = vpop.f32.mrf.mxu0
        %v1742 = vadd.f32 0.0, %v1741
        %1743 = vdwg.mxu0
        %v1744 = vrcp.pop %v1706
        %v1745 = vrcp.pop %v1709
        %v1746 = vmul.f32 %v1740, %v1744
        %v1747 = vmul.f32 %v1742, %v1745
        %v1748 = vpack.c.bf16 %v1746, %v1746
        %v1749 = vpack.c.bf16 %v1747, %v1747
        %vm1750 = vcmask 125952
        %1751 = vst.msk [vmem:[#allocation4] sm:$0xf] %vm1750, %v1748
        %1752 = vst.msk [vmem:[#allocation4 + $0x4] sm:$0xf] %vm1750, %v1749
        %1755 = vrot.lane.b32.xlu0 %v1540, 120
        %v1756 = vpop.permute.xlu0 %1755
        %1757 = vrot.lane.b32.xlu0 %v1542, 120
        %v1758 = vpop.permute.xlu0 %1757
        %1761 = vrot.lane.b32.xlu0 %v1610, 4
        %v1762 = vpop.permute.xlu0 %1761
        %1763 = vrot.lane.b32.xlu0 %v1611, 4
        %v1764 = vpop.permute.xlu0 %1763
        %1767 = vrot.lane.b32.xlu0 %v1616, 8
        %v1768 = vpop.permute.xlu0 %1767
        %1769 = vrot.lane.b32.xlu0 %v1617, 8
        %v1770 = vpop.permute.xlu0 %1769
        %v1773 = vsel %vm1646, %v1756, %v1762
        %v1774 = vsel %vm1646, %v1758, %v1764
        %v1775 = vsel %vm1649, %v1773, %v1768
        %v1776 = vsel %vm1649, %v1774, %v1770
        %v1777 = vpack.c.bf16 %v1776, %v1775
        %s1778 = scalar_lea.vmem [#allocation2], 16
        %v1779 = vld [vmem:[%s1778] sm:$0xf]
        %v1780 = vld [vmem:[%s1778 + $0x4] sm:$0xf]
        %v1781 = vld [vmem:[%s1778 + $0x8] sm:$0xf]
        %v1782 = vld [vmem:[%s1778 + $0xc] sm:$0xf]
        %v1787 = vunpack.c.l.b16 %v1779
        %v1788 = vunpack.c.l.b16 %v1780
        %v1789 = vunpack.c.l.b16 %v1781
        %v1790 = vunpack.c.l.b16 %v1782
        %v1791 = vpack.c.b16 %v1788, %v1787
        %v1792 = vpack.c.b16 %v1790, %v1789
        %v1794 = vsel %vm1667, %v1777, 0
        %v1797 = vsel %vm1667, %v1791, 0
        %v1800 = vsel %vm1667, %v1792, 0
        %1802 = vmatpush.bf16.xpose.msra.mxu0 0
        %1803 = vmatpush.bf16.xpose.msra.mxu0 0
        %1804 = vmatpush.bf16.xpose.msra.mxu0 0
        %1805 = vmatpush.bf16.xpose.msra.mxu0 0
        %1806 = vmatpush.bf16.xpose.msra.mxu0 0
        %1807 = vmatpush.bf16.xpose.msra.mxu0 0
        %1808 = vmatpush.bf16.xpose.msra.mxu0 %v1800
        %1809 = vmatpush.bf16.xpose.msra.mxu0 %v1797
        %1810 = vmatmul.bf16.gmra.mxu0 %v1794
        %v1811 = vpop.f32.mrf.mxu0
        %v1812 = vadd.f32 %v1628, %v1811
        %v1813 = vpop.f32.mrf.mxu0
        %v1814 = vadd.f32 %v1629, %v1813
        %1815 = vdwg.mxu0
        %v1816 = vsel %vm1691, %v1812, -inf
        %1817 = vmax.xlane.f32.xlu0 %v1816
        %v1818 = vpop.xlane.xlu0 %1817
        %v1819 = vsel %vm1691, %v1814, -inf
        %1820 = vmax.xlane.f32.xlu0 %v1819
        %v1821 = vpop.xlane.xlu0 %1820
        %v1822 = vsub.f32 %v1812, %v1818
        %v1823 = vsub.f32 %v1814, %v1821
        %v1824 = vmul.f32 %v1822, 1.442695
        %v1825 = vpow.pop %v1824
        %v1826 = vmul.f32 %v1823, 1.442695
        %v1827 = vpow.pop %v1826
        %v1828 = vsel %vm1691, %v1825, 0.0
        %1829 = vadd.xlane.f32.xlu0 %v1828
        %v1830 = vpop.xlane.xlu0 %1829
        %v1831 = vsel %vm1691, %v1827, 0.0
        %1832 = vadd.xlane.f32.xlu0 %v1831
        %v1833 = vpop.xlane.xlu0 %1832
        %v1834 = vpack.c.bf16 %v1827, %v1825
        %s1835 = scalar_lea.vmem [#allocation3], 16
        %v1836 = vld [vmem:[%s1835] sm:$0xf]
        %v1837 = vld [vmem:[%s1835 + $0x4] sm:$0xf]
        %v1838 = vld [vmem:[%s1835 + $0x8] sm:$0xf]
        %v1839 = vld [vmem:[%s1835 + $0xc] sm:$0xf]
        %v1844 = vunpack.c.l.b16 %v1836
        %v1845 = vunpack.c.l.b16 %v1837
        %v1846 = vunpack.c.l.b16 %v1838
        %v1847 = vunpack.c.l.b16 %v1839
        %v1848 = vpack.c.b16 %v1845, %v1844
        %v1849 = vpack.c.b16 %v1847, %v1846
        %v1853 = vsel %vm1691, %v1834, 0
        %1855 = vmatpush.bf16.msra.mxu0 0
        %1856 = vmatpush.bf16.msra.mxu0 0
        %1857 = vmatpush.bf16.msra.mxu0 0
        %1858 = vmatpush.bf16.msra.mxu0 0
        %1859 = vmatpush.bf16.msra.mxu0 0
        %1860 = vmatpush.bf16.msra.mxu0 0
        %1861 = vmatpush.bf16.msra.mxu0 %v1849
        %1862 = vmatpush.bf16.msra.mxu0 %v1848
        %1863 = vmatmul.bf16.gmra.mxu0 %v1853
        %v1864 = vpop.f32.mrf.mxu0
        %v1865 = vadd.f32 0.0, %v1864
        %v1866 = vpop.f32.mrf.mxu0
        %v1867 = vadd.f32 0.0, %v1866
        %1868 = vdwg.mxu0
        %v1869 = vrcp.pop %v1830
        %v1870 = vrcp.pop %v1833
        %v1871 = vmul.f32 %v1865, %v1869
        %v1872 = vmul.f32 %v1867, %v1870
        %v1873 = vpack.c.bf16 %v1871, %v1871
        %v1874 = vpack.c.bf16 %v1872, %v1872
        %1877 = vrot.lane.b32.xlu0 %v1873, 16
        %v1878 = vpop.permute.xlu0 %1877
        %1879 = vrot.lane.b32.xlu0 %v1874, 16
        %v1880 = vpop.permute.xlu0 %1879
        %vm1883 = vcmask 257152
        %1884 = vst.msk [vmem:[#allocation4] sm:$0xf] %vm1883, %v1878
        %1885 = vst.msk [vmem:[#allocation4 + $0x4] sm:$0xf] %vm1883, %v1880
        %1886 = vrot.lane.b32.xlu0 %v1540, 112
        %v1887 = vpop.permute.xlu0 %1886
        %1888 = vrot.lane.b32.xlu0 %v1542, 112
        %v1889 = vpop.permute.xlu0 %1888
        %1892 = vrot.lane.b32.xlu0 %v1616, 4
        %v1893 = vpop.permute.xlu0 %1892
        %1894 = vrot.lane.b32.xlu0 %v1617, 4
        %v1895 = vpop.permute.xlu0 %1894
        %v1898 = vsel %vm1646, %v1887, %v1610
        %v1899 = vsel %vm1646, %v1889, %v1611
        %v1900 = vsel %vm1649, %v1898, %v1893
        %v1901 = vsel %vm1649, %v1899, %v1895
        %v1902 = vpack.c.bf16 %v1901, %v1900
        %s1903 = scalar_lea.vmem [#allocation2], 32
        %v1904 = vld [vmem:[%s1903] sm:$0xf]
        %v1905 = vld [vmem:[%s1903 + $0x4] sm:$0xf]
        %v1906 = vld [vmem:[%s1903 + $0x8] sm:$0xf]
        %v1907 = vld [vmem:[%s1903 + $0xc] sm:$0xf]
        %v1912 = vunpack.c.l.b16 %v1904
        %v1913 = vunpack.c.l.b16 %v1905
        %v1914 = vunpack.c.l.b16 %v1906
        %v1915 = vunpack.c.l.b16 %v1907
        %v1916 = vpack.c.b16 %v1913, %v1912
        %v1917 = vpack.c.b16 %v1915, %v1914
        %v1919 = vsel %vm1667, %v1902, 0
        %v1922 = vsel %vm1667, %v1916, 0
        %v1925 = vsel %vm1667, %v1917, 0
        %1927 = vmatpush.bf16.xpose.msra.mxu0 0
        %1928 = vmatpush.bf16.xpose.msra.mxu0 0
        %1929 = vmatpush.bf16.xpose.msra.mxu0 0
        %1930 = vmatpush.bf16.xpose.msra.mxu0 0
        %1931 = vmatpush.bf16.xpose.msra.mxu0 0
        %1932 = vmatpush.bf16.xpose.msra.mxu0 0
        %1933 = vmatpush.bf16.xpose.msra.mxu0 %v1925
        %1934 = vmatpush.bf16.xpose.msra.mxu0 %v1922
        %1935 = vmatmul.bf16.gmra.mxu0 %v1919
        %v1936 = vpop.f32.mrf.mxu0
        %v1937 = vadd.f32 %v1628, %v1936
        %v1938 = vpop.f32.mrf.mxu0
        %v1939 = vadd.f32 %v1629, %v1938
        %1940 = vdwg.mxu0
        %v1941 = vsel %vm1691, %v1937, -inf
        %1942 = vmax.xlane.f32.xlu0 %v1941
        %v1943 = vpop.xlane.xlu0 %1942
        %v1944 = vsel %vm1691, %v1939, -inf
        %1945 = vmax.xlane.f32.xlu0 %v1944
        %v1946 = vpop.xlane.xlu0 %1945
        %v1947 = vsub.f32 %v1937, %v1943
        %v1948 = vsub.f32 %v1939, %v1946
        %v1949 = vmul.f32 %v1947, 1.442695
        %v1950 = vpow.pop %v1949
        %v1951 = vmul.f32 %v1948, 1.442695
        %v1952 = vpow.pop %v1951
        %v1953 = vsel %vm1691, %v1950, 0.0
        %1954 = vadd.xlane.f32.xlu0 %v1953
        %v1955 = vpop.xlane.xlu0 %1954
        %v1956 = vsel %vm1691, %v1952, 0.0
        %1957 = vadd.xlane.f32.xlu0 %v1956
        %v1958 = vpop.xlane.xlu0 %1957
        %v1959 = vpack.c.bf16 %v1952, %v1950
        %s1960 = scalar_lea.vmem [#allocation3], 32
        %v1961 = vld [vmem:[%s1960] sm:$0xf]
        %v1962 = vld [vmem:[%s1960 + $0x4] sm:$0xf]
        %v1963 = vld [vmem:[%s1960 + $0x8] sm:$0xf]
        %v1964 = vld [vmem:[%s1960 + $0xc] sm:$0xf]
        %v1969 = vunpack.c.l.b16 %v1961
        %v1970 = vunpack.c.l.b16 %v1962
        %v1971 = vunpack.c.l.b16 %v1963
        %v1972 = vunpack.c.l.b16 %v1964
        %v1973 = vpack.c.b16 %v1970, %v1969
        %v1974 = vpack.c.b16 %v1972, %v1971
        %v1978 = vsel %vm1691, %v1959, 0
        %1980 = vmatpush.bf16.msra.mxu0 0
        %1981 = vmatpush.bf16.msra.mxu0 0
        %1982 = vmatpush.bf16.msra.mxu0 0
        %1983 = vmatpush.bf16.msra.mxu0 0
        %1984 = vmatpush.bf16.msra.mxu0 0
        %1985 = vmatpush.bf16.msra.mxu0 0
        %1986 = vmatpush.bf16.msra.mxu0 %v1974
        %1987 = vmatpush.bf16.msra.mxu0 %v1973
        %1988 = vmatmul.bf16.gmra.mxu0 %v1978
        %v1989 = vpop.f32.mrf.mxu0
        %v1990 = vadd.f32 0.0, %v1989
        %v1991 = vpop.f32.mrf.mxu0
        %v1992 = vadd.f32 0.0, %v1991
        %1993 = vdwg.mxu0
        %v1994 = vrcp.pop %v1955
        %v1995 = vrcp.pop %v1958
        %v1996 = vmul.f32 %v1990, %v1994
        %v1997 = vmul.f32 %v1992, %v1995
        %v1998 = vpack.c.bf16 %v1996, %v1996
        %v1999 = vpack.c.bf16 %v1997, %v1997
        %2002 = vrot.lane.b32.xlu0 %v1998, 32
        %v2003 = vpop.permute.xlu0 %2002
        %2004 = vrot.lane.b32.xlu0 %v1999, 32
        %v2005 = vpop.permute.xlu0 %2004
        %vm2008 = vcmask 388352
        %2009 = vst.msk [vmem:[#allocation4] sm:$0xf] %vm2008, %v2003
        %2010 = vst.msk [vmem:[#allocation4 + $0x4] sm:$0xf] %vm2008, %v2005
        %v2011 = vld [vmem:[#allocation4] sm:$0xf]
        %v2012 = vld [vmem:[#allocation4 + $0x4] sm:$0xf]
        %v2013 = vld [vmem:[%s15] sm:$0xf]
        %v2014 = vld [vmem:[%s15 + $0x4] sm:$0xf]
        %v2015 = vld [vmem:[%s15 + $0x8] sm:$0xf]
        %v2016 = vld [vmem:[%s15 + $0xc] sm:$0xf]
        %v2017 = vld [vmem:[%s15 + $0x10] sm:$0xf]
        %v2018 = vld [vmem:[%s15 + $0x14] sm:$0xf]
        %v2021 = vunpack.c.l.b16 %v2011
        %v2022 = vunpack.c.l.b16 %v2012
        %v2023 = vpack.c.b16 %v2022, %v2021
        %v2030 = vunpack.c.l.b16 %v2013
        %v2031 = vunpack.c.l.b16 %v2014
        %v2032 = vunpack.c.l.b16 %v2015
        %v2033 = vunpack.c.l.b16 %v2016
        %v2034 = vunpack.c.l.b16 %v2017
        %v2035 = vunpack.c.l.b16 %v2018
        %v2036 = vpack.c.b16 %v2031, %v2030
        %v2037 = vpack.c.b16 %v2033, %v2032
        %v2038 = vpack.c.b16 %v2035, %v2034
        %v2043 = vsel %vm1428, %v2023, 0
        %2045 = vmatpush.bf16.msra.mxu0 0
        %2046 = vmatpush.bf16.msra.mxu0 0
        %2047 = vmatpush.bf16.msra.mxu0 0
        %2048 = vmatpush.bf16.msra.mxu0 0
        %2049 = vmatpush.bf16.msra.mxu0 0
        %2050 = vmatpush.bf16.msra.mxu0 %v2038
        %2051 = vmatpush.bf16.msra.mxu0 %v2037
        %2052 = vmatpush.bf16.msra.mxu0 %v2036
        %2053 = vmatmul.bf16.gmra.mxu0 %v2043
        %v2054 = vpop.f32.mrf.mxu0
        %v2055 = vadd.f32 0.0, %v2054
        %v2056 = vpop.f32.mrf.mxu0
        %v2057 = vadd.f32 0.0, %v2056
        %2058 = vdwg.mxu0
        %2059 = vst.msk [vmem:[%s699] sm:$0xff] %vm1428, %v2055
        %2060 = vst.msk [vmem:[%s699 + $0x8] sm:$0xff] %vm1428, %v2057
        %s2061 = sand.u32 %s496, 1
        %s2062 = scalar_lea.sflag [#allocation6], %s2061
        %s2063 = sand.u32 %s496, 1
        %s2064 = smul.addr %s2063, 16
        %s2065 = scalar_lea.vmem [#allocation5], %s2064
        %s2066 = sand.u32 %s522, 1
        %s2067 = scalar_lea.sflag [#allocation8], %s2066
        %s2068 = sand.u32 %s522, 1
        %s2069 = smul.addr %s2068, 16
        %s2070 = scalar_lea.vmem [#allocation7], %s2069
        // Predicated region
        $region105: #{tpu_custom_call.1} parent=99 // pred_check
          %p2071 = pneg %p506
        $region106: #{tpu_custom_call.1} parent=99 // pred_check_branch
          %2073 = sbr.rel (%p2071) target = $region108
        $region107: #{tpu_custom_call.1} parent=99 // pred_region
          %s2074 = smul.u32 2, %s44
          %2076 = vsyncadd %s2062, 0
          %s2077 = smul.addr %s43, 4
          %s2078 = sadd.s32 %s2074, %s2077
          %s2079 = smul.addr %s2078, 8
          %s2080 = scalar_lea.hbm %s20, %s2079
          %s2081 = sshll.u32 %s2065, 4
          %s2082 = int_to_ptr.vmem [resolvable:$true] %s2081
          %s2083 = sshll.u32 %s2080, 4
          %s2084 = int_to_ptr.hbm [resolvable:$true] %s2083
          %2089 = dma.vmem_to_hbm [thread:$0]  %s2082, 256, %s2084, %s2062, 128, 128, 8
        $region108: #{tpu_custom_call.1} parent=99 // pred_fallthru
          _
        // Predicated region
        $region109: #{tpu_custom_call.1} parent=99 // pred_check
          %p2090 = pneg %p532
        $region110: #{tpu_custom_call.1} parent=99 // pred_check_branch
          %2092 = sbr.rel (%p2090) target = $region112
        $region111: #{tpu_custom_call.1} parent=99 // pred_region
          %2094 = vsyncadd %s2067, 0
          %s2095 = smul.addr %s43, 4
          %s2096 = smul.addr %s2095, 4
          %s2097 = scalar_lea.hbm %s21, %s2096
          %s2098 = sshll.u32 %s2070, 4
          %s2099 = int_to_ptr.vmem [resolvable:$true] %s2098
          %s2100 = sshll.u32 %s2097, 4
          %s2101 = int_to_ptr.hbm [resolvable:$true] %s2100
          %2106 = dma.vmem_to_hbm [thread:$0]  %s2099, 256, %s2101, %s2067, 64, 64, 4
        $region112: #{tpu_custom_call.1} parent=99 // pred_fallthru
          _
      $region100: #{tpu_custom_call.1} parent=5 // pred_fallthru
        _
      %p2107 = scmp.le.s32.totalorder 2, %s34
      // Predicated region
      $region113: #{tpu_custom_call.1} parent=5 // pred_check
        %p2108 = pneg %p2107
      $region114: #{tpu_custom_call.1} parent=5 // pred_check_branch
        %2110 = sbr.rel (%p2108) target = $region116
      $region115: #{tpu_custom_call.1} parent=5 // pred_region
        %s2111 = ssub.s32 %s34, 2
        // Predicated region
        $region117: #{tpu_custom_call.1} parent=115 // pred_check
          %p2112 = pneg %p512
        $region118: #{tpu_custom_call.1} parent=115 // pred_check_branch
          %2114 = sbr.rel (%p2112) target = $region120
        $region119: #{tpu_custom_call.1} parent=115 // pred_region
          %s2115 = sand.u32 %s497, 1
          %s2116 = scalar_lea.sflag [#allocation6], %s2115
          %s2117 = sand.u32 %s497, 1
          %s2118 = smul.addr %s2117, 16
          %s2119 = scalar_lea.vmem [#allocation5], %s2118
          %2121 = dma.done %s2116, 256
        $region120: #{tpu_custom_call.1} parent=115 // pred_fallthru
          _
        // Predicated region
        $region121: #{tpu_custom_call.1} parent=115 // pred_check
          %p2122 = pneg %p538
        $region122: #{tpu_custom_call.1} parent=115 // pred_check_branch
          %2124 = sbr.rel (%p2122) target = $region124
        $region123: #{tpu_custom_call.1} parent=115 // pred_region
          %s2125 = sand.u32 %s523, 1
          %s2126 = scalar_lea.sflag [#allocation8], %s2125
          %s2127 = sand.u32 %s523, 1
          %s2128 = smul.addr %s2127, 16
          %s2129 = scalar_lea.vmem [#allocation7], %s2128
          %2131 = dma.done %s2126, 256
        $region124: #{tpu_custom_call.1} parent=115 // pred_fallthru
          _
      $region116: #{tpu_custom_call.1} parent=5 // pred_fallthru
        _
    $region6: #{tpu_custom_call.1} parent=1 // loop_footer
      %s38 = sadd.s32 1, %s34
    $region7: #{tpu_custom_call.1} parent=1 // loop_footer_branch
      %33 = sbr.rel target = $region3
    $region8: #{tpu_custom_call.1} parent=1 // loop_exit
      _
    %2132 = vsyncpa [#allocation6], 1
    %s2133 = scalar_lea.sflag [#allocation6], 1
    %2134 = vsyncpa %s2133, 1
    %2135 = vsyncpa [#allocation8], 1
    %s2136 = scalar_lea.sflag [#allocation8], 1
    %2137 = vsyncpa %s2136, 1

</llo_original>
